<compile_context>
chip_gen: v6e
topology: v6e:2x2x1
jax: 0.10.0
libtpu: 0.0.40
codegen_flags: <defaults>
</compile_context>

<pallas_src>
import math

import jax
import jax.numpy as jnp
from jax.experimental import pallas as pl
from jax.experimental.pallas import tpu as pltpu

LEAKY_SLOPE = 0.01            # nn.LeakyReLU default
BN_EPS = 1e-5                 # nn.BatchNorm2d default
MXU_DTYPE = jnp.bfloat16      # bf16 MXU inputs (f32 accumulation), per perf review


def _down_block_kernel(x_ref, w1_ref, b1_ref,
                       wx_ref, wx1_ref, b21_ref,
                       w22_ref, b22_ref,
                       w312_ref, b31_ref,
                       w32_ref, b32_ref,
                       out_ref, stats_ref,
                       pad1, padm, col1, colm):
    """One batch element per grid step: 5 convs (+LeakyReLU) and per-tile BN stats."""
    _, H, W, Cin = x_ref.shape            # x_ref: (1, H, W, Cin), already avg-pooled
    Cout = b1_ref.shape[-1]
    Mt = H * W

    def leaky(v):
        return jnp.where(v > 0, v, LEAKY_SLOPE * v)

    def mxu(a, b):
        # bf16 MXU inputs, f32 accumulation.
        return jnp.dot(a.astype(MXU_DTYPE), b.astype(MXU_DTYPE),
                       preferred_element_type=jnp.float32)

    # Zero only the 1-px halo of the padded scratches; the interior is fully
    # overwritten by each conv3x3's input store.  Done every grid step (cheap,
    # perimeter-proportional) because with a "parallel" grid axis each core owns
    # its own scratch copy, so a program_id==0 guard would be unsafe.
    def zero_halo(p):
        _, Hp, Wp, C = p.shape
        p[:, 0:1, :, :]       = jnp.zeros((1, 1, Wp, C), p.dtype)
        p[:, Hp - 1:Hp, :, :] = jnp.zeros((1, 1, Wp, C), p.dtype)
        p[:, :, 0:1, :]       = jnp.zeros((1, Hp, 1, C), p.dtype)
        p[:, :, Wp - 1:Wp, :] = jnp.zeros((1, Hp, 1, C), p.dtype)

    zero_halo(pad1)
    zero_halo(padm)

    xp = x_ref[...]                       # (1, H, W, Cin)
    xf = xp.reshape(Mt, Cin)              # (Mt, Cin) for the 1x1 convs (minor dim kept)

    def conv3x3(inp_nhwc, pad_ref, col_ref, w_ref, b_ref):
        """3x3/pad=1 conv: taps stored directly into a bf16 im2col scratch, one matmul."""
        C = inp_nhwc.shape[-1]
        pad_ref[:, 1:H + 1, 1:W + 1, :] = inp_nhwc
        k = 0
        for ky in range(3):
            for kx in range(3):
                tap = pad_ref[:, ky:ky + H, kx:kx + W, :].reshape(Mt, C)
                col_ref[:, k * C:(k + 1) * C] = tap.astype(col_ref.dtype)
                k += 1
        return (jnp.dot(col_ref[...], w_ref[...],
                        preferred_element_type=jnp.float32) + b_ref[...])

    # conv1 (3x3, Cin -> Cout) + LeakyReLU
    x1 = leaky(conv3x3(xp, pad1, col1, w1_ref, b1_ref))          # (Mt, Cout)

    # conv21 / conv31 (1x1) share their x- and x1-parts: one packed dot per LHS,
    # producing 2*Cout columns ([:Cout] -> conv21, [Cout:] -> conv31).
    px = mxu(xf, wx_ref[...])                                    # (Mt, 2*Cout)
    p1 = mxu(x1, wx1_ref[...])                                   # (Mt, 2*Cout)

    c21 = px[:, :Cout] + p1[:, :Cout] + b21_ref[...]
    x22 = leaky(conv3x3(c21.reshape(1, H, W, Cout), padm, colm, w22_ref, b22_ref))

    c31 = (px[:, Cout:] + p1[:, Cout:]
           + mxu(x22, w312_ref[...]) + b31_ref[...])
    out = leaky(conv3x3(c31.reshape(1, H, W, Cout), padm, colm, w32_ref, b32_ref))

    # Per-tile BatchNorm statistics in one pass (sum and sum-of-squares); the global
    # reduction + normalize happen outside so the batch axis can be "parallel".
    s1 = jnp.sum(out, axis=0, keepdims=True)                     # (1, Cout)
    s2 = jnp.sum(out * out, axis=0, keepdims=True)               # (1, Cout)
    stats_ref[...] = jnp.concatenate([s1, s2], axis=0).reshape(1, 2, Cout)

    # Lane-dense writeback: (Mt, Cout) -> (H, W*Cout) via direct column-block stores
    # (no full-width concatenate temporary).
    out3 = out.reshape(H, W, Cout)
    for w in range(W):
        out_ref[:, w * Cout:(w + 1) * Cout] = out3[:, w, :]


def _bn_finalize_kernel(y_ref, scale_ref, shift_ref, o_ref):
    """Apply BatchNorm as a per-lane affine: o = y * scale + shift."""
    o_ref[...] = y_ref[...] * scale_ref[...] + shift_ref[...]


def down_block_forward(x_nchw, params, down_size=2):
    """Wrapper: NCHW in/out.  AvgPool + tiny layout ops + BN-stat reduction stay in XLA;
    the conv stack and the BN normalize run in Pallas, gridded over the batch."""
    ds = 1 if down_size is None else int(down_size)

    x = jnp.transpose(x_nchw, (0, 2, 3, 1)).astype(jnp.float32)   # NCHW -> NHWC
    N, Hin, Win, Cin = x.shape
    H, W = Hin // ds, Win // ds
    Cout = params["b1"].shape[-1]
    Mt = H * W

    # AvgPool2d(kernel=stride=ds) in the wrapper (per perf review).
    if ds > 1:
        xp = x.reshape(N, H, ds, W, ds, Cin).mean(axis=(2, 4))
    else:
        xp = x

    # ---- pack weights into kernel (im2col / fused-1x1) layouts, pre-cast to bf16 ----
    row = lambda v: v.reshape(1, -1).astype(jnp.float32)
    w1_mat = params["w1"].reshape(9 * Cin, Cout).astype(MXU_DTYPE)          # (9*Cin, Cout)
    w22_mat = params["w22"].reshape(9 * Cout, Cout).astype(MXU_DTYPE)       # (9*Cout, Cout)
    w32_mat = params["w32"].reshape(9 * Cout, Cout).astype(MXU_DTYPE)
    wx_pack = jnp.concatenate([params["w21"][:Cin],
                               params["w31"][:Cin]], axis=1).astype(MXU_DTYPE)       # (Cin, 2*Cout)
    wx1_pack = jnp.concatenate([params["w21"][Cin:],
                                params["w31"][Cin:Cin + Cout]], axis=1).astype(MXU_DTYPE)  # (Cout, 2*Cout)
    w312 = params["w31"][Cin + Cout:].astype(MXU_DTYPE)                     # (Cout, Cout)

    args = (xp,
            w1_mat, row(params["b1"]),
            wx_pack, wx1_pack, row(params["b21"]),
            w22_mat, row(params["b22"]),
            w312, row(params["b31"]),
            w32_mat, row(params["b32"]))

    x_spec = pl.BlockSpec((1, H, W, Cin), lambda n: (n, 0, 0, 0))
    const2d = lambda a: pl.BlockSpec(a.shape, lambda n: (0, 0))   # weights stay resident
    in_specs = [x_spec] + [const2d(a) for a in args[1:]]

    out2d, stats = pl.pallas_call(
        _down_block_kernel,
        out_shape=(jax.ShapeDtypeStruct((N * H, W * Cout), jnp.float32),
                   jax.ShapeDtypeStruct((N, 2, Cout), jnp.float32)),
        grid=(N,),
        in_specs=in_specs,
        out_specs=(pl.BlockSpec((H, W * Cout), lambda n: (n, 0)),
                   pl.BlockSpec((1, 2, Cout), lambda n: (n, 0, 0))),
        scratch_shapes=[
            pltpu.VMEM((1, H + 2, W + 2, Cin), jnp.float32),    # padded conv1 input
            pltpu.VMEM((1, H + 2, W + 2, Cout), jnp.float32),   # padded conv22/conv32 input
            pltpu.VMEM((Mt, 9 * Cin), MXU_DTYPE),               # im2col scratch (conv1)
            pltpu.VMEM((Mt, 9 * Cout), MXU_DTYPE),              # im2col scratch (conv22/32)
        ],
        compiler_params=pltpu.CompilerParams(
            dimension_semantics=("parallel",),
            vmem_limit_bytes=32 * 1024 * 1024),
    )(*args)

    # ---- BatchNorm finalize (two-pass): reduce per-tile stats, then per-lane affine ----
    tot = jnp.sum(stats, axis=0)                    # (2, Cout)
    m_total = float(N * H * W)
    mean = tot[0] / m_total
    var = tot[1] / m_total - mean * mean            # biased (training-mode) variance
    inv = params["gamma"] * jax.lax.rsqrt(var + BN_EPS)
    shift = params["beta"] - mean * inv
    scale_row = jnp.tile(inv, W).reshape(1, W * Cout)     # lane order is (w, c)
    shift_row = jnp.tile(shift, W).reshape(1, W * Cout)

    bn2d = pl.pallas_call(
        _bn_finalize_kernel,
        out_shape=jax.ShapeDtypeStruct((N * H, W * Cout), jnp.float32),
        grid=(N,),
        in_specs=[pl.BlockSpec((H, W * Cout), lambda n: (n, 0)),
                  pl.BlockSpec((1, W * Cout), lambda n: (0, 0)),
                  pl.BlockSpec((1, W * Cout), lambda n: (0, 0))],
        out_specs=pl.BlockSpec((H, W * Cout), lambda n: (n, 0)),
        compiler_params=pltpu.CompilerParams(
            dimension_semantics=("parallel",)),
    )(out2d, scale_row, shift_row)

    out_nhwc = bn2d.reshape(N, H, W, Cout)
    return jnp.transpose(out_nhwc, (0, 3, 1, 2))                   # NHWC -> NCHW


def init_params(key, cin, cout):
    """Deterministic synthetic parameters (shapes match the PyTorch module)."""
    ks = jax.random.split(key, 10)

    def uni(k, shape, fan_in):
        bound = 1.0 / math.sqrt(fan_in)
        return jax.random.uniform(k, shape, jnp.float32, -bound, bound)

    p = {}
    p["w1"] = uni(ks[0], (3, 3, cin, cout), cin * 9)               # HWIO
    p["b1"] = uni(ks[1], (cout,), cin * 9)
    p["w21"] = uni(ks[2], (cin + cout, cout), cin + cout)          # 1x1 (rows: x | x1)
    p["b21"] = uni(ks[3], (cout,), cin + cout)
    p["w22"] = uni(ks[4], (3, 3, cout, cout), cout * 9)
    p["b22"] = uni(ks[5], (cout,), cout * 9)
    p["w31"] = uni(ks[6], (cin + 2 * cout, cout), cin + 2 * cout)  # rows: x | x1 | x22
    p["b31"] = uni(ks[7], (cout,), cin + 2 * cout)
    p["w32"] = uni(ks[8], (3, 3, cout, cout), cout * 9)
    p["b32"] = uni(ks[9], (cout,), cout * 9)
    p["gamma"] = jnp.ones((cout,), jnp.float32)                    # BN defaults
    p["beta"] = jnp.zeros((cout,), jnp.float32)
    return p


def reference_forward(x_nchw, params, down_size=2):
    """Pure-JAX f32 reference (mirrors the PyTorch forward) for a correctness check."""
    def leaky(v):
        return jnp.where(v > 0, v, LEAKY_SLOPE * v)

    def conv(x, w, b, pad):
        y = jax.lax.conv_general_dilated(
            x, w, window_strides=(1, 1), padding=((pad, pad), (pad, pad)),
            dimension_numbers=("NHWC", "HWIO", "NHWC"))
        return y + b.reshape(1, 1, 1, -1)

    x = jnp.transpose(x_nchw, (0, 2, 3, 1)).astype(jnp.float32)
    if down_size is not None:
        N, Hin, Win, C = x.shape
        x = x.reshape(N, Hin // down_size, down_size,
                      Win // down_size, down_size, C).mean(axis=(2, 4))

    x1 = leaky(conv(x, params["w1"], params["b1"], 1))
    x21 = jnp.concatenate([x, x1], axis=-1)
    c21 = conv(x21, params["w21"][None, None], params["b21"], 0)
    x22 = leaky(conv(c21, params["w22"], params["b22"], 1))
    x31 = jnp.concatenate([x21, x22], axis=-1)
    c31 = conv(x31, params["w31"][None, None], params["b31"], 0)
    out = leaky(conv(c31, params["w32"], params["b32"], 1))

    mean = out.mean(axis=(0, 1, 2))
    var = ((out - mean) ** 2).mean(axis=(0, 1, 2))
    bn = (out - mean) / jnp.sqrt(var + BN_EPS) * params["gamma"] + params["beta"]
    return jnp.transpose(bn, (0, 3, 1, 2))


if __name__ == "__main__":
    key = jax.random.PRNGKey(0)
    k_x, k_p = jax.random.split(key)

    # Small shapes consistent with the module: input_channels=4, output_channels=32,
    # down_size=2, input NCHW = (2, 4, 16, 16).
    batch, cin, cout, hw, down_size = 2, 4, 32, 16, 2
    x = jax.random.normal(k_x, (batch, cin, hw, hw), jnp.float32)
    params = init_params(k_p, cin, cout)

    fwd = jax.jit(down_block_forward, static_argnames=("down_size",))
    out = jax.block_until_ready(fwd(x, params, down_size=down_size))
    assert out.shape == (batch, cout, hw // down_size, hw // down_size)

    ref = jax.block_until_ready(reference_forward(x, params, down_size=down_size))
    max_err = float(jnp.max(jnp.abs(out - ref)))
    # bf16 MXU inputs (per perf review) vs f32 reference => tolerance loosened from 5e-3;
    # BN-normalized outputs amplify the ~0.5-1% relative bf16 error at the tails.
    assert max_err < 8e-2, f"mismatch vs reference, max abs err = {max_err}"

    print("KERNEL_OK")
</pallas_src>

<mosaic_0001>
module attributes {stable_mosaic.version = 11 : i64} {
  func.func @_bn_finalize_kernel(%arg0: i32, %arg1: memref<8x256xf32, #tpu.memory_space<vmem>>, %arg2: memref<1x256xf32, #tpu.memory_space<vmem>>, %arg3: memref<1x256xf32, #tpu.memory_space<vmem>>, %arg4: memref<8x256xf32, #tpu.memory_space<vmem>>) attributes {dimension_semantics = [#tpu.dimension_semantics<parallel>], iteration_bounds = array<i64: 2>, scalar_prefetch = 0 : i64, scratch_operands = 0 : i64, tpu.core_type = #tpu.core_type<tc>, window_params = [{transform_indices = @transform_0, window_bounds = array<i64: 8, 256>}, {pipeline_mode = #tpu.pipeline_mode<synchronous>, transform_indices = @transform_1, window_bounds = array<i64: 1, 256>}, {pipeline_mode = #tpu.pipeline_mode<synchronous>, transform_indices = @transform_2, window_bounds = array<i64: 1, 256>}, {transform_indices = @transform_3, window_bounds = array<i64: 8, 256>}]} {
    %c0 = arith.constant 0 : index
    %c0_0 = arith.constant 0 : index
    %0 = vector.load %arg1[%c0, %c0_0] : memref<8x256xf32, #tpu.memory_space<vmem>>, vector<8x256xf32>
    %c0_1 = arith.constant 0 : index
    %c0_2 = arith.constant 0 : index
    %1 = vector.load %arg2[%c0_1, %c0_2] : memref<1x256xf32, #tpu.memory_space<vmem>>, vector<1x256xf32>
    %2 = vector.broadcast %1 : vector<1x256xf32> to vector<8x256xf32>
    %3 = arith.mulf %0, %2 : vector<8x256xf32>
    %c0_3 = arith.constant 0 : index
    %c0_4 = arith.constant 0 : index
    %4 = vector.load %arg3[%c0_3, %c0_4] : memref<1x256xf32, #tpu.memory_space<vmem>>, vector<1x256xf32>
    %5 = vector.broadcast %4 : vector<1x256xf32> to vector<8x256xf32>
    %6 = arith.addf %3, %5 : vector<8x256xf32>
    %c0_5 = arith.constant 0 : index
    %c0_6 = arith.constant 0 : index
    %7 = vector.load %arg4[%c0_5, %c0_6] : memref<8x256xf32, #tpu.memory_space<vmem>>, vector<8x256xf32>
    tpu.vector_store %arg4[%c0_5, %c0_6], %6 {strides = array<i32>} : memref<8x256xf32, #tpu.memory_space<vmem>>, vector<8x256xf32>,
    return
  }
  func.func @transform_0(%arg0: i32) -> (i32, i32) {
    %c0_i32 = arith.constant 0 : i32
    %c0_i32_0 = arith.constant 0 : i32
    return %arg0, %c0_i32 : i32, i32
  }
  func.func @transform_1(%arg0: i32) -> (i32, i32) {
    %c0_i32 = arith.constant 0 : i32
    %c0_i32_0 = arith.constant 0 : i32
    %c0_i32_1 = arith.constant 0 : i32
    return %c0_i32, %c0_i32_0 : i32, i32
  }
  func.func @transform_2(%arg0: i32) -> (i32, i32) {
    %c0_i32 = arith.constant 0 : i32
    %c0_i32_0 = arith.constant 0 : i32
    %c0_i32_1 = arith.constant 0 : i32
    return %c0_i32, %c0_i32_0 : i32, i32
  }
  func.func @transform_3(%arg0: i32) -> (i32, i32) {
    %c0_i32 = arith.constant 0 : i32
    %c0_i32_0 = arith.constant 0 : i32
    return %arg0, %c0_i32 : i32, i32
  }
}

module attributes {stable_mosaic.version = 11 : i64} {
  func.func @_down_block_kernel(%arg0: i32, %arg1: memref<1x8x8x4xf32, #tpu.memory_space<vmem>>, %arg2: memref<36x32xbf16, #tpu.memory_space<vmem>>, %arg3: memref<1x32xf32, #tpu.memory_space<vmem>>, %arg4: memref<4x64xbf16, #tpu.memory_space<vmem>>, %arg5: memref<32x64xbf16, #tpu.memory_space<vmem>>, %arg6: memref<1x32xf32, #tpu.memory_space<vmem>>, %arg7: memref<288x32xbf16, #tpu.memory_space<vmem>>, %arg8: memref<1x32xf32, #tpu.memory_space<vmem>>, %arg9: memref<32x32xbf16, #tpu.memory_space<vmem>>, %arg10: memref<1x32xf32, #tpu.memory_space<vmem>>, %arg11: memref<288x32xbf16, #tpu.memory_space<vmem>>, %arg12: memref<1x32xf32, #tpu.memory_space<vmem>>, %arg13: memref<8x256xf32, #tpu.memory_space<vmem>>, %arg14: memref<1x2x32xf32, #tpu.memory_space<vmem>>, %arg15: memref<1x10x10x4xf32, #tpu.memory_space<vmem>>, %arg16: memref<1x10x10x32xf32, #tpu.memory_space<vmem>>, %arg17: memref<64x36xbf16, #tpu.memory_space<vmem>>, %arg18: memref<64x288xbf16, #tpu.memory_space<vmem>>) attributes {dimension_semantics = [#tpu.dimension_semantics<parallel>], iteration_bounds = array<i64: 2>, scalar_prefetch = 0 : i64, scratch_operands = 4 : i64, tpu.core_type = #tpu.core_type<tc>, window_params = [{transform_indices = @transform_0, window_bounds = array<i64: 1, 8, 8, 4>}, {pipeline_mode = #tpu.pipeline_mode<synchronous>, transform_indices = @transform_1, window_bounds = array<i64: 36, 32>}, {pipeline_mode = #tpu.pipeline_mode<synchronous>, transform_indices = @transform_2, window_bounds = array<i64: 1, 32>}, {pipeline_mode = #tpu.pipeline_mode<synchronous>, transform_indices = @transform_3, window_bounds = array<i64: 4, 64>}, {pipeline_mode = #tpu.pipeline_mode<synchronous>, transform_indices = @transform_4, window_bounds = array<i64: 32, 64>}, {pipeline_mode = #tpu.pipeline_mode<synchronous>, transform_indices = @transform_5, window_bounds = array<i64: 1, 32>}, {pipeline_mode = #tpu.pipeline_mode<synchronous>, transform_indices = @transform_6, window_bounds = array<i64: 288, 32>}, {pipeline_mode = #tpu.pipeline_mode<synchronous>, transform_indices = @transform_7, window_bounds = array<i64: 1, 32>}, {pipeline_mode = #tpu.pipeline_mode<synchronous>, transform_indices = @transform_8, window_bounds = array<i64: 32, 32>}, {pipeline_mode = #tpu.pipeline_mode<synchronous>, transform_indices = @transform_9, window_bounds = array<i64: 1, 32>}, {pipeline_mode = #tpu.pipeline_mode<synchronous>, transform_indices = @transform_10, window_bounds = array<i64: 288, 32>}, {pipeline_mode = #tpu.pipeline_mode<synchronous>, transform_indices = @transform_11, window_bounds = array<i64: 1, 32>}, {transform_indices = @transform_12, window_bounds = array<i64: 8, 256>}, {transform_indices = @transform_13, window_bounds = array<i64: 1, 2, 32>}]} {
    %cst = arith.constant 0.000000e+00 : f32
    %0 = vector.broadcast %cst : f32 to vector<1x1x10x4xf32>
    %c0 = arith.constant 0 : index
    %c0_0 = arith.constant 0 : index
    %c0_1 = arith.constant 0 : index
    %c0_2 = arith.constant 0 : index
    %1 = vector.load %arg15[%c0, %c0_0, %c0_1, %c0_2] : memref<1x10x10x4xf32, #tpu.memory_space<vmem>>, vector<1x1x10x4xf32>
    tpu.vector_store %arg15[%c0, %c0_0, %c0_1, %c0_2], %0 {strides = array<i32>} : memref<1x10x10x4xf32, #tpu.memory_space<vmem>>, vector<1x1x10x4xf32>,
    %cst_3 = arith.constant 0.000000e+00 : f32
    %2 = vector.broadcast %cst_3 : f32 to vector<1x1x10x4xf32>
    %c0_4 = arith.constant 0 : index
    %c9 = arith.constant 9 : index
    %c0_5 = arith.constant 0 : index
    %c0_6 = arith.constant 0 : index
    %3 = vector.load %arg15[%c0_4, %c9, %c0_5, %c0_6] : memref<1x10x10x4xf32, #tpu.memory_space<vmem>>, vector<1x1x10x4xf32>
    tpu.vector_store %arg15[%c0_4, %c9, %c0_5, %c0_6], %2 {strides = array<i32>} : memref<1x10x10x4xf32, #tpu.memory_space<vmem>>, vector<1x1x10x4xf32>,
    %cst_7 = arith.constant 0.000000e+00 : f32
    %4 = vector.broadcast %cst_7 : f32 to vector<1x10x1x4xf32>
    %c0_8 = arith.constant 0 : index
    %c0_9 = arith.constant 0 : index
    %c0_10 = arith.constant 0 : index
    %c0_11 = arith.constant 0 : index
    %5 = vector.load %arg15[%c0_8, %c0_9, %c0_10, %c0_11] : memref<1x10x10x4xf32, #tpu.memory_space<vmem>>, vector<1x10x1x4xf32>
    tpu.vector_store %arg15[%c0_8, %c0_9, %c0_10, %c0_11], %4 {strides = array<i32>} : memref<1x10x10x4xf32, #tpu.memory_space<vmem>>, vector<1x10x1x4xf32>,
    %cst_12 = arith.constant 0.000000e+00 : f32
    %6 = vector.broadcast %cst_12 : f32 to vector<1x10x1x4xf32>
    %c0_13 = arith.constant 0 : index
    %c0_14 = arith.constant 0 : index
    %c9_15 = arith.constant 9 : index
    %c0_16 = arith.constant 0 : index
    %7 = vector.load %arg15[%c0_13, %c0_14, %c9_15, %c0_16] : memref<1x10x10x4xf32, #tpu.memory_space<vmem>>, vector<1x10x1x4xf32>
    tpu.vector_store %arg15[%c0_13, %c0_14, %c9_15, %c0_16], %6 {strides = array<i32>} : memref<1x10x10x4xf32, #tpu.memory_space<vmem>>, vector<1x10x1x4xf32>,
    %cst_17 = arith.constant 0.000000e+00 : f32
    %8 = vector.broadcast %cst_17 : f32 to vector<1x1x10x32xf32>
    %c0_18 = arith.constant 0 : index
    %c0_19 = arith.constant 0 : index
    %c0_20 = arith.constant 0 : index
    %c0_21 = arith.constant 0 : index
    %9 = vector.load %arg16[%c0_18, %c0_19, %c0_20, %c0_21] : memref<1x10x10x32xf32, #tpu.memory_space<vmem>>, vector<1x1x10x32xf32>
    tpu.vector_store %arg16[%c0_18, %c0_19, %c0_20, %c0_21], %8 {strides = array<i32>} : memref<1x10x10x32xf32, #tpu.memory_space<vmem>>, vector<1x1x10x32xf32>,
    %cst_22 = arith.constant 0.000000e+00 : f32
    %10 = vector.broadcast %cst_22 : f32 to vector<1x1x10x32xf32>
    %c0_23 = arith.constant 0 : index
    %c9_24 = arith.constant 9 : index
    %c0_25 = arith.constant 0 : index
    %c0_26 = arith.constant 0 : index
    %11 = vector.load %arg16[%c0_23, %c9_24, %c0_25, %c0_26] : memref<1x10x10x32xf32, #tpu.memory_space<vmem>>, vector<1x1x10x32xf32>
    tpu.vector_store %arg16[%c0_23, %c9_24, %c0_25, %c0_26], %10 {strides = array<i32>} : memref<1x10x10x32xf32, #tpu.memory_space<vmem>>, vector<1x1x10x32xf32>,
    %cst_27 = arith.constant 0.000000e+00 : f32
    %12 = vector.broadcast %cst_27 : f32 to vector<1x10x1x32xf32>
    %c0_28 = arith.constant 0 : index
    %c0_29 = arith.constant 0 : index
    %c0_30 = arith.constant 0 : index
    %c0_31 = arith.constant 0 : index
    %13 = vector.load %arg16[%c0_28, %c0_29, %c0_30, %c0_31] : memref<1x10x10x32xf32, #tpu.memory_space<vmem>>, vector<1x10x1x32xf32>
    tpu.vector_store %arg16[%c0_28, %c0_29, %c0_30, %c0_31], %12 {strides = array<i32>} : memref<1x10x10x32xf32, #tpu.memory_space<vmem>>, vector<1x10x1x32xf32>,
    %cst_32 = arith.constant 0.000000e+00 : f32
    %14 = vector.broadcast %cst_32 : f32 to vector<1x10x1x32xf32>
    %c0_33 = arith.constant 0 : index
    %c0_34 = arith.constant 0 : index
    %c9_35 = arith.constant 9 : index
    %c0_36 = arith.constant 0 : index
    %15 = vector.load %arg16[%c0_33, %c0_34, %c9_35, %c0_36] : memref<1x10x10x32xf32, #tpu.memory_space<vmem>>, vector<1x10x1x32xf32>
    tpu.vector_store %arg16[%c0_33, %c0_34, %c9_35, %c0_36], %14 {strides = array<i32>} : memref<1x10x10x32xf32, #tpu.memory_space<vmem>>, vector<1x10x1x32xf32>,
    %c0_37 = arith.constant 0 : index
    %c0_38 = arith.constant 0 : index
    %c0_39 = arith.constant 0 : index
    %c0_40 = arith.constant 0 : index
    %16 = vector.load %arg1[%c0_37, %c0_38, %c0_39, %c0_40] : memref<1x8x8x4xf32, #tpu.memory_space<vmem>>, vector<1x8x8x4xf32>
    %17 = vector.shape_cast %16 : vector<1x8x8x4xf32> to vector<64x4xf32>
    %c0_41 = arith.constant 0 : index
    %c1 = arith.constant 1 : index
    %c1_42 = arith.constant 1 : index
    %c0_43 = arith.constant 0 : index
    %18 = vector.load %arg15[%c0_41, %c1, %c1_42, %c0_43] : memref<1x10x10x4xf32, #tpu.memory_space<vmem>>, vector<1x8x8x4xf32>
    tpu.vector_store %arg15[%c0_41, %c1, %c1_42, %c0_43], %16 {strides = array<i32>} : memref<1x10x10x4xf32, #tpu.memory_space<vmem>>, vector<1x8x8x4xf32>,
    %c0_44 = arith.constant 0 : index
    %c0_45 = arith.constant 0 : index
    %c0_46 = arith.constant 0 : index
    %c0_47 = arith.constant 0 : index
    %19 = vector.load %arg15[%c0_44, %c0_45, %c0_46, %c0_47] : memref<1x10x10x4xf32, #tpu.memory_space<vmem>>, vector<1x8x8x4xf32>
    %20 = vector.shape_cast %19 : vector<1x8x8x4xf32> to vector<64x4xf32>
    %21 = arith.truncf %20 : vector<64x4xf32> to vector<64x4xbf16>
    %c0_48 = arith.constant 0 : index
    %c0_49 = arith.constant 0 : index
    %22 = vector.load %arg17[%c0_48, %c0_49] : memref<64x36xbf16, #tpu.memory_space<vmem>>, vector<64x4xbf16>
    tpu.vector_store %arg17[%c0_48, %c0_49], %21 {strides = array<i32>} : memref<64x36xbf16, #tpu.memory_space<vmem>>, vector<64x4xbf16>,
    %c0_50 = arith.constant 0 : index
    %c0_51 = arith.constant 0 : index
    %c1_52 = arith.constant 1 : index
    %c0_53 = arith.constant 0 : index
    %23 = vector.load %arg15[%c0_50, %c0_51, %c1_52, %c0_53] : memref<1x10x10x4xf32, #tpu.memory_space<vmem>>, vector<1x8x8x4xf32>
    %24 = vector.shape_cast %23 : vector<1x8x8x4xf32> to vector<64x4xf32>
    %25 = arith.truncf %24 : vector<64x4xf32> to vector<64x4xbf16>
    %c0_54 = arith.constant 0 : index
    %c4 = arith.constant 4 : index
    %26 = vector.load %arg17[%c0_54, %c4] : memref<64x36xbf16, #tpu.memory_space<vmem>>, vector<64x4xbf16>
    tpu.vector_store %arg17[%c0_54, %c4], %25 {strides = array<i32>} : memref<64x36xbf16, #tpu.memory_space<vmem>>, vector<64x4xbf16>,
    %c0_55 = arith.constant 0 : index
    %c0_56 = arith.constant 0 : index
    %c2 = arith.constant 2 : index
    %c0_57 = arith.constant 0 : index
    %27 = vector.load %arg15[%c0_55, %c0_56, %c2, %c0_57] : memref<1x10x10x4xf32, #tpu.memory_space<vmem>>, vector<1x8x8x4xf32>
    %28 = vector.shape_cast %27 : vector<1x8x8x4xf32> to vector<64x4xf32>
    %29 = arith.truncf %28 : vector<64x4xf32> to vector<64x4xbf16>
    %c0_58 = arith.constant 0 : index
    %c8 = arith.constant 8 : index
    %30 = vector.load %arg17[%c0_58, %c8] : memref<64x36xbf16, #tpu.memory_space<vmem>>, vector<64x4xbf16>
    tpu.vector_store %arg17[%c0_58, %c8], %29 {strides = array<i32>} : memref<64x36xbf16, #tpu.memory_space<vmem>>, vector<64x4xbf16>,
    %c0_59 = arith.constant 0 : index
    %c1_60 = arith.constant 1 : index
    %c0_61 = arith.constant 0 : index
    %c0_62 = arith.constant 0 : index
    %31 = vector.load %arg15[%c0_59, %c1_60, %c0_61, %c0_62] : memref<1x10x10x4xf32, #tpu.memory_space<vmem>>, vector<1x8x8x4xf32>
    %32 = vector.shape_cast %31 : vector<1x8x8x4xf32> to vector<64x4xf32>
    %33 = arith.truncf %32 : vector<64x4xf32> to vector<64x4xbf16>
    %c0_63 = arith.constant 0 : index
    %c12 = arith.constant 12 : index
    %34 = vector.load %arg17[%c0_63, %c12] : memref<64x36xbf16, #tpu.memory_space<vmem>>, vector<64x4xbf16>
    tpu.vector_store %arg17[%c0_63, %c12], %33 {strides = array<i32>} : memref<64x36xbf16, #tpu.memory_space<vmem>>, vector<64x4xbf16>,
    %c0_64 = arith.constant 0 : index
    %c1_65 = arith.constant 1 : index
    %c1_66 = arith.constant 1 : index
    %c0_67 = arith.constant 0 : index
    %35 = vector.load %arg15[%c0_64, %c1_65, %c1_66, %c0_67] : memref<1x10x10x4xf32, #tpu.memory_space<vmem>>, vector<1x8x8x4xf32>
    %36 = vector.shape_cast %35 : vector<1x8x8x4xf32> to vector<64x4xf32>
    %37 = arith.truncf %36 : vector<64x4xf32> to vector<64x4xbf16>
    %c0_68 = arith.constant 0 : index
    %c16 = arith.constant 16 : index
    %38 = vector.load %arg17[%c0_68, %c16] : memref<64x36xbf16, #tpu.memory_space<vmem>>, vector<64x4xbf16>
    tpu.vector_store %arg17[%c0_68, %c16], %37 {strides = array<i32>} : memref<64x36xbf16, #tpu.memory_space<vmem>>, vector<64x4xbf16>,
    %c0_69 = arith.constant 0 : index
    %c1_70 = arith.constant 1 : index
    %c2_71 = arith.constant 2 : index
    %c0_72 = arith.constant 0 : index
    %39 = vector.load %arg15[%c0_69, %c1_70, %c2_71, %c0_72] : memref<1x10x10x4xf32, #tpu.memory_space<vmem>>, vector<1x8x8x4xf32>
    %40 = vector.shape_cast %39 : vector<1x8x8x4xf32> to vector<64x4xf32>
    %41 = arith.truncf %40 : vector<64x4xf32> to vector<64x4xbf16>
    %c0_73 = arith.constant 0 : index
    %c20 = arith.constant 20 : index
    %42 = vector.load %arg17[%c0_73, %c20] : memref<64x36xbf16, #tpu.memory_space<vmem>>, vector<64x4xbf16>
    tpu.vector_store %arg17[%c0_73, %c20], %41 {strides = array<i32>} : memref<64x36xbf16, #tpu.memory_space<vmem>>, vector<64x4xbf16>,
    %c0_74 = arith.constant 0 : index
    %c2_75 = arith.constant 2 : index
    %c0_76 = arith.constant 0 : index
    %c0_77 = arith.constant 0 : index
    %43 = vector.load %arg15[%c0_74, %c2_75, %c0_76, %c0_77] : memref<1x10x10x4xf32, #tpu.memory_space<vmem>>, vector<1x8x8x4xf32>
    %44 = vector.shape_cast %43 : vector<1x8x8x4xf32> to vector<64x4xf32>
    %45 = arith.truncf %44 : vector<64x4xf32> to vector<64x4xbf16>
    %c0_78 = arith.constant 0 : index
    %c24 = arith.constant 24 : index
    %46 = vector.load %arg17[%c0_78, %c24] : memref<64x36xbf16, #tpu.memory_space<vmem>>, vector<64x4xbf16>
    tpu.vector_store %arg17[%c0_78, %c24], %45 {strides = array<i32>} : memref<64x36xbf16, #tpu.memory_space<vmem>>, vector<64x4xbf16>,
    %c0_79 = arith.constant 0 : index
    %c2_80 = arith.constant 2 : index
    %c1_81 = arith.constant 1 : index
    %c0_82 = arith.constant 0 : index
    %47 = vector.load %arg15[%c0_79, %c2_80, %c1_81, %c0_82] : memref<1x10x10x4xf32, #tpu.memory_space<vmem>>, vector<1x8x8x4xf32>
    %48 = vector.shape_cast %47 : vector<1x8x8x4xf32> to vector<64x4xf32>
    %49 = arith.truncf %48 : vector<64x4xf32> to vector<64x4xbf16>
    %c0_83 = arith.constant 0 : index
    %c28 = arith.constant 28 : index
    %50 = vector.load %arg17[%c0_83, %c28] : memref<64x36xbf16, #tpu.memory_space<vmem>>, vector<64x4xbf16>
    tpu.vector_store %arg17[%c0_83, %c28], %49 {strides = array<i32>} : memref<64x36xbf16, #tpu.memory_space<vmem>>, vector<64x4xbf16>,
    %c0_84 = arith.constant 0 : index
    %c2_85 = arith.constant 2 : index
    %c2_86 = arith.constant 2 : index
    %c0_87 = arith.constant 0 : index
    %51 = vector.load %arg15[%c0_84, %c2_85, %c2_86, %c0_87] : memref<1x10x10x4xf32, #tpu.memory_space<vmem>>, vector<1x8x8x4xf32>
    %52 = vector.shape_cast %51 : vector<1x8x8x4xf32> to vector<64x4xf32>
    %53 = arith.truncf %52 : vector<64x4xf32> to vector<64x4xbf16>
    %c0_88 = arith.constant 0 : index
    %c32 = arith.constant 32 : index
    %54 = vector.load %arg17[%c0_88, %c32] : memref<64x36xbf16, #tpu.memory_space<vmem>>, vector<64x4xbf16>
    tpu.vector_store %arg17[%c0_88, %c32], %53 {strides = array<i32>} : memref<64x36xbf16, #tpu.memory_space<vmem>>, vector<64x4xbf16>,
    %c0_89 = arith.constant 0 : index
    %c0_90 = arith.constant 0 : index
    %55 = vector.load %arg17[%c0_89, %c0_90] : memref<64x36xbf16, #tpu.memory_space<vmem>>, vector<64x36xbf16>
    %c0_91 = arith.constant 0 : index
    %c0_92 = arith.constant 0 : index
    %56 = vector.load %arg2[%c0_91, %c0_92] : memref<36x32xbf16, #tpu.memory_space<vmem>>, vector<36x32xbf16>
    %cst_93 = arith.constant dense<0.000000e+00> : vector<64x32xf32>
    %57 = tpu.matmul %55, %56, %cst_93 {dimension_numbers = #tpu.dot_dimension_numbers<[1], [0], [0], [1], [0, 0, 1, 1], [], []>} : vector<64x36xbf16>, vector<36x32xbf16>, vector<64x32xf32> -> vector<64x32xf32>
    %c0_94 = arith.constant 0 : index
    %c0_95 = arith.constant 0 : index
    %58 = vector.load %arg3[%c0_94, %c0_95] : memref<1x32xf32, #tpu.memory_space<vmem>>, vector<1x32xf32>
    %59 = vector.broadcast %58 : vector<1x32xf32> to vector<64x32xf32>
    %60 = arith.addf %57, %59 : vector<64x32xf32>
    %cst_96 = arith.constant 0.000000e+00 : f32
    %61 = vector.broadcast %cst_96 : f32 to vector<64x32xf32>
    %62 = arith.cmpf ogt, %60, %61 : vector<64x32xf32>
    %cst_97 = arith.constant 0.00999999977 : f32
    %63 = vector.broadcast %cst_97 : f32 to vector<64x32xf32>
    %64 = arith.mulf %63, %60 : vector<64x32xf32>
    %65 = arith.select %62, %60, %64 : vector<64x32xi1>, vector<64x32xf32>
    %c0_98 = arith.constant 0 : index
    %c0_99 = arith.constant 0 : index
    %66 = vector.load %arg4[%c0_98, %c0_99] : memref<4x64xbf16, #tpu.memory_space<vmem>>, vector<4x64xbf16>
    %67 = arith.truncf %17 : vector<64x4xf32> to vector<64x4xbf16>
    %cst_100 = arith.constant dense<0.000000e+00> : vector<64x64xf32>
    %68 = tpu.matmul %67, %66, %cst_100 {dimension_numbers = #tpu.dot_dimension_numbers<[1], [0], [0], [1], [0, 0, 1, 1], [], []>} : vector<64x4xbf16>, vector<4x64xbf16>, vector<64x64xf32> -> vector<64x64xf32>
    %c0_101 = arith.constant 0 : index
    %c0_102 = arith.constant 0 : index
    %69 = vector.load %arg5[%c0_101, %c0_102] : memref<32x64xbf16, #tpu.memory_space<vmem>>, vector<32x64xbf16>
    %70 = arith.truncf %65 : vector<64x32xf32> to vector<64x32xbf16>
    %cst_103 = arith.constant dense<0.000000e+00> : vector<64x64xf32>
    %71 = tpu.matmul %70, %69, %cst_103 {dimension_numbers = #tpu.dot_dimension_numbers<[1], [0], [0], [1], [0, 0, 1, 1], [], []>} : vector<64x32xbf16>, vector<32x64xbf16>, vector<64x64xf32> -> vector<64x64xf32>
    %72 = vector.extract_strided_slice %68 {offsets = [0, 0], sizes = [64, 32], strides = [1, 1]} : vector<64x64xf32> to vector<64x32xf32>
    %73 = vector.extract_strided_slice %71 {offsets = [0, 0], sizes = [64, 32], strides = [1, 1]} : vector<64x64xf32> to vector<64x32xf32>
    %74 = arith.addf %72, %73 : vector<64x32xf32>
    %c0_104 = arith.constant 0 : index
    %c0_105 = arith.constant 0 : index
    %75 = vector.load %arg6[%c0_104, %c0_105] : memref<1x32xf32, #tpu.memory_space<vmem>>, vector<1x32xf32>
    %76 = vector.broadcast %75 : vector<1x32xf32> to vector<64x32xf32>
    %77 = arith.addf %74, %76 : vector<64x32xf32>
    %78 = vector.shape_cast %77 : vector<64x32xf32> to vector<1x8x8x32xf32>
    %c0_106 = arith.constant 0 : index
    %c1_107 = arith.constant 1 : index
    %c1_108 = arith.constant 1 : index
    %c0_109 = arith.constant 0 : index
    %79 = vector.load %arg16[%c0_106, %c1_107, %c1_108, %c0_109] : memref<1x10x10x32xf32, #tpu.memory_space<vmem>>, vector<1x8x8x32xf32>
    tpu.vector_store %arg16[%c0_106, %c1_107, %c1_108, %c0_109], %78 {strides = array<i32>} : memref<1x10x10x32xf32, #tpu.memory_space<vmem>>, vector<1x8x8x32xf32>,
    %c0_110 = arith.constant 0 : index
    %c0_111 = arith.constant 0 : index
    %c0_112 = arith.constant 0 : index
    %c0_113 = arith.constant 0 : index
    %80 = vector.load %arg16[%c0_110, %c0_111, %c0_112, %c0_113] : memref<1x10x10x32xf32, #tpu.memory_space<vmem>>, vector<1x8x8x32xf32>
    %81 = vector.shape_cast %80 : vector<1x8x8x32xf32> to vector<64x32xf32>
    %82 = arith.truncf %81 : vector<64x32xf32> to vector<64x32xbf16>
    %c0_114 = arith.constant 0 : index
    %c0_115 = arith.constant 0 : index
    %83 = vector.load %arg18[%c0_114, %c0_115] : memref<64x288xbf16, #tpu.memory_space<vmem>>, vector<64x32xbf16>
    tpu.vector_store %arg18[%c0_114, %c0_115], %82 {strides = array<i32>} : memref<64x288xbf16, #tpu.memory_space<vmem>>, vector<64x32xbf16>,
    %c0_116 = arith.constant 0 : index
    %c0_117 = arith.constant 0 : index
    %c1_118 = arith.constant 1 : index
    %c0_119 = arith.constant 0 : index
    %84 = vector.load %arg16[%c0_116, %c0_117, %c1_118, %c0_119] : memref<1x10x10x32xf32, #tpu.memory_space<vmem>>, vector<1x8x8x32xf32>
    %85 = vector.shape_cast %84 : vector<1x8x8x32xf32> to vector<64x32xf32>
    %86 = arith.truncf %85 : vector<64x32xf32> to vector<64x32xbf16>
    %c0_120 = arith.constant 0 : index
    %c32_121 = arith.constant 32 : index
    %87 = vector.load %arg18[%c0_120, %c32_121] : memref<64x288xbf16, #tpu.memory_space<vmem>>, vector<64x32xbf16>
    tpu.vector_store %arg18[%c0_120, %c32_121], %86 {strides = array<i32>} : memref<64x288xbf16, #tpu.memory_space<vmem>>, vector<64x32xbf16>,
    %c0_122 = arith.constant 0 : index
    %c0_123 = arith.constant 0 : index
    %c2_124 = arith.constant 2 : index
    %c0_125 = arith.constant 0 : index
    %88 = vector.load %arg16[%c0_122, %c0_123, %c2_124, %c0_125] : memref<1x10x10x32xf32, #tpu.memory_space<vmem>>, vector<1x8x8x32xf32>
    %89 = vector.shape_cast %88 : vector<1x8x8x32xf32> to vector<64x32xf32>
    %90 = arith.truncf %89 : vector<64x32xf32> to vector<64x32xbf16>
    %c0_126 = arith.constant 0 : index
    %c64 = arith.constant 64 : index
    %91 = vector.load %arg18[%c0_126, %c64] : memref<64x288xbf16, #tpu.memory_space<vmem>>, vector<64x32xbf16>
    tpu.vector_store %arg18[%c0_126, %c64], %90 {strides = array<i32>} : memref<64x288xbf16, #tpu.memory_space<vmem>>, vector<64x32xbf16>,
    %c0_127 = arith.constant 0 : index
    %c1_128 = arith.constant 1 : index
    %c0_129 = arith.constant 0 : index
    %c0_130 = arith.constant 0 : index
    %92 = vector.load %arg16[%c0_127, %c1_128, %c0_129, %c0_130] : memref<1x10x10x32xf32, #tpu.memory_space<vmem>>, vector<1x8x8x32xf32>
    %93 = vector.shape_cast %92 : vector<1x8x8x32xf32> to vector<64x32xf32>
    %94 = arith.truncf %93 : vector<64x32xf32> to vector<64x32xbf16>
    %c0_131 = arith.constant 0 : index
    %c96 = arith.constant 96 : index
    %95 = vector.load %arg18[%c0_131, %c96] : memref<64x288xbf16, #tpu.memory_space<vmem>>, vector<64x32xbf16>
    tpu.vector_store %arg18[%c0_131, %c96], %94 {strides = array<i32>} : memref<64x288xbf16, #tpu.memory_space<vmem>>, vector<64x32xbf16>,
    %c0_132 = arith.constant 0 : index
    %c1_133 = arith.constant 1 : index
    %c1_134 = arith.constant 1 : index
    %c0_135 = arith.constant 0 : index
    %96 = vector.load %arg16[%c0_132, %c1_133, %c1_134, %c0_135] : memref<1x10x10x32xf32, #tpu.memory_space<vmem>>, vector<1x8x8x32xf32>
    %97 = vector.shape_cast %96 : vector<1x8x8x32xf32> to vector<64x32xf32>
    %98 = arith.truncf %97 : vector<64x32xf32> to vector<64x32xbf16>
    %c0_136 = arith.constant 0 : index
    %c128 = arith.constant 128 : index
    %99 = vector.load %arg18[%c0_136, %c128] : memref<64x288xbf16, #tpu.memory_space<vmem>>, vector<64x32xbf16>
    tpu.vector_store %arg18[%c0_136, %c128], %98 {strides = array<i32>} : memref<64x288xbf16, #tpu.memory_space<vmem>>, vector<64x32xbf16>,
    %c0_137 = arith.constant 0 : index
    %c1_138 = arith.constant 1 : index
    %c2_139 = arith.constant 2 : index
    %c0_140 = arith.constant 0 : index
    %100 = vector.load %arg16[%c0_137, %c1_138, %c2_139, %c0_140] : memref<1x10x10x32xf32, #tpu.memory_space<vmem>>, vector<1x8x8x32xf32>
    %101 = vector.shape_cast %100 : vector<1x8x8x32xf32> to vector<64x32xf32>
    %102 = arith.truncf %101 : vector<64x32xf32> to vector<64x32xbf16>
    %c0_141 = arith.constant 0 : index
    %c160 = arith.constant 160 : index
    %103 = vector.load %arg18[%c0_141, %c160] : memref<64x288xbf16, #tpu.memory_space<vmem>>, vector<64x32xbf16>
    tpu.vector_store %arg18[%c0_141, %c160], %102 {strides = array<i32>} : memref<64x288xbf16, #tpu.memory_space<vmem>>, vector<64x32xbf16>,
    %c0_142 = arith.constant 0 : index
    %c2_143 = arith.constant 2 : index
    %c0_144 = arith.constant 0 : index
    %c0_145 = arith.constant 0 : index
    %104 = vector.load %arg16[%c0_142, %c2_143, %c0_144, %c0_145] : memref<1x10x10x32xf32, #tpu.memory_space<vmem>>, vector<1x8x8x32xf32>
    %105 = vector.shape_cast %104 : vector<1x8x8x32xf32> to vector<64x32xf32>
    %106 = arith.truncf %105 : vector<64x32xf32> to vector<64x32xbf16>
    %c0_146 = arith.constant 0 : index
    %c192 = arith.constant 192 : index
    %107 = vector.load %arg18[%c0_146, %c192] : memref<64x288xbf16, #tpu.memory_space<vmem>>, vector<64x32xbf16>
    tpu.vector_store %arg18[%c0_146, %c192], %106 {strides = array<i32>} : memref<64x288xbf16, #tpu.memory_space<vmem>>, vector<64x32xbf16>,
    %c0_147 = arith.constant 0 : index
    %c2_148 = arith.constant 2 : index
    %c1_149 = arith.constant 1 : index
    %c0_150 = arith.constant 0 : index
    %108 = vector.load %arg16[%c0_147, %c2_148, %c1_149, %c0_150] : memref<1x10x10x32xf32, #tpu.memory_space<vmem>>, vector<1x8x8x32xf32>
    %109 = vector.shape_cast %108 : vector<1x8x8x32xf32> to vector<64x32xf32>
    %110 = arith.truncf %109 : vector<64x32xf32> to vector<64x32xbf16>
    %c0_151 = arith.constant 0 : index
    %c224 = arith.constant 224 : index
    %111 = vector.load %arg18[%c0_151, %c224] : memref<64x288xbf16, #tpu.memory_space<vmem>>, vector<64x32xbf16>
    tpu.vector_store %arg18[%c0_151, %c224], %110 {strides = array<i32>} : memref<64x288xbf16, #tpu.memory_space<vmem>>, vector<64x32xbf16>,
    %c0_152 = arith.constant 0 : index
    %c2_153 = arith.constant 2 : index
    %c2_154 = arith.constant 2 : index
    %c0_155 = arith.constant 0 : index
    %112 = vector.load %arg16[%c0_152, %c2_153, %c2_154, %c0_155] : memref<1x10x10x32xf32, #tpu.memory_space<vmem>>, vector<1x8x8x32xf32>
    %113 = vector.shape_cast %112 : vector<1x8x8x32xf32> to vector<64x32xf32>
    %114 = arith.truncf %113 : vector<64x32xf32> to vector<64x32xbf16>
    %c0_156 = arith.constant 0 : index
    %c256 = arith.constant 256 : index
    %115 = vector.load %arg18[%c0_156, %c256] : memref<64x288xbf16, #tpu.memory_space<vmem>>, vector<64x32xbf16>
    tpu.vector_store %arg18[%c0_156, %c256], %114 {strides = array<i32>} : memref<64x288xbf16, #tpu.memory_space<vmem>>, vector<64x32xbf16>,
    %c0_157 = arith.constant 0 : index
    %c0_158 = arith.constant 0 : index
    %116 = vector.load %arg18[%c0_157, %c0_158] : memref<64x288xbf16, #tpu.memory_space<vmem>>, vector<64x288xbf16>
    %c0_159 = arith.constant 0 : index
    %c0_160 = arith.constant 0 : index
    %117 = vector.load %arg7[%c0_159, %c0_160] : memref<288x32xbf16, #tpu.memory_space<vmem>>, vector<288x32xbf16>
    %cst_161 = arith.constant dense<0.000000e+00> : vector<64x32xf32>
    %118 = tpu.matmul %116, %117, %cst_161 {dimension_numbers = #tpu.dot_dimension_numbers<[1], [0], [0], [1], [0, 0, 1, 1], [], []>} : vector<64x288xbf16>, vector<288x32xbf16>, vector<64x32xf32> -> vector<64x32xf32>
    %c0_162 = arith.constant 0 : index
    %c0_163 = arith.constant 0 : index
    %119 = vector.load %arg8[%c0_162, %c0_163] : memref<1x32xf32, #tpu.memory_space<vmem>>, vector<1x32xf32>
    %120 = vector.broadcast %119 : vector<1x32xf32> to vector<64x32xf32>
    %121 = arith.addf %118, %120 : vector<64x32xf32>
    %cst_164 = arith.constant 0.000000e+00 : f32
    %122 = vector.broadcast %cst_164 : f32 to vector<64x32xf32>
    %123 = arith.cmpf ogt, %121, %122 : vector<64x32xf32>
    %cst_165 = arith.constant 0.00999999977 : f32
    %124 = vector.broadcast %cst_165 : f32 to vector<64x32xf32>
    %125 = arith.mulf %124, %121 : vector<64x32xf32>
    %126 = arith.select %123, %121, %125 : vector<64x32xi1>, vector<64x32xf32>
    %127 = vector.extract_strided_slice %68 {offsets = [0, 32], sizes = [64, 32], strides = [1, 1]} : vector<64x64xf32> to vector<64x32xf32>
    %128 = vector.extract_strided_slice %71 {offsets = [0, 32], sizes = [64, 32], strides = [1, 1]} : vector<64x64xf32> to vector<64x32xf32>
    %129 = arith.addf %127, %128 : vector<64x32xf32>
    %c0_166 = arith.constant 0 : index
    %c0_167 = arith.constant 0 : index
    %130 = vector.load %arg9[%c0_166, %c0_167] : memref<32x32xbf16, #tpu.memory_space<vmem>>, vector<32x32xbf16>
    %131 = arith.truncf %126 : vector<64x32xf32> to vector<64x32xbf16>
    %cst_168 = arith.constant dense<0.000000e+00> : vector<64x32xf32>
    %132 = tpu.matmul %131, %130, %cst_168 {dimension_numbers = #tpu.dot_dimension_numbers<[1], [0], [0], [1], [0, 0, 1, 1], [], []>} : vector<64x32xbf16>, vector<32x32xbf16>, vector<64x32xf32> -> vector<64x32xf32>
    %133 = arith.addf %129, %132 : vector<64x32xf32>
    %c0_169 = arith.constant 0 : index
    %c0_170 = arith.constant 0 : index
    %134 = vector.load %arg10[%c0_169, %c0_170] : memref<1x32xf32, #tpu.memory_space<vmem>>, vector<1x32xf32>
    %135 = vector.broadcast %134 : vector<1x32xf32> to vector<64x32xf32>
    %136 = arith.addf %133, %135 : vector<64x32xf32>
    %137 = vector.shape_cast %136 : vector<64x32xf32> to vector<1x8x8x32xf32>
    %c0_171 = arith.constant 0 : index
    %c1_172 = arith.constant 1 : index
    %c1_173 = arith.constant 1 : index
    %c0_174 = arith.constant 0 : index
    %138 = vector.load %arg16[%c0_171, %c1_172, %c1_173, %c0_174] : memref<1x10x10x32xf32, #tpu.memory_space<vmem>>, vector<1x8x8x32xf32>
    tpu.vector_store %arg16[%c0_171, %c1_172, %c1_173, %c0_174], %137 {strides = array<i32>} : memref<1x10x10x32xf32, #tpu.memory_space<vmem>>, vector<1x8x8x32xf32>,
    %c0_175 = arith.constant 0 : index
    %c0_176 = arith.constant 0 : index
    %c0_177 = arith.constant 0 : index
    %c0_178 = arith.constant 0 : index
    %139 = vector.load %arg16[%c0_175, %c0_176, %c0_177, %c0_178] : memref<1x10x10x32xf32, #tpu.memory_space<vmem>>, vector<1x8x8x32xf32>
    %140 = vector.shape_cast %139 : vector<1x8x8x32xf32> to vector<64x32xf32>
    %141 = arith.truncf %140 : vector<64x32xf32> to vector<64x32xbf16>
    %c0_179 = arith.constant 0 : index
    %c0_180 = arith.constant 0 : index
    %142 = vector.load %arg18[%c0_179, %c0_180] : memref<64x288xbf16, #tpu.memory_space<vmem>>, vector<64x32xbf16>
    tpu.vector_store %arg18[%c0_179, %c0_180], %141 {strides = array<i32>} : memref<64x288xbf16, #tpu.memory_space<vmem>>, vector<64x32xbf16>,
    %c0_181 = arith.constant 0 : index
    %c0_182 = arith.constant 0 : index
    %c1_183 = arith.constant 1 : index
    %c0_184 = arith.constant 0 : index
    %143 = vector.load %arg16[%c0_181, %c0_182, %c1_183, %c0_184] : memref<1x10x10x32xf32, #tpu.memory_space<vmem>>, vector<1x8x8x32xf32>
    %144 = vector.shape_cast %143 : vector<1x8x8x32xf32> to vector<64x32xf32>
    %145 = arith.truncf %144 : vector<64x32xf32> to vector<64x32xbf16>
    %c0_185 = arith.constant 0 : index
    %c32_186 = arith.constant 32 : index
    %146 = vector.load %arg18[%c0_185, %c32_186] : memref<64x288xbf16, #tpu.memory_space<vmem>>, vector<64x32xbf16>
    tpu.vector_store %arg18[%c0_185, %c32_186], %145 {strides = array<i32>} : memref<64x288xbf16, #tpu.memory_space<vmem>>, vector<64x32xbf16>,
    %c0_187 = arith.constant 0 : index
    %c0_188 = arith.constant 0 : index
    %c2_189 = arith.constant 2 : index
    %c0_190 = arith.constant 0 : index
    %147 = vector.load %arg16[%c0_187, %c0_188, %c2_189, %c0_190] : memref<1x10x10x32xf32, #tpu.memory_space<vmem>>, vector<1x8x8x32xf32>
    %148 = vector.shape_cast %147 : vector<1x8x8x32xf32> to vector<64x32xf32>
    %149 = arith.truncf %148 : vector<64x32xf32> to vector<64x32xbf16>
    %c0_191 = arith.constant 0 : index
    %c64_192 = arith.constant 64 : index
    %150 = vector.load %arg18[%c0_191, %c64_192] : memref<64x288xbf16, #tpu.memory_space<vmem>>, vector<64x32xbf16>
    tpu.vector_store %arg18[%c0_191, %c64_192], %149 {strides = array<i32>} : memref<64x288xbf16, #tpu.memory_space<vmem>>, vector<64x32xbf16>,
    %c0_193 = arith.constant 0 : index
    %c1_194 = arith.constant 1 : index
    %c0_195 = arith.constant 0 : index
    %c0_196 = arith.constant 0 : index
    %151 = vector.load %arg16[%c0_193, %c1_194, %c0_195, %c0_196] : memref<1x10x10x32xf32, #tpu.memory_space<vmem>>, vector<1x8x8x32xf32>
    %152 = vector.shape_cast %151 : vector<1x8x8x32xf32> to vector<64x32xf32>
    %153 = arith.truncf %152 : vector<64x32xf32> to vector<64x32xbf16>
    %c0_197 = arith.constant 0 : index
    %c96_198 = arith.constant 96 : index
    %154 = vector.load %arg18[%c0_197, %c96_198] : memref<64x288xbf16, #tpu.memory_space<vmem>>, vector<64x32xbf16>
    tpu.vector_store %arg18[%c0_197, %c96_198], %153 {strides = array<i32>} : memref<64x288xbf16, #tpu.memory_space<vmem>>, vector<64x32xbf16>,
    %c0_199 = arith.constant 0 : index
    %c1_200 = arith.constant 1 : index
    %c1_201 = arith.constant 1 : index
    %c0_202 = arith.constant 0 : index
    %155 = vector.load %arg16[%c0_199, %c1_200, %c1_201, %c0_202] : memref<1x10x10x32xf32, #tpu.memory_space<vmem>>, vector<1x8x8x32xf32>
    %156 = vector.shape_cast %155 : vector<1x8x8x32xf32> to vector<64x32xf32>
    %157 = arith.truncf %156 : vector<64x32xf32> to vector<64x32xbf16>
    %c0_203 = arith.constant 0 : index
    %c128_204 = arith.constant 128 : index
    %158 = vector.load %arg18[%c0_203, %c128_204] : memref<64x288xbf16, #tpu.memory_space<vmem>>, vector<64x32xbf16>
    tpu.vector_store %arg18[%c0_203, %c128_204], %157 {strides = array<i32>} : memref<64x288xbf16, #tpu.memory_space<vmem>>, vector<64x32xbf16>,
    %c0_205 = arith.constant 0 : index
    %c1_206 = arith.constant 1 : index
    %c2_207 = arith.constant 2 : index
    %c0_208 = arith.constant 0 : index
    %159 = vector.load %arg16[%c0_205, %c1_206, %c2_207, %c0_208] : memref<1x10x10x32xf32, #tpu.memory_space<vmem>>, vector<1x8x8x32xf32>
    %160 = vector.shape_cast %159 : vector<1x8x8x32xf32> to vector<64x32xf32>
    %161 = arith.truncf %160 : vector<64x32xf32> to vector<64x32xbf16>
    %c0_209 = arith.constant 0 : index
    %c160_210 = arith.constant 160 : index
    %162 = vector.load %arg18[%c0_209, %c160_210] : memref<64x288xbf16, #tpu.memory_space<vmem>>, vector<64x32xbf16>
    tpu.vector_store %arg18[%c0_209, %c160_210], %161 {strides = array<i32>} : memref<64x288xbf16, #tpu.memory_space<vmem>>, vector<64x32xbf16>,
    %c0_211 = arith.constant 0 : index
    %c2_212 = arith.constant 2 : index
    %c0_213 = arith.constant 0 : index
    %c0_214 = arith.constant 0 : index
    %163 = vector.load %arg16[%c0_211, %c2_212, %c0_213, %c0_214] : memref<1x10x10x32xf32, #tpu.memory_space<vmem>>, vector<1x8x8x32xf32>
    %164 = vector.shape_cast %163 : vector<1x8x8x32xf32> to vector<64x32xf32>
    %165 = arith.truncf %164 : vector<64x32xf32> to vector<64x32xbf16>
    %c0_215 = arith.constant 0 : index
    %c192_216 = arith.constant 192 : index
    %166 = vector.load %arg18[%c0_215, %c192_216] : memref<64x288xbf16, #tpu.memory_space<vmem>>, vector<64x32xbf16>
    tpu.vector_store %arg18[%c0_215, %c192_216], %165 {strides = array<i32>} : memref<64x288xbf16, #tpu.memory_space<vmem>>, vector<64x32xbf16>,
    %c0_217 = arith.constant 0 : index
    %c2_218 = arith.constant 2 : index
    %c1_219 = arith.constant 1 : index
    %c0_220 = arith.constant 0 : index
    %167 = vector.load %arg16[%c0_217, %c2_218, %c1_219, %c0_220] : memref<1x10x10x32xf32, #tpu.memory_space<vmem>>, vector<1x8x8x32xf32>
    %168 = vector.shape_cast %167 : vector<1x8x8x32xf32> to vector<64x32xf32>
    %169 = arith.truncf %168 : vector<64x32xf32> to vector<64x32xbf16>
    %c0_221 = arith.constant 0 : index
    %c224_222 = arith.constant 224 : index
    %170 = vector.load %arg18[%c0_221, %c224_222] : memref<64x288xbf16, #tpu.memory_space<vmem>>, vector<64x32xbf16>
    tpu.vector_store %arg18[%c0_221, %c224_222], %169 {strides = array<i32>} : memref<64x288xbf16, #tpu.memory_space<vmem>>, vector<64x32xbf16>,
    %c0_223 = arith.constant 0 : index
    %c2_224 = arith.constant 2 : index
    %c2_225 = arith.constant 2 : index
    %c0_226 = arith.constant 0 : index
    %171 = vector.load %arg16[%c0_223, %c2_224, %c2_225, %c0_226] : memref<1x10x10x32xf32, #tpu.memory_space<vmem>>, vector<1x8x8x32xf32>
    %172 = vector.shape_cast %171 : vector<1x8x8x32xf32> to vector<64x32xf32>
    %173 = arith.truncf %172 : vector<64x32xf32> to vector<64x32xbf16>
    %c0_227 = arith.constant 0 : index
    %c256_228 = arith.constant 256 : index
    %174 = vector.load %arg18[%c0_227, %c256_228] : memref<64x288xbf16, #tpu.memory_space<vmem>>, vector<64x32xbf16>
    tpu.vector_store %arg18[%c0_227, %c256_228], %173 {strides = array<i32>} : memref<64x288xbf16, #tpu.memory_space<vmem>>, vector<64x32xbf16>,
    %c0_229 = arith.constant 0 : index
    %c0_230 = arith.constant 0 : index
    %175 = vector.load %arg18[%c0_229, %c0_230] : memref<64x288xbf16, #tpu.memory_space<vmem>>, vector<64x288xbf16>
    %c0_231 = arith.constant 0 : index
    %c0_232 = arith.constant 0 : index
    %176 = vector.load %arg11[%c0_231, %c0_232] : memref<288x32xbf16, #tpu.memory_space<vmem>>, vector<288x32xbf16>
    %cst_233 = arith.constant dense<0.000000e+00> : vector<64x32xf32>
    %177 = tpu.matmul %175, %176, %cst_233 {dimension_numbers = #tpu.dot_dimension_numbers<[1], [0], [0], [1], [0, 0, 1, 1], [], []>} : vector<64x288xbf16>, vector<288x32xbf16>, vector<64x32xf32> -> vector<64x32xf32>
    %c0_234 = arith.constant 0 : index
    %c0_235 = arith.constant 0 : index
    %178 = vector.load %arg12[%c0_234, %c0_235] : memref<1x32xf32, #tpu.memory_space<vmem>>, vector<1x32xf32>
    %179 = vector.broadcast %178 : vector<1x32xf32> to vector<64x32xf32>
    %180 = arith.addf %177, %179 : vector<64x32xf32>
    %cst_236 = arith.constant 0.000000e+00 : f32
    %181 = vector.broadcast %cst_236 : f32 to vector<64x32xf32>
    %182 = arith.cmpf ogt, %180, %181 : vector<64x32xf32>
    %cst_237 = arith.constant 0.00999999977 : f32
    %183 = vector.broadcast %cst_237 : f32 to vector<64x32xf32>
    %184 = arith.mulf %183, %180 : vector<64x32xf32>
    %185 = arith.select %182, %180, %184 : vector<64x32xi1>, vector<64x32xf32>
    %cst_238 = arith.constant dense<0.000000e+00> : vector<32xf32>
    %186 = vector.multi_reduction <add>, %185, %cst_238 [0] : vector<64x32xf32> to vector<32xf32>
    %187 = vector.shape_cast %186 : vector<32xf32> to vector<1x32xf32>
    %188 = arith.mulf %185, %185 : vector<64x32xf32>
    %cst_239 = arith.constant dense<0.000000e+00> : vector<32xf32>
    %189 = vector.multi_reduction <add>, %188, %cst_239 [0] : vector<64x32xf32> to vector<32xf32>
    %190 = vector.shape_cast %189 : vector<32xf32> to vector<1x32xf32>
    %191 = tpu.concatenate %187, %190 in 0 : vector<1x32xf32>, vector<1x32xf32> -> vector<2x32xf32>
    %192 = vector.shape_cast %191 : vector<2x32xf32> to vector<1x2x32xf32>
    %c0_240 = arith.constant 0 : index
    %c0_241 = arith.constant 0 : index
    %c0_242 = arith.constant 0 : index
    %193 = vector.load %arg14[%c0_240, %c0_241, %c0_242] : memref<1x2x32xf32, #tpu.memory_space<vmem>>, vector<1x2x32xf32>
    tpu.vector_store %arg14[%c0_240, %c0_241, %c0_242], %192 {strides = array<i32>} : memref<1x2x32xf32, #tpu.memory_space<vmem>>, vector<1x2x32xf32>,
    %194 = vector.shape_cast %185 : vector<64x32xf32> to vector<8x8x32xf32>
    %195 = vector.extract_strided_slice %194 {offsets = [0, 0, 0], sizes = [8, 1, 32], strides = [1, 1, 1]} : vector<8x8x32xf32> to vector<8x1x32xf32>
    %196 = vector.shape_cast %195 : vector<8x1x32xf32> to vector<8x32xf32>
    %c0_243 = arith.constant 0 : index
    %c0_244 = arith.constant 0 : index
    %197 = vector.load %arg13[%c0_243, %c0_244] : memref<8x256xf32, #tpu.memory_space<vmem>>, vector<8x32xf32>
    tpu.vector_store %arg13[%c0_243, %c0_244], %196 {strides = array<i32>} : memref<8x256xf32, #tpu.memory_space<vmem>>, vector<8x32xf32>,
    %198 = vector.extract_strided_slice %194 {offsets = [0, 1, 0], sizes = [8, 1, 32], strides = [1, 1, 1]} : vector<8x8x32xf32> to vector<8x1x32xf32>
    %199 = vector.shape_cast %198 : vector<8x1x32xf32> to vector<8x32xf32>
    %c0_245 = arith.constant 0 : index
    %c32_246 = arith.constant 32 : index
    %200 = vector.load %arg13[%c0_245, %c32_246] : memref<8x256xf32, #tpu.memory_space<vmem>>, vector<8x32xf32>
    tpu.vector_store %arg13[%c0_245, %c32_246], %199 {strides = array<i32>} : memref<8x256xf32, #tpu.memory_space<vmem>>, vector<8x32xf32>,
    %201 = vector.extract_strided_slice %194 {offsets = [0, 2, 0], sizes = [8, 1, 32], strides = [1, 1, 1]} : vector<8x8x32xf32> to vector<8x1x32xf32>
    %202 = vector.shape_cast %201 : vector<8x1x32xf32> to vector<8x32xf32>
    %c0_247 = arith.constant 0 : index
    %c64_248 = arith.constant 64 : index
    %203 = vector.load %arg13[%c0_247, %c64_248] : memref<8x256xf32, #tpu.memory_space<vmem>>, vector<8x32xf32>
    tpu.vector_store %arg13[%c0_247, %c64_248], %202 {strides = array<i32>} : memref<8x256xf32, #tpu.memory_space<vmem>>, vector<8x32xf32>,
    %204 = vector.extract_strided_slice %194 {offsets = [0, 3, 0], sizes = [8, 1, 32], strides = [1, 1, 1]} : vector<8x8x32xf32> to vector<8x1x32xf32>
    %205 = vector.shape_cast %204 : vector<8x1x32xf32> to vector<8x32xf32>
    %c0_249 = arith.constant 0 : index
    %c96_250 = arith.constant 96 : index
    %206 = vector.load %arg13[%c0_249, %c96_250] : memref<8x256xf32, #tpu.memory_space<vmem>>, vector<8x32xf32>
    tpu.vector_store %arg13[%c0_249, %c96_250], %205 {strides = array<i32>} : memref<8x256xf32, #tpu.memory_space<vmem>>, vector<8x32xf32>,
    %207 = vector.extract_strided_slice %194 {offsets = [0, 4, 0], sizes = [8, 1, 32], strides = [1, 1, 1]} : vector<8x8x32xf32> to vector<8x1x32xf32>
    %208 = vector.shape_cast %207 : vector<8x1x32xf32> to vector<8x32xf32>
    %c0_251 = arith.constant 0 : index
    %c128_252 = arith.constant 128 : index
    %209 = vector.load %arg13[%c0_251, %c128_252] : memref<8x256xf32, #tpu.memory_space<vmem>>, vector<8x32xf32>
    tpu.vector_store %arg13[%c0_251, %c128_252], %208 {strides = array<i32>} : memref<8x256xf32, #tpu.memory_space<vmem>>, vector<8x32xf32>,
    %210 = vector.extract_strided_slice %194 {offsets = [0, 5, 0], sizes = [8, 1, 32], strides = [1, 1, 1]} : vector<8x8x32xf32> to vector<8x1x32xf32>
    %211 = vector.shape_cast %210 : vector<8x1x32xf32> to vector<8x32xf32>
    %c0_253 = arith.constant 0 : index
    %c160_254 = arith.constant 160 : index
    %212 = vector.load %arg13[%c0_253, %c160_254] : memref<8x256xf32, #tpu.memory_space<vmem>>, vector<8x32xf32>
    tpu.vector_store %arg13[%c0_253, %c160_254], %211 {strides = array<i32>} : memref<8x256xf32, #tpu.memory_space<vmem>>, vector<8x32xf32>,
    %213 = vector.extract_strided_slice %194 {offsets = [0, 6, 0], sizes = [8, 1, 32], strides = [1, 1, 1]} : vector<8x8x32xf32> to vector<8x1x32xf32>
    %214 = vector.shape_cast %213 : vector<8x1x32xf32> to vector<8x32xf32>
    %c0_255 = arith.constant 0 : index
    %c192_256 = arith.constant 192 : index
    %215 = vector.load %arg13[%c0_255, %c192_256] : memref<8x256xf32, #tpu.memory_space<vmem>>, vector<8x32xf32>
    tpu.vector_store %arg13[%c0_255, %c192_256], %214 {strides = array<i32>} : memref<8x256xf32, #tpu.memory_space<vmem>>, vector<8x32xf32>,
    %216 = vector.extract_strided_slice %194 {offsets = [0, 7, 0], sizes = [8, 1, 32], strides = [1, 1, 1]} : vector<8x8x32xf32> to vector<8x1x32xf32>
    %217 = vector.shape_cast %216 : vector<8x1x32xf32> to vector<8x32xf32>
    %c0_257 = arith.constant 0 : index
    %c224_258 = arith.constant 224 : index
    %218 = vector.load %arg13[%c0_257, %c224_258] : memref<8x256xf32, #tpu.memory_space<vmem>>, vector<8x32xf32>
    tpu.vector_store %arg13[%c0_257, %c224_258], %217 {strides = array<i32>} : memref<8x256xf32, #tpu.memory_space<vmem>>, vector<8x32xf32>,
    return
  }
  func.func @transform_0(%arg0: i32) -> (i32, i32, i32, i32) {
    %c0_i32 = arith.constant 0 : i32
    %c0_i32_0 = arith.constant 0 : i32
    %c0_i32_1 = arith.constant 0 : i32
    %c0_i32_2 = arith.constant 0 : i32
    return %arg0, %c0_i32, %c0_i32_0, %c0_i32_1 : i32, i32, i32, i32
  }
  func.func @transform_1(%arg0: i32) -> (i32, i32) {
    %c0_i32 = arith.constant 0 : i32
    %c0_i32_0 = arith.constant 0 : i32
    %c0_i32_1 = arith.constant 0 : i32
    return %c0_i32, %c0_i32_0 : i32, i32
  }
  func.func @transform_2(%arg0: i32) -> (i32, i32) {
    %c0_i32 = arith.constant 0 : i32
    %c0_i32_0 = arith.constant 0 : i32
    %c0_i32_1 = arith.constant 0 : i32
    return %c0_i32, %c0_i32_0 : i32, i32
  }
  func.func @transform_3(%arg0: i32) -> (i32, i32) {
    %c0_i32 = arith.constant 0 : i32
    %c0_i32_0 = arith.constant 0 : i32
    %c0_i32_1 = arith.constant 0 : i32
    return %c0_i32, %c0_i32_0 : i32, i32
  }
  func.func @transform_4(%arg0: i32) -> (i32, i32) {
    %c0_i32 = arith.constant 0 : i32
    %c0_i32_0 = arith.constant 0 : i32
    %c0_i32_1 = arith.constant 0 : i32
    return %c0_i32, %c0_i32_0 : i32, i32
  }
  func.func @transform_5(%arg0: i32) -> (i32, i32) {
    %c0_i32 = arith.constant 0 : i32
    %c0_i32_0 = arith.constant 0 : i32
    %c0_i32_1 = arith.constant 0 : i32
    return %c0_i32, %c0_i32_0 : i32, i32
  }
  func.func @transform_6(%arg0: i32) -> (i32, i32) {
    %c0_i32 = arith.constant 0 : i32
    %c0_i32_0 = arith.constant 0 : i32
    %c0_i32_1 = arith.constant 0 : i32
    return %c0_i32, %c0_i32_0 : i32, i32
  }
  func.func @transform_7(%arg0: i32) -> (i32, i32) {
    %c0_i32 = arith.constant 0 : i32
    %c0_i32_0 = arith.constant 0 : i32
    %c0_i32_1 = arith.constant 0 : i32
    return %c0_i32, %c0_i32_0 : i32, i32
  }
  func.func @transform_8(%arg0: i32) -> (i32, i32) {
    %c0_i32 = arith.constant 0 : i32
    %c0_i32_0 = arith.constant 0 : i32
    %c0_i32_1 = arith.constant 0 : i32
    return %c0_i32, %c0_i32_0 : i32, i32
  }
  func.func @transform_9(%arg0: i32) -> (i32, i32) {
    %c0_i32 = arith.constant 0 : i32
    %c0_i32_0 = arith.constant 0 : i32
    %c0_i32_1 = arith.constant 0 : i32
    return %c0_i32, %c0_i32_0 : i32, i32
  }
  func.func @transform_10(%arg0: i32) -> (i32, i32) {
    %c0_i32 = arith.constant 0 : i32
    %c0_i32_0 = arith.constant 0 : i32
    %c0_i32_1 = arith.constant 0 : i32
    return %c0_i32, %c0_i32_0 : i32, i32
  }
  func.func @transform_11(%arg0: i32) -> (i32, i32) {
    %c0_i32 = arith.constant 0 : i32
    %c0_i32_0 = arith.constant 0 : i32
    %c0_i32_1 = arith.constant 0 : i32
    return %c0_i32, %c0_i32_0 : i32, i32
  }
  func.func @transform_12(%arg0: i32) -> (i32, i32) {
    %c0_i32 = arith.constant 0 : i32
    %c0_i32_0 = arith.constant 0 : i32
    return %arg0, %c0_i32 : i32, i32
  }
  func.func @transform_13(%arg0: i32) -> (i32, i32, i32) {
    %c0_i32 = arith.constant 0 : i32
    %c0_i32_0 = arith.constant 0 : i32
    %c0_i32_1 = arith.constant 0 : i32
    return %arg0, %c0_i32, %c0_i32_0 : i32, i32, i32
  }
}

</mosaic_0001>

<llo_original>
// kernel: tile.13
$region0: #{tile.13}
  #allocation0 [shape = 's32[1]{0}', space=sflag, size = 0x4, scoped, tag = 'scoped memory for tile.13']
  %s0 = inlined_call_operand.vmem [shape: f32[32], index: 0, kind: input, shape index: {}]
  %s1 = inlined_call_operand.vmem [shape: f32[8,32], index: 1, kind: output, shape index: {}]
  // Predicated region
  $region2: #{tile.13} parent=0 // pred_check
    _
  $region3: #{tile.13} parent=0 // pred_check_branch
    %3 = sbr.rel (0) target = $region5
  $region4: #{tile.13} parent=0 // pred_region
    _
  $region5: #{tile.13} parent=0 // pred_fallthru
    _
  %v4 = vld [vmem:[%s0] ss:$0 sm:$0xff]
  %5 = vst [vmem:[%s1] sm:$0xff] %v4

// kernel: tile.14
$region0: #{tile.14}
  %s0 = inlined_call_operand.vmem [shape: f32[8,32], index: 0, kind: input, shape index: {}]
  %s1 = inlined_call_operand.vmem [shape: f32[1,256], index: 1, kind: output, shape index: {}]
  $region1: #{tile.14} parent=0
    #allocation0 [shape = 'u8[8192]{0}', space=vmem, size = 0x2000, scoped, tag = 'scoped mem for output reshape']
    %s2 = smov 3
    %v3 = vld [vmem:[%s0] ss:$4 sm:%s2]
    %vm4 = vcmask 261120
    %5 = vst.msk [vmem:[#allocation0] ss:$8 sm:$0x3] %vm4, %v3
    %s6 = scalar_lea.vmem %s0, 3
    %s7 = smov 3
    %v8 = vld [vmem:[%s6] ss:$4 sm:%s7]
    %9 = vrot.lane.b32.xlu0 %v8, 96
    %v10 = vpop.permute.xlu0 %9
    %vm11 = vcmask 1048320
    %12 = vst.msk [vmem:[#allocation0] ss:$8 sm:$0x3] %vm11, %v10
    %s13 = scalar_lea.vmem %s0, 2
    %s14 = smov 3
    %v15 = vld [vmem:[%s13] ss:$4 sm:%s14]
    %16 = vrot.lane.b32.xlu0 %v15, 64
    %v17 = vpop.permute.xlu0 %16
    %vm18 = vcmask 785920
    %19 = vst.msk [vmem:[#allocation0] ss:$8 sm:$0x3] %vm18, %v17
    %s20 = scalar_lea.vmem %s0, 1
    %s21 = smov 3
    %v22 = vld [vmem:[%s20] ss:$4 sm:%s21]
    %23 = vrot.lane.b32.xlu0 %v22, 32
    %v24 = vpop.permute.xlu0 %23
    %vm25 = vcmask 523520
    %26 = vst.msk [vmem:[#allocation0] ss:$8 sm:$0x3] %vm25, %v24
    %s28 = sshll.u32 1, 1
    %s29 = ssub.s32 %s28, 1
    %v31 = vld [vmem:[#allocation0] sm:%s29]
    %s32 = sshll.u32 1, 1
    %s33 = ssub.s32 %s32, 1
    %34 = vst [vmem:[%s1] sm:%s33] %v31
    %s35 = scalar_lea.vmem [#allocation0], 8
    %v36 = vld [vmem:[%s35] sm:%s29]
    %s37 = sshll.u32 1, 1
    %s38 = ssub.s32 %s37, 1
    %s39 = scalar_lea.vmem %s1, 1
    %40 = vst [vmem:[%s39] sm:%s38] %v36

// kernel: down_block_forward.3
$region0: #{down_block_forward.3}
  #allocation0 [shape = 'u32[]', space=smem, size = 0x4, offset = 0x4, fixed_abs, tag = 'smem constant byte address 0x4 - core index']
  #allocation1 [shape = 'u32[144,128]{1,0:T(1,128)}', space=vmem, size = 0x12000, scoped, tag = 'internal scratch']
  %s0 = inlined_call_operand.vmem [shape: f32[16,256], index: 0, kind: input, shape index: {}]
  %s1 = inlined_call_operand.vmem [shape: f32[1,256], index: 1, kind: input, shape index: {}]
  %s2 = inlined_call_operand.vmem [shape: f32[1,256], index: 2, kind: input, shape index: {}]
  %s3 = inlined_call_operand.vmem [shape: f32[16,256], index: 3, kind: output, shape index: {}]
  %s4 = sld [smem:[#allocation0]]
  $region45: #{down_block_forward.3} parent=0
    _
  %s6 = ssub.s32 1, %s4
  %s7 = scalar_select 0, %s6, %s4
  loop: start=0, step=1, limit=4
  $region2: #{down_block_forward.3} parent=0 // loop_pre_header
    _
  $region3: #{down_block_forward.3} parent=0 // loop_header
    %s9 = sphi 0, %s13
    %p10 = scmp.ge.s32.totalorder %s9, 4
    %s19 = sphi 0, %s21
    %s22 = sphi 0, %s19
    %s23 = sphi 0, %s22
    %s39 = sphi 0, %s23
    %s43 = sphi 0, %s43
    %s45 = sphi 0, %s43
    %s46 = sphi 0, %s45
    %s60 = sphi 0, %s46
    %s64 = sphi 0, %s64
    %s66 = sphi 0, %s64
    %s67 = sphi 0, %s66
    %s81 = sphi 0, %s67
    %s87 = sphi 0, %s89
    %s90 = sphi 0, %s87
    %s91 = sphi 0, %s90
    %s107 = sphi 0, %s91
  $region4: #{down_block_forward.3} parent=0 // loop_header_branch
    %12 = sbr.rel (%p10) target = $region8
  $region5: #{down_block_forward.3} parent=0 // loop_body
    %s14 = ssub.s32 %s9, 1
    %s15 = ssub.s32 %s9, 2
    %s16 = sadd.s32 %s9, 1
    %s17 = ssub.s32 %s9, %s16
    %p18 = scmp.eq.s32.totalorder %s17, 0
    %s20 = sadd.s32 %s19, 1
    %s21 = scalar_select %p18, %s19, %s20
    %p24 = pneg %p18
    %p25 = scmp.eq.s32.totalorder %s9, 1
    %p26 = por %p24, %p25
    %p27 = scmp.ne.s32.totalorder %s19, %s22
    %p28 = scmp.eq.s32.totalorder %s9, 0
    %p29 = por %p27, %p28
    %p30 = scmp.ne.s32.totalorder %s19, %s22
    %p31 = scmp.eq.s32.totalorder %s14, 1
    %p32 = por %p30, %p31
    %p33 = scmp.ne.s32.totalorder %s22, %s23
    %p34 = scmp.eq.s32.totalorder %s14, 0
    %p35 = por %p33, %p34
    %p36 = scmp.ne.s32.totalorder %s22, %s23
    %p37 = scmp.eq.s32.totalorder %s15, 1
    %p38 = por %p36, %p37
    %p40 = scmp.ne.s32.totalorder %s23, %s39
    %p41 = scmp.eq.s32.totalorder %s15, 0
    %p42 = por %p40, %p41
    %s44 = sadd.s32 %s43, 1
    %p47 = scmp.eq.s32.totalorder %s9, 1
    %p48 = scmp.ne.s32.totalorder %s43, %s45
    %p49 = scmp.eq.s32.totalorder %s9, 0
    %p50 = por %p48, %p49
    %p51 = scmp.ne.s32.totalorder %s43, %s45
    %p52 = scmp.eq.s32.totalorder %s14, 1
    %p53 = por %p51, %p52
    %p54 = scmp.ne.s32.totalorder %s45, %s46
    %p55 = scmp.eq.s32.totalorder %s14, 0
    %p56 = por %p54, %p55
    %p57 = scmp.ne.s32.totalorder %s45, %s46
    %p58 = scmp.eq.s32.totalorder %s15, 1
    %p59 = por %p57, %p58
    %p61 = scmp.ne.s32.totalorder %s46, %s60
    %p62 = scmp.eq.s32.totalorder %s15, 0
    %p63 = por %p61, %p62
    %s65 = sadd.s32 %s64, 1
    %p68 = scmp.eq.s32.totalorder %s9, 1
    %p69 = scmp.ne.s32.totalorder %s64, %s66
    %p70 = scmp.eq.s32.totalorder %s9, 0
    %p71 = por %p69, %p70
    %p72 = scmp.ne.s32.totalorder %s64, %s66
    %p73 = scmp.eq.s32.totalorder %s14, 1
    %p74 = por %p72, %p73
    %p75 = scmp.ne.s32.totalorder %s66, %s67
    %p76 = scmp.eq.s32.totalorder %s14, 0
    %p77 = por %p75, %p76
    %p78 = scmp.ne.s32.totalorder %s66, %s67
    %p79 = scmp.eq.s32.totalorder %s15, 1
    %p80 = por %p78, %p79
    %p82 = scmp.ne.s32.totalorder %s67, %s81
    %p83 = scmp.eq.s32.totalorder %s15, 0
    %p84 = por %p82, %p83
    %s85 = ssub.s32 %s9, %s16
    %p86 = scmp.eq.s32.totalorder %s85, 0
    %s88 = sadd.s32 %s87, 1
    %s89 = scalar_select %p86, %s87, %s88
    %p92 = pneg %p86
    %p93 = scmp.eq.s32.totalorder %s9, 1
    %p94 = por %p92, %p93
    %p95 = scmp.ne.s32.totalorder %s87, %s90
    %p96 = scmp.eq.s32.totalorder %s9, 0
    %p97 = por %p95, %p96
    %p98 = scmp.ne.s32.totalorder %s87, %s90
    %p99 = scmp.eq.s32.totalorder %s14, 1
    %p100 = por %p98, %p99
    %p101 = scmp.ne.s32.totalorder %s90, %s91
    %p102 = scmp.eq.s32.totalorder %s14, 0
    %p103 = por %p101, %p102
    %p104 = scmp.ne.s32.totalorder %s90, %s91
    %p105 = scmp.eq.s32.totalorder %s15, 1
    %p106 = por %p104, %p105
    %p108 = scmp.ne.s32.totalorder %s91, %s107
    %p109 = scmp.eq.s32.totalorder %s15, 0
    %p110 = por %p108, %p109
    %p111 = scmp.le.s32.totalorder 1, %s9
    %p112 = scmp.lt.s32.totalorder %s9, 3
    %p113 = pnand %p111, %p112
    %p114 = pneg %p113
    // Predicated region
    $region9: #{down_block_forward.3} parent=5 // pred_check
      _
    $region10: #{down_block_forward.3} parent=5 // pred_check_branch
      %116 = sbr.rel (%p113) target = $region12
    $region11: #{down_block_forward.3} parent=5 // pred_region
      %s117 = ssub.s32 %s9, 1
      // Predicated region
      $region13: #{down_block_forward.3} parent=11 // pred_check
        %p118 = pneg %p56
      $region14: #{down_block_forward.3} parent=11 // pred_check_branch
        %120 = sbr.rel (%p118) target = $region16
      $region15: #{down_block_forward.3} parent=11 // pred_region
        _
      $region16: #{down_block_forward.3} parent=11 // pred_fallthru
        _
      // Predicated region
      $region17: #{down_block_forward.3} parent=11 // pred_check
        %p121 = pneg %p77
      $region18: #{down_block_forward.3} parent=11 // pred_check_branch
        %123 = sbr.rel (%p121) target = $region20
      $region19: #{down_block_forward.3} parent=11 // pred_region
        _
      $region20: #{down_block_forward.3} parent=11 // pred_fallthru
        _
    $region12: #{down_block_forward.3} parent=5 // pred_fallthru
      _
    %p124 = scmp.lt.s32.totalorder %s9, 2
    // Predicated region
    $region21: #{down_block_forward.3} parent=5 // pred_check
      %p125 = pneg %p124
    $region22: #{down_block_forward.3} parent=5 // pred_check_branch
      %127 = sbr.rel (%p125) target = $region24
    $region23: #{down_block_forward.3} parent=5 // pred_region
      // Predicated region
      $region25: #{down_block_forward.3} parent=23 // pred_check
        %p128 = pneg %p29
      $region26: #{down_block_forward.3} parent=23 // pred_check_branch
        %130 = sbr.rel (%p128) target = $region28
      $region27: #{down_block_forward.3} parent=23 // pred_region
        %p131 = scmp.lt.s32.totalorder %s9, 1
        %s132 = scalar_select %p131, %s9, 1
        %s133 = smul.addr %s132, 2
        %s134 = smul.addr %s133, 8
        %s135 = scalar_lea.vmem %s0, %s134
      $region28: #{down_block_forward.3} parent=23 // pred_fallthru
        _
    $region24: #{down_block_forward.3} parent=5 // pred_fallthru
      _
    %p136 = scmp.le.s32.totalorder 1, %s9
    %p137 = scmp.lt.s32.totalorder %s9, 3
    %p138 = pnand %p136, %p137
    %p139 = pneg %p138
    // Predicated region
    $region29: #{down_block_forward.3} parent=5 // pred_check
      _
    $region30: #{down_block_forward.3} parent=5 // pred_check_branch
      %141 = sbr.rel (%p138) target = $region32
    $region31: #{down_block_forward.3} parent=5 // pred_region
      %s142 = ssub.s32 %s9, 1
      %p143 = scmp.lt.s32.totalorder %s14, 1
      %s144 = scalar_select %p143, %s14, 1
      %s145 = smul.addr %s144, 2
      %s146 = smul.addr %s145, 8
      %s147 = scalar_lea.vmem %s0, %s146
      %p148 = pneg %p35
      %p149 = pneg %p32
      %p150 = pneg %p56
      %p151 = pneg %p53
      %p152 = pneg %p77
      %p153 = pneg %p74
      %p154 = pneg %p103
      %p155 = pneg %p100
      %p156 = scmp.lt.s32.totalorder %s14, 1
      %s157 = scalar_select %p156, %s14, 1
      %s158 = smul.addr %s157, 2
      %s159 = smul.addr %s158, 8
      %s160 = scalar_lea.vmem %s3, %s159
      %p161 = scmp.lt.s32.totalorder %s14, 1
      %s162 = scalar_select %p161, %s14, 1
      %s163 = smul.addr %s162, 2
      %s164 = smul.addr %s163, 8
      %s165 = scalar_lea.vmem %s0, %s164
      %p166 = scmp.lt.s32.totalorder %s14, 1
      %s167 = scalar_select %p166, %s14, 1
      %s168 = smul.addr %s167, 2
      %s169 = smul.addr %s168, 8
      %s170 = scalar_lea.vmem %s3, %s169
      %v171 = vld [vmem:[%s165] sm:$0xff]
      %v172 = vld [vmem:[%s165 + $0x8] sm:$0xff]
      %v173 = vld [vmem:[%s1] sm:$0x3]
      %v175 = vlaneseq
      %v176 = vshrl.u32 %v175, 7
      %v177 = vsub.s32 0, %v176
      %v178 = vrot.slane %v173, %v177
      %v179 = vlaneseq
      %v180 = vshrl.u32 %v179, 7
      %v181 = vsub.s32 1, %v180
      %v182 = vrot.slane %v173, %v181
      %v185 = vmul.f32 %v171, %v178
      %v186 = vmul.f32 %v172, %v182
      %v187 = vld [vmem:[%s2] sm:$0x3]
      %v189 = vlaneseq
      %v190 = vshrl.u32 %v189, 7
      %v191 = vsub.s32 0, %v190
      %v192 = vrot.slane %v187, %v191
      %v193 = vlaneseq
      %v194 = vshrl.u32 %v193, 7
      %v195 = vsub.s32 1, %v194
      %v196 = vrot.slane %v187, %v195
      %v199 = vadd.f32 %v185, %v192
      %v200 = vadd.f32 %v186, %v196
      %201 = vst [vmem:[%s170] sm:$0xff] %v199
      %202 = vst [vmem:[%s170 + $0x8] sm:$0xff] %v200
      %p203 = scmp.lt.s32.totalorder %s14, 1
      %s204 = scalar_select %p203, %s14, 1
      %s205 = smul.addr %s204, 2
      %s206 = smul.addr %s205, 8
      %s207 = scalar_lea.vmem %s3, %s206
      // Predicated region
      $region33: #{down_block_forward.3} parent=31 // pred_check
        %p208 = pneg %p100
      $region34: #{down_block_forward.3} parent=31 // pred_check_branch
        %210 = sbr.rel (%p208) target = $region36
      $region35: #{down_block_forward.3} parent=31 // pred_region
        _
      $region36: #{down_block_forward.3} parent=31 // pred_fallthru
        _
    $region32: #{down_block_forward.3} parent=5 // pred_fallthru
      _
    %p211 = scmp.le.s32.totalorder 2, %s9
    // Predicated region
    $region37: #{down_block_forward.3} parent=5 // pred_check
      %p212 = pneg %p211
    $region38: #{down_block_forward.3} parent=5 // pred_check_branch
      %214 = sbr.rel (%p212) target = $region40
    $region39: #{down_block_forward.3} parent=5 // pred_region
      %s215 = ssub.s32 %s9, 2
      // Predicated region
      $region41: #{down_block_forward.3} parent=39 // pred_check
        %p216 = pneg %p106
      $region42: #{down_block_forward.3} parent=39 // pred_check_branch
        %218 = sbr.rel (%p216) target = $region44
      $region43: #{down_block_forward.3} parent=39 // pred_region
        %p219 = scmp.lt.s32.totalorder %s15, 1
        %s220 = scalar_select %p219, %s15, 1
        %s221 = smul.addr %s220, 2
        %s222 = smul.addr %s221, 8
        %s223 = scalar_lea.vmem %s3, %s222
      $region44: #{down_block_forward.3} parent=39 // pred_fallthru
        _
    $region40: #{down_block_forward.3} parent=5 // pred_fallthru
      _
  $region6: #{down_block_forward.3} parent=0 // loop_footer
    %s13 = sadd.s32 1, %s9
  $region7: #{down_block_forward.3} parent=0 // loop_footer_branch
    %8 = sbr.rel target = $region3
  $region8: #{down_block_forward.3} parent=0 // loop_exit
    _

// kernel: down_block_forward.2
$region0: #{down_block_forward.2}
  #allocation0 [shape = 'u32[]', space=smem, size = 0x4, offset = 0x4, fixed_abs, tag = 'smem constant byte address 0x4 - core index']
  #allocation1 [shape = 'u32[144,128]{1,0:T(1,128)}', space=vmem, size = 0x12000, scoped, tag = 'internal scratch']
  #allocation2 [shape = 'f32[1,10,10,4]{3,2,1,0:T(8,128)}', space=vmem, size = 0x14000, scoped, tag = 'scratch operand']
  #allocation3 [shape = 'f32[1,10,10,32]{3,2,1,0:T(8,128)}', space=vmem, size = 0x14000, scoped, tag = 'scratch operand']
  #allocation4 [shape = 'bf16[64,36]{1,0:T(8,128)(2,1)}', space=vmem, size = 0x4000, scoped, tag = 'scratch operand']
  #allocation5 [shape = 'bf16[64,288]{1,0:T(8,128)(2,1)}', space=vmem, size = 0xc000, scoped, tag = 'scratch operand']
  %s0 = inlined_call_operand.vmem [shape: f32[2,8,8,4], index: 0, kind: input, shape index: {}]
  %s1 = inlined_call_operand.vmem [shape: bf16[36,32], index: 1, kind: input, shape index: {}]
  %s2 = inlined_call_operand.vmem [shape: f32[1,32], index: 2, kind: input, shape index: {}]
  %s3 = inlined_call_operand.vmem [shape: bf16[4,64], index: 3, kind: input, shape index: {}]
  %s4 = inlined_call_operand.vmem [shape: bf16[32,64], index: 4, kind: input, shape index: {}]
  %s5 = inlined_call_operand.vmem [shape: f32[1,32], index: 5, kind: input, shape index: {}]
  %s6 = inlined_call_operand.vmem [shape: bf16[288,32], index: 6, kind: input, shape index: {}]
  %s7 = inlined_call_operand.vmem [shape: f32[1,32], index: 7, kind: input, shape index: {}]
  %s8 = inlined_call_operand.vmem [shape: bf16[32,32], index: 8, kind: input, shape index: {}]
  %s9 = inlined_call_operand.vmem [shape: f32[1,32], index: 9, kind: input, shape index: {}]
  %s10 = inlined_call_operand.vmem [shape: bf16[288,32], index: 10, kind: input, shape index: {}]
  %s11 = inlined_call_operand.vmem [shape: f32[1,32], index: 11, kind: input, shape index: {}]
  %s12 = inlined_call_operand.vmem [shape: f32[16,256], index: 12, kind: output, shape index: {0}]
  %s13 = inlined_call_operand.vmem [shape: f32[2,2,32], index: 13, kind: output, shape index: {1}]
  %14 = xla_tuple %s12, %s13
  %s15 = sld [smem:[#allocation0]]
  $region89: #{down_block_forward.2} parent=0
    _
  %s17 = ssub.s32 1, %s15
  %s18 = scalar_select 0, %s17, %s15
  loop: start=0, step=1, limit=4
  $region2: #{down_block_forward.2} parent=0 // loop_pre_header
    _
  $region3: #{down_block_forward.2} parent=0 // loop_header
    %s20 = sphi 0, %s24
    %p21 = scmp.ge.s32.totalorder %s20, 4
    %s30 = sphi 0, %s32
    %s33 = sphi 0, %s30
    %s34 = sphi 0, %s33
    %s50 = sphi 0, %s34
    %s54 = sphi 0, %s54
    %s56 = sphi 0, %s54
    %s57 = sphi 0, %s56
    %s71 = sphi 0, %s57
    %s75 = sphi 0, %s75
    %s77 = sphi 0, %s75
    %s78 = sphi 0, %s77
    %s92 = sphi 0, %s78
    %s96 = sphi 0, %s96
    %s98 = sphi 0, %s96
    %s99 = sphi 0, %s98
    %s113 = sphi 0, %s99
    %s117 = sphi 0, %s117
    %s119 = sphi 0, %s117
    %s120 = sphi 0, %s119
    %s134 = sphi 0, %s120
    %s138 = sphi 0, %s138
    %s140 = sphi 0, %s138
    %s141 = sphi 0, %s140
    %s155 = sphi 0, %s141
    %s159 = sphi 0, %s159
    %s161 = sphi 0, %s159
    %s162 = sphi 0, %s161
    %s176 = sphi 0, %s162
    %s180 = sphi 0, %s180
    %s182 = sphi 0, %s180
    %s183 = sphi 0, %s182
    %s197 = sphi 0, %s183
    %s201 = sphi 0, %s201
    %s203 = sphi 0, %s201
    %s204 = sphi 0, %s203
    %s218 = sphi 0, %s204
    %s222 = sphi 0, %s222
    %s224 = sphi 0, %s222
    %s225 = sphi 0, %s224
    %s239 = sphi 0, %s225
    %s243 = sphi 0, %s243
    %s245 = sphi 0, %s243
    %s246 = sphi 0, %s245
    %s260 = sphi 0, %s246
    %s264 = sphi 0, %s264
    %s266 = sphi 0, %s264
    %s267 = sphi 0, %s266
    %s281 = sphi 0, %s267
    %s287 = sphi 0, %s289
    %s290 = sphi 0, %s287
    %s291 = sphi 0, %s290
    %s307 = sphi 0, %s291
    %s313 = sphi 0, %s315
    %s316 = sphi 0, %s313
    %s317 = sphi 0, %s316
    %s333 = sphi 0, %s317
  $region4: #{down_block_forward.2} parent=0 // loop_header_branch
    %23 = sbr.rel (%p21) target = $region8
  $region5: #{down_block_forward.2} parent=0 // loop_body
    %s25 = ssub.s32 %s20, 1
    %s26 = ssub.s32 %s20, 2
    %s27 = sadd.s32 %s20, 1
    %s28 = ssub.s32 %s20, %s27
    %p29 = scmp.eq.s32.totalorder %s28, 0
    %s31 = sadd.s32 %s30, 1
    %s32 = scalar_select %p29, %s30, %s31
    %p35 = pneg %p29
    %p36 = scmp.eq.s32.totalorder %s20, 1
    %p37 = por %p35, %p36
    %p38 = scmp.ne.s32.totalorder %s30, %s33
    %p39 = scmp.eq.s32.totalorder %s20, 0
    %p40 = por %p38, %p39
    %p41 = scmp.ne.s32.totalorder %s30, %s33
    %p42 = scmp.eq.s32.totalorder %s25, 1
    %p43 = por %p41, %p42
    %p44 = scmp.ne.s32.totalorder %s33, %s34
    %p45 = scmp.eq.s32.totalorder %s25, 0
    %p46 = por %p44, %p45
    %p47 = scmp.ne.s32.totalorder %s33, %s34
    %p48 = scmp.eq.s32.totalorder %s26, 1
    %p49 = por %p47, %p48
    %p51 = scmp.ne.s32.totalorder %s34, %s50
    %p52 = scmp.eq.s32.totalorder %s26, 0
    %p53 = por %p51, %p52
    %s55 = sadd.s32 %s54, 1
    %p58 = scmp.eq.s32.totalorder %s20, 1
    %p59 = scmp.ne.s32.totalorder %s54, %s56
    %p60 = scmp.eq.s32.totalorder %s20, 0
    %p61 = por %p59, %p60
    %p62 = scmp.ne.s32.totalorder %s54, %s56
    %p63 = scmp.eq.s32.totalorder %s25, 1
    %p64 = por %p62, %p63
    %p65 = scmp.ne.s32.totalorder %s56, %s57
    %p66 = scmp.eq.s32.totalorder %s25, 0
    %p67 = por %p65, %p66
    %p68 = scmp.ne.s32.totalorder %s56, %s57
    %p69 = scmp.eq.s32.totalorder %s26, 1
    %p70 = por %p68, %p69
    %p72 = scmp.ne.s32.totalorder %s57, %s71
    %p73 = scmp.eq.s32.totalorder %s26, 0
    %p74 = por %p72, %p73
    %s76 = sadd.s32 %s75, 1
    %p79 = scmp.eq.s32.totalorder %s20, 1
    %p80 = scmp.ne.s32.totalorder %s75, %s77
    %p81 = scmp.eq.s32.totalorder %s20, 0
    %p82 = por %p80, %p81
    %p83 = scmp.ne.s32.totalorder %s75, %s77
    %p84 = scmp.eq.s32.totalorder %s25, 1
    %p85 = por %p83, %p84
    %p86 = scmp.ne.s32.totalorder %s77, %s78
    %p87 = scmp.eq.s32.totalorder %s25, 0
    %p88 = por %p86, %p87
    %p89 = scmp.ne.s32.totalorder %s77, %s78
    %p90 = scmp.eq.s32.totalorder %s26, 1
    %p91 = por %p89, %p90
    %p93 = scmp.ne.s32.totalorder %s78, %s92
    %p94 = scmp.eq.s32.totalorder %s26, 0
    %p95 = por %p93, %p94
    %s97 = sadd.s32 %s96, 1
    %p100 = scmp.eq.s32.totalorder %s20, 1
    %p101 = scmp.ne.s32.totalorder %s96, %s98
    %p102 = scmp.eq.s32.totalorder %s20, 0
    %p103 = por %p101, %p102
    %p104 = scmp.ne.s32.totalorder %s96, %s98
    %p105 = scmp.eq.s32.totalorder %s25, 1
    %p106 = por %p104, %p105
    %p107 = scmp.ne.s32.totalorder %s98, %s99
    %p108 = scmp.eq.s32.totalorder %s25, 0
    %p109 = por %p107, %p108
    %p110 = scmp.ne.s32.totalorder %s98, %s99
    %p111 = scmp.eq.s32.totalorder %s26, 1
    %p112 = por %p110, %p111
    %p114 = scmp.ne.s32.totalorder %s99, %s113
    %p115 = scmp.eq.s32.totalorder %s26, 0
    %p116 = por %p114, %p115
    %s118 = sadd.s32 %s117, 1
    %p121 = scmp.eq.s32.totalorder %s20, 1
    %p122 = scmp.ne.s32.totalorder %s117, %s119
    %p123 = scmp.eq.s32.totalorder %s20, 0
    %p124 = por %p122, %p123
    %p125 = scmp.ne.s32.totalorder %s117, %s119
    %p126 = scmp.eq.s32.totalorder %s25, 1
    %p127 = por %p125, %p126
    %p128 = scmp.ne.s32.totalorder %s119, %s120
    %p129 = scmp.eq.s32.totalorder %s25, 0
    %p130 = por %p128, %p129
    %p131 = scmp.ne.s32.totalorder %s119, %s120
    %p132 = scmp.eq.s32.totalorder %s26, 1
    %p133 = por %p131, %p132
    %p135 = scmp.ne.s32.totalorder %s120, %s134
    %p136 = scmp.eq.s32.totalorder %s26, 0
    %p137 = por %p135, %p136
    %s139 = sadd.s32 %s138, 1
    %p142 = scmp.eq.s32.totalorder %s20, 1
    %p143 = scmp.ne.s32.totalorder %s138, %s140
    %p144 = scmp.eq.s32.totalorder %s20, 0
    %p145 = por %p143, %p144
    %p146 = scmp.ne.s32.totalorder %s138, %s140
    %p147 = scmp.eq.s32.totalorder %s25, 1
    %p148 = por %p146, %p147
    %p149 = scmp.ne.s32.totalorder %s140, %s141
    %p150 = scmp.eq.s32.totalorder %s25, 0
    %p151 = por %p149, %p150
    %p152 = scmp.ne.s32.totalorder %s140, %s141
    %p153 = scmp.eq.s32.totalorder %s26, 1
    %p154 = por %p152, %p153
    %p156 = scmp.ne.s32.totalorder %s141, %s155
    %p157 = scmp.eq.s32.totalorder %s26, 0
    %p158 = por %p156, %p157
    %s160 = sadd.s32 %s159, 1
    %p163 = scmp.eq.s32.totalorder %s20, 1
    %p164 = scmp.ne.s32.totalorder %s159, %s161
    %p165 = scmp.eq.s32.totalorder %s20, 0
    %p166 = por %p164, %p165
    %p167 = scmp.ne.s32.totalorder %s159, %s161
    %p168 = scmp.eq.s32.totalorder %s25, 1
    %p169 = por %p167, %p168
    %p170 = scmp.ne.s32.totalorder %s161, %s162
    %p171 = scmp.eq.s32.totalorder %s25, 0
    %p172 = por %p170, %p171
    %p173 = scmp.ne.s32.totalorder %s161, %s162
    %p174 = scmp.eq.s32.totalorder %s26, 1
    %p175 = por %p173, %p174
    %p177 = scmp.ne.s32.totalorder %s162, %s176
    %p178 = scmp.eq.s32.totalorder %s26, 0
    %p179 = por %p177, %p178
    %s181 = sadd.s32 %s180, 1
    %p184 = scmp.eq.s32.totalorder %s20, 1
    %p185 = scmp.ne.s32.totalorder %s180, %s182
    %p186 = scmp.eq.s32.totalorder %s20, 0
    %p187 = por %p185, %p186
    %p188 = scmp.ne.s32.totalorder %s180, %s182
    %p189 = scmp.eq.s32.totalorder %s25, 1
    %p190 = por %p188, %p189
    %p191 = scmp.ne.s32.totalorder %s182, %s183
    %p192 = scmp.eq.s32.totalorder %s25, 0
    %p193 = por %p191, %p192
    %p194 = scmp.ne.s32.totalorder %s182, %s183
    %p195 = scmp.eq.s32.totalorder %s26, 1
    %p196 = por %p194, %p195
    %p198 = scmp.ne.s32.totalorder %s183, %s197
    %p199 = scmp.eq.s32.totalorder %s26, 0
    %p200 = por %p198, %p199
    %s202 = sadd.s32 %s201, 1
    %p205 = scmp.eq.s32.totalorder %s20, 1
    %p206 = scmp.ne.s32.totalorder %s201, %s203
    %p207 = scmp.eq.s32.totalorder %s20, 0
    %p208 = por %p206, %p207
    %p209 = scmp.ne.s32.totalorder %s201, %s203
    %p210 = scmp.eq.s32.totalorder %s25, 1
    %p211 = por %p209, %p210
    %p212 = scmp.ne.s32.totalorder %s203, %s204
    %p213 = scmp.eq.s32.totalorder %s25, 0
    %p214 = por %p212, %p213
    %p215 = scmp.ne.s32.totalorder %s203, %s204
    %p216 = scmp.eq.s32.totalorder %s26, 1
    %p217 = por %p215, %p216
    %p219 = scmp.ne.s32.totalorder %s204, %s218
    %p220 = scmp.eq.s32.totalorder %s26, 0
    %p221 = por %p219, %p220
    %s223 = sadd.s32 %s222, 1
    %p226 = scmp.eq.s32.totalorder %s20, 1
    %p227 = scmp.ne.s32.totalorder %s222, %s224
    %p228 = scmp.eq.s32.totalorder %s20, 0
    %p229 = por %p227, %p228
    %p230 = scmp.ne.s32.totalorder %s222, %s224
    %p231 = scmp.eq.s32.totalorder %s25, 1
    %p232 = por %p230, %p231
    %p233 = scmp.ne.s32.totalorder %s224, %s225
    %p234 = scmp.eq.s32.totalorder %s25, 0
    %p235 = por %p233, %p234
    %p236 = scmp.ne.s32.totalorder %s224, %s225
    %p237 = scmp.eq.s32.totalorder %s26, 1
    %p238 = por %p236, %p237
    %p240 = scmp.ne.s32.totalorder %s225, %s239
    %p241 = scmp.eq.s32.totalorder %s26, 0
    %p242 = por %p240, %p241
    %s244 = sadd.s32 %s243, 1
    %p247 = scmp.eq.s32.totalorder %s20, 1
    %p248 = scmp.ne.s32.totalorder %s243, %s245
    %p249 = scmp.eq.s32.totalorder %s20, 0
    %p250 = por %p248, %p249
    %p251 = scmp.ne.s32.totalorder %s243, %s245
    %p252 = scmp.eq.s32.totalorder %s25, 1
    %p253 = por %p251, %p252
    %p254 = scmp.ne.s32.totalorder %s245, %s246
    %p255 = scmp.eq.s32.totalorder %s25, 0
    %p256 = por %p254, %p255
    %p257 = scmp.ne.s32.totalorder %s245, %s246
    %p258 = scmp.eq.s32.totalorder %s26, 1
    %p259 = por %p257, %p258
    %p261 = scmp.ne.s32.totalorder %s246, %s260
    %p262 = scmp.eq.s32.totalorder %s26, 0
    %p263 = por %p261, %p262
    %s265 = sadd.s32 %s264, 1
    %p268 = scmp.eq.s32.totalorder %s20, 1
    %p269 = scmp.ne.s32.totalorder %s264, %s266
    %p270 = scmp.eq.s32.totalorder %s20, 0
    %p271 = por %p269, %p270
    %p272 = scmp.ne.s32.totalorder %s264, %s266
    %p273 = scmp.eq.s32.totalorder %s25, 1
    %p274 = por %p272, %p273
    %p275 = scmp.ne.s32.totalorder %s266, %s267
    %p276 = scmp.eq.s32.totalorder %s25, 0
    %p277 = por %p275, %p276
    %p278 = scmp.ne.s32.totalorder %s266, %s267
    %p279 = scmp.eq.s32.totalorder %s26, 1
    %p280 = por %p278, %p279
    %p282 = scmp.ne.s32.totalorder %s267, %s281
    %p283 = scmp.eq.s32.totalorder %s26, 0
    %p284 = por %p282, %p283
    %s285 = ssub.s32 %s20, %s27
    %p286 = scmp.eq.s32.totalorder %s285, 0
    %s288 = sadd.s32 %s287, 1
    %s289 = scalar_select %p286, %s287, %s288
    %p292 = pneg %p286
    %p293 = scmp.eq.s32.totalorder %s20, 1
    %p294 = por %p292, %p293
    %p295 = scmp.ne.s32.totalorder %s287, %s290
    %p296 = scmp.eq.s32.totalorder %s20, 0
    %p297 = por %p295, %p296
    %p298 = scmp.ne.s32.totalorder %s287, %s290
    %p299 = scmp.eq.s32.totalorder %s25, 1
    %p300 = por %p298, %p299
    %p301 = scmp.ne.s32.totalorder %s290, %s291
    %p302 = scmp.eq.s32.totalorder %s25, 0
    %p303 = por %p301, %p302
    %p304 = scmp.ne.s32.totalorder %s290, %s291
    %p305 = scmp.eq.s32.totalorder %s26, 1
    %p306 = por %p304, %p305
    %p308 = scmp.ne.s32.totalorder %s291, %s307
    %p309 = scmp.eq.s32.totalorder %s26, 0
    %p310 = por %p308, %p309
    %s311 = ssub.s32 %s20, %s27
    %p312 = scmp.eq.s32.totalorder %s311, 0
    %s314 = sadd.s32 %s313, 1
    %s315 = scalar_select %p312, %s313, %s314
    %p318 = pneg %p312
    %p319 = scmp.eq.s32.totalorder %s20, 1
    %p320 = por %p318, %p319
    %p321 = scmp.ne.s32.totalorder %s313, %s316
    %p322 = scmp.eq.s32.totalorder %s20, 0
    %p323 = por %p321, %p322
    %p324 = scmp.ne.s32.totalorder %s313, %s316
    %p325 = scmp.eq.s32.totalorder %s25, 1
    %p326 = por %p324, %p325
    %p327 = scmp.ne.s32.totalorder %s316, %s317
    %p328 = scmp.eq.s32.totalorder %s25, 0
    %p329 = por %p327, %p328
    %p330 = scmp.ne.s32.totalorder %s316, %s317
    %p331 = scmp.eq.s32.totalorder %s26, 1
    %p332 = por %p330, %p331
    %p334 = scmp.ne.s32.totalorder %s317, %s333
    %p335 = scmp.eq.s32.totalorder %s26, 0
    %p336 = por %p334, %p335
    %p337 = scmp.le.s32.totalorder 1, %s20
    %p338 = scmp.lt.s32.totalorder %s20, 3
    %p339 = pnand %p337, %p338
    %p340 = pneg %p339
    // Predicated region
    $region9: #{down_block_forward.2} parent=5 // pred_check
      _
    $region10: #{down_block_forward.2} parent=5 // pred_check_branch
      %342 = sbr.rel (%p339) target = $region12
    $region11: #{down_block_forward.2} parent=5 // pred_region
      %s343 = ssub.s32 %s20, 1
      // Predicated region
      $region13: #{down_block_forward.2} parent=11 // pred_check
        %p344 = pneg %p67
      $region14: #{down_block_forward.2} parent=11 // pred_check_branch
        %346 = sbr.rel (%p344) target = $region16
      $region15: #{down_block_forward.2} parent=11 // pred_region
        _
      $region16: #{down_block_forward.2} parent=11 // pred_fallthru
        _
      // Predicated region
      $region17: #{down_block_forward.2} parent=11 // pred_check
        %p347 = pneg %p88
      $region18: #{down_block_forward.2} parent=11 // pred_check_branch
        %349 = sbr.rel (%p347) target = $region20
      $region19: #{down_block_forward.2} parent=11 // pred_region
        _
      $region20: #{down_block_forward.2} parent=11 // pred_fallthru
        _
      // Predicated region
      $region21: #{down_block_forward.2} parent=11 // pred_check
        %p350 = pneg %p109
      $region22: #{down_block_forward.2} parent=11 // pred_check_branch
        %352 = sbr.rel (%p350) target = $region24
      $region23: #{down_block_forward.2} parent=11 // pred_region
        _
      $region24: #{down_block_forward.2} parent=11 // pred_fallthru
        _
      // Predicated region
      $region25: #{down_block_forward.2} parent=11 // pred_check
        %p353 = pneg %p130
      $region26: #{down_block_forward.2} parent=11 // pred_check_branch
        %355 = sbr.rel (%p353) target = $region28
      $region27: #{down_block_forward.2} parent=11 // pred_region
        _
      $region28: #{down_block_forward.2} parent=11 // pred_fallthru
        _
      // Predicated region
      $region29: #{down_block_forward.2} parent=11 // pred_check
        %p356 = pneg %p151
      $region30: #{down_block_forward.2} parent=11 // pred_check_branch
        %358 = sbr.rel (%p356) target = $region32
      $region31: #{down_block_forward.2} parent=11 // pred_region
        _
      $region32: #{down_block_forward.2} parent=11 // pred_fallthru
        _
      // Predicated region
      $region33: #{down_block_forward.2} parent=11 // pred_check
        %p359 = pneg %p172
      $region34: #{down_block_forward.2} parent=11 // pred_check_branch
        %361 = sbr.rel (%p359) target = $region36
      $region35: #{down_block_forward.2} parent=11 // pred_region
        _
      $region36: #{down_block_forward.2} parent=11 // pred_fallthru
        _
      // Predicated region
      $region37: #{down_block_forward.2} parent=11 // pred_check
        %p362 = pneg %p193
      $region38: #{down_block_forward.2} parent=11 // pred_check_branch
        %364 = sbr.rel (%p362) target = $region40
      $region39: #{down_block_forward.2} parent=11 // pred_region
        _
      $region40: #{down_block_forward.2} parent=11 // pred_fallthru
        _
      // Predicated region
      $region41: #{down_block_forward.2} parent=11 // pred_check
        %p365 = pneg %p214
      $region42: #{down_block_forward.2} parent=11 // pred_check_branch
        %367 = sbr.rel (%p365) target = $region44
      $region43: #{down_block_forward.2} parent=11 // pred_region
        _
      $region44: #{down_block_forward.2} parent=11 // pred_fallthru
        _
      // Predicated region
      $region45: #{down_block_forward.2} parent=11 // pred_check
        %p368 = pneg %p235
      $region46: #{down_block_forward.2} parent=11 // pred_check_branch
        %370 = sbr.rel (%p368) target = $region48
      $region47: #{down_block_forward.2} parent=11 // pred_region
        _
      $region48: #{down_block_forward.2} parent=11 // pred_fallthru
        _
      // Predicated region
      $region49: #{down_block_forward.2} parent=11 // pred_check
        %p371 = pneg %p256
      $region50: #{down_block_forward.2} parent=11 // pred_check_branch
        %373 = sbr.rel (%p371) target = $region52
      $region51: #{down_block_forward.2} parent=11 // pred_region
        _
      $region52: #{down_block_forward.2} parent=11 // pred_fallthru
        _
      // Predicated region
      $region53: #{down_block_forward.2} parent=11 // pred_check
        %p374 = pneg %p277
      $region54: #{down_block_forward.2} parent=11 // pred_check_branch
        %376 = sbr.rel (%p374) target = $region56
      $region55: #{down_block_forward.2} parent=11 // pred_region
        _
      $region56: #{down_block_forward.2} parent=11 // pred_fallthru
        _
    $region12: #{down_block_forward.2} parent=5 // pred_fallthru
      _
    %p377 = scmp.lt.s32.totalorder %s20, 2
    // Predicated region
    $region57: #{down_block_forward.2} parent=5 // pred_check
      %p378 = pneg %p377
    $region58: #{down_block_forward.2} parent=5 // pred_check_branch
      %380 = sbr.rel (%p378) target = $region60
    $region59: #{down_block_forward.2} parent=5 // pred_region
      // Predicated region
      $region61: #{down_block_forward.2} parent=59 // pred_check
        %p381 = pneg %p40
      $region62: #{down_block_forward.2} parent=59 // pred_check_branch
        %383 = sbr.rel (%p381) target = $region64
      $region63: #{down_block_forward.2} parent=59 // pred_region
        %p384 = scmp.lt.s32.totalorder %s20, 1
        %s385 = scalar_select %p384, %s20, 1
        %s386 = smul.addr %s385, 8
        %s387 = smul.addr %s386, 8
        %s388 = scalar_lea.vmem %s0, %s387
      $region64: #{down_block_forward.2} parent=59 // pred_fallthru
        _
    $region60: #{down_block_forward.2} parent=5 // pred_fallthru
      _
    %p389 = scmp.le.s32.totalorder 1, %s20
    %p390 = scmp.lt.s32.totalorder %s20, 3
    %p391 = pnand %p389, %p390
    %p392 = pneg %p391
    // Predicated region
    $region65: #{down_block_forward.2} parent=5 // pred_check
      _
    $region66: #{down_block_forward.2} parent=5 // pred_check_branch
      %394 = sbr.rel (%p391) target = $region68
    $region67: #{down_block_forward.2} parent=5 // pred_region
      %s395 = ssub.s32 %s20, 1
      %p396 = scmp.lt.s32.totalorder %s25, 1
      %s397 = scalar_select %p396, %s25, 1
      %s398 = smul.addr %s397, 8
      %s399 = smul.addr %s398, 8
      %s400 = scalar_lea.vmem %s0, %s399
      %p401 = pneg %p46
      %p402 = pneg %p43
      %p403 = pneg %p67
      %p404 = pneg %p64
      %p405 = pneg %p88
      %p406 = pneg %p85
      %p407 = pneg %p109
      %p408 = pneg %p106
      %p409 = pneg %p130
      %p410 = pneg %p127
      %p411 = pneg %p151
      %p412 = pneg %p148
      %p413 = pneg %p172
      %p414 = pneg %p169
      %p415 = pneg %p193
      %p416 = pneg %p190
      %p417 = pneg %p214
      %p418 = pneg %p211
      %p419 = pneg %p235
      %p420 = pneg %p232
      %p421 = pneg %p256
      %p422 = pneg %p253
      %p423 = pneg %p277
      %p424 = pneg %p274
      %p425 = pneg %p303
      %p426 = pneg %p300
      %p427 = scmp.lt.s32.totalorder %s25, 1
      %s428 = scalar_select %p427, %s25, 1
      %s429 = smul.addr %s428, 2
      %s430 = smul.addr %s429, 8
      %s431 = scalar_lea.vmem %s12, %s430
      %p432 = pneg %p329
      %p433 = pneg %p326
      %p434 = scmp.lt.s32.totalorder %s25, 1
      %s435 = scalar_select %p434, %s25, 1
      %s436 = smul.addr %s435, 2
      %s437 = scalar_lea.vmem %s13, %s436
      %p438 = scmp.lt.s32.totalorder %s25, 1
      %s439 = scalar_select %p438, %s25, 1
      %s440 = smul.addr %s439, 8
      %s441 = smul.addr %s440, 8
      %s442 = scalar_lea.vmem %s0, %s441
      %p443 = scmp.lt.s32.totalorder %s25, 1
      %s444 = scalar_select %p443, %s25, 1
      %s445 = smul.addr %s444, 2
      %s446 = smul.addr %s445, 8
      %s447 = scalar_lea.vmem %s12, %s446
      %p448 = scmp.lt.s32.totalorder %s25, 1
      %s449 = scalar_select %p448, %s25, 1
      %s450 = smul.addr %s449, 2
      %s451 = scalar_lea.vmem %s13, %s450
      %vm453 = vcmask 31744
      %454 = vst.msk [vmem:[#allocation2] sm:$0xff] %vm453, 0.0
      %vm455 = vcmask 25600
      %456 = vst.msk [vmem:[#allocation2 + $0x8] sm:$0x3] %vm455, 0.0
      %s457 = scalar_lea.vmem [#allocation2], 144
      %458 = vst.msk [vmem:[%s457] sm:$0xff] %vm453, 0.0
      %459 = vst.msk [vmem:[%s457 + $0x8] sm:$0x3] %vm455, 0.0
      %vm460 = vcmask 24576
      %461 = vst.msk [vmem:[#allocation2] sm:$0x1] %vm460, 0.0
      %462 = vst.msk [vmem:[#allocation2 + $0x10] sm:$0x1] %vm460, 0.0
      %463 = vst.msk [vmem:[#allocation2 + $0x20] sm:$0x1] %vm460, 0.0
      %464 = vst.msk [vmem:[#allocation2 + $0x30] sm:$0x1] %vm460, 0.0
      %465 = vst.msk [vmem:[#allocation2 + $0x40] sm:$0x1] %vm460, 0.0
      %466 = vst.msk [vmem:[#allocation2 + $0x50] sm:$0x1] %vm460, 0.0
      %467 = vst.msk [vmem:[#allocation2 + $0x60] sm:$0x1] %vm460, 0.0
      %468 = vst.msk [vmem:[#allocation2 + $0x70] sm:$0x1] %vm460, 0.0
      %469 = vst.msk [vmem:[#allocation2 + $0x80] sm:$0x1] %vm460, 0.0
      %470 = vst.msk [vmem:[#allocation2 + $0x90] sm:$0x1] %vm460, 0.0
      %471 = vst.msk [vmem:[#allocation2 + $0x9] sm:$0x1] %vm460, 0.0
      %472 = vst.msk [vmem:[#allocation2 + $0x19] sm:$0x1] %vm460, 0.0
      %473 = vst.msk [vmem:[#allocation2 + $0x29] sm:$0x1] %vm460, 0.0
      %474 = vst.msk [vmem:[#allocation2 + $0x39] sm:$0x1] %vm460, 0.0
      %475 = vst.msk [vmem:[#allocation2 + $0x49] sm:$0x1] %vm460, 0.0
      %476 = vst.msk [vmem:[#allocation2 + $0x59] sm:$0x1] %vm460, 0.0
      %477 = vst.msk [vmem:[#allocation2 + $0x69] sm:$0x1] %vm460, 0.0
      %478 = vst.msk [vmem:[#allocation2 + $0x79] sm:$0x1] %vm460, 0.0
      %479 = vst.msk [vmem:[#allocation2 + $0x89] sm:$0x1] %vm460, 0.0
      %480 = vst.msk [vmem:[#allocation2 + $0x99] sm:$0x1] %vm460, 0.0
      %vm481 = vcmask 261120
      %482 = vst.msk [vmem:[#allocation3] sm:$0xff] %vm481, 0.0
      %vm483 = vcmask 254976
      %484 = vst.msk [vmem:[#allocation3 + $0x8] sm:$0x3] %vm483, 0.0
      %s485 = scalar_lea.vmem [#allocation3], 144
      %486 = vst.msk [vmem:[%s485] sm:$0xff] %vm481, 0.0
      %487 = vst.msk [vmem:[%s485 + $0x8] sm:$0x3] %vm483, 0.0
      %vm488 = vcmask 253952
      %489 = vst.msk [vmem:[#allocation3] sm:$0x1] %vm488, 0.0
      %490 = vst.msk [vmem:[#allocation3 + $0x10] sm:$0x1] %vm488, 0.0
      %491 = vst.msk [vmem:[#allocation3 + $0x20] sm:$0x1] %vm488, 0.0
      %492 = vst.msk [vmem:[#allocation3 + $0x30] sm:$0x1] %vm488, 0.0
      %493 = vst.msk [vmem:[#allocation3 + $0x40] sm:$0x1] %vm488, 0.0
      %494 = vst.msk [vmem:[#allocation3 + $0x50] sm:$0x1] %vm488, 0.0
      %495 = vst.msk [vmem:[#allocation3 + $0x60] sm:$0x1] %vm488, 0.0
      %496 = vst.msk [vmem:[#allocation3 + $0x70] sm:$0x1] %vm488, 0.0
      %497 = vst.msk [vmem:[#allocation3 + $0x80] sm:$0x1] %vm488, 0.0
      %498 = vst.msk [vmem:[#allocation3 + $0x90] sm:$0x1] %vm488, 0.0
      %499 = vst.msk [vmem:[#allocation3 + $0x9] sm:$0x1] %vm488, 0.0
      %500 = vst.msk [vmem:[#allocation3 + $0x19] sm:$0x1] %vm488, 0.0
      %501 = vst.msk [vmem:[#allocation3 + $0x29] sm:$0x1] %vm488, 0.0
      %502 = vst.msk [vmem:[#allocation3 + $0x39] sm:$0x1] %vm488, 0.0
      %503 = vst.msk [vmem:[#allocation3 + $0x49] sm:$0x1] %vm488, 0.0
      %504 = vst.msk [vmem:[#allocation3 + $0x59] sm:$0x1] %vm488, 0.0
      %505 = vst.msk [vmem:[#allocation3 + $0x69] sm:$0x1] %vm488, 0.0
      %506 = vst.msk [vmem:[#allocation3 + $0x79] sm:$0x1] %vm488, 0.0
      %507 = vst.msk [vmem:[#allocation3 + $0x89] sm:$0x1] %vm488, 0.0
      %508 = vst.msk [vmem:[#allocation3 + $0x99] sm:$0x1] %vm488, 0.0
      %v509 = vld [vmem:[%s442] sm:$0xff]
      %v510 = vld [vmem:[%s442 + $0x8] sm:$0xff]
      %v511 = vld [vmem:[%s442 + $0x10] sm:$0xff]
      %v512 = vld [vmem:[%s442 + $0x18] sm:$0xff]
      %v513 = vld [vmem:[%s442 + $0x20] sm:$0xff]
      %v514 = vld [vmem:[%s442 + $0x28] sm:$0xff]
      %v515 = vld [vmem:[%s442 + $0x30] sm:$0xff]
      %v516 = vld [vmem:[%s442 + $0x38] sm:$0xff]
      %s517 = scalar_lea.vmem [#allocation2], 16
      %518 = vst.msk [vmem:[%s517 + $0x1] sm:$0xff] %vm453, %v509
      %519 = vst.msk [vmem:[%s517 + $0x11] sm:$0xff] %vm453, %v510
      %520 = vst.msk [vmem:[%s517 + $0x21] sm:$0xff] %vm453, %v511
      %521 = vst.msk [vmem:[%s517 + $0x31] sm:$0xff] %vm453, %v512
      %522 = vst.msk [vmem:[%s517 + $0x41] sm:$0xff] %vm453, %v513
      %523 = vst.msk [vmem:[%s517 + $0x51] sm:$0xff] %vm453, %v514
      %524 = vst.msk [vmem:[%s517 + $0x61] sm:$0xff] %vm453, %v515
      %525 = vst.msk [vmem:[%s517 + $0x71] sm:$0xff] %vm453, %v516
      %v526 = vld [vmem:[#allocation2] sm:$0xff]
      %v527 = vld [vmem:[#allocation2 + $0x10] sm:$0xff]
      %v528 = vld [vmem:[#allocation2 + $0x20] sm:$0xff]
      %v529 = vld [vmem:[#allocation2 + $0x30] sm:$0xff]
      %v530 = vld [vmem:[#allocation2 + $0x40] sm:$0xff]
      %v531 = vld [vmem:[#allocation2 + $0x50] sm:$0xff]
      %v532 = vld [vmem:[#allocation2 + $0x60] sm:$0xff]
      %v533 = vld [vmem:[#allocation2 + $0x70] sm:$0xff]
      %v534 = vpack.c.bf16 %v527, %v526
      %v535 = vpack.c.bf16 %v529, %v528
      %v536 = vpack.c.bf16 %v531, %v530
      %v537 = vpack.c.bf16 %v533, %v532
      %v542 = vunpack.c.l.b16 %v534
      %v543 = vunpack.c.h.b16 %v534
      %v544 = vunpack.c.l.b16 %v535
      %v545 = vunpack.c.h.b16 %v535
      %v546 = vunpack.c.l.b16 %v536
      %v547 = vunpack.c.h.b16 %v536
      %v548 = vunpack.c.l.b16 %v537
      %v549 = vunpack.c.h.b16 %v537
      %v550 = vpack.c.b16 %v542, %v542
      %v551 = vpack.c.b16 %v543, %v543
      %v552 = vpack.c.b16 %v544, %v544
      %v553 = vpack.c.b16 %v545, %v545
      %v554 = vpack.c.b16 %v546, %v546
      %v555 = vpack.c.b16 %v547, %v547
      %v556 = vpack.c.b16 %v548, %v548
      %v557 = vpack.c.b16 %v549, %v549
      %vm566 = vcmask 27648
      %567 = vst.msk [vmem:[#allocation4] sm:$0xf] %vm566, %v550
      %568 = vst.msk [vmem:[#allocation4 + $0x4] sm:$0xf] %vm566, %v551
      %569 = vst.msk [vmem:[#allocation4 + $0x8] sm:$0xf] %vm566, %v552
      %570 = vst.msk [vmem:[#allocation4 + $0xc] sm:$0xf] %vm566, %v553
      %571 = vst.msk [vmem:[#allocation4 + $0x10] sm:$0xf] %vm566, %v554
      %572 = vst.msk [vmem:[#allocation4 + $0x14] sm:$0xf] %vm566, %v555
      %573 = vst.msk [vmem:[#allocation4 + $0x18] sm:$0xf] %vm566, %v556
      %574 = vst.msk [vmem:[#allocation4 + $0x1c] sm:$0xf] %vm566, %v557
      %v575 = vld [vmem:[#allocation2 + $0x1] sm:$0xff]
      %v576 = vld [vmem:[#allocation2 + $0x11] sm:$0xff]
      %v577 = vld [vmem:[#allocation2 + $0x21] sm:$0xff]
      %v578 = vld [vmem:[#allocation2 + $0x31] sm:$0xff]
      %v579 = vld [vmem:[#allocation2 + $0x41] sm:$0xff]
      %v580 = vld [vmem:[#allocation2 + $0x51] sm:$0xff]
      %v581 = vld [vmem:[#allocation2 + $0x61] sm:$0xff]
      %v582 = vld [vmem:[#allocation2 + $0x71] sm:$0xff]
      %v583 = vpack.c.bf16 %v576, %v575
      %v584 = vpack.c.bf16 %v578, %v577
      %v585 = vpack.c.bf16 %v580, %v579
      %v586 = vpack.c.bf16 %v582, %v581
      %v591 = vunpack.c.l.b16 %v583
      %v592 = vunpack.c.h.b16 %v583
      %v593 = vunpack.c.l.b16 %v584
      %v594 = vunpack.c.h.b16 %v584
      %v595 = vunpack.c.l.b16 %v585
      %v596 = vunpack.c.h.b16 %v585
      %v597 = vunpack.c.l.b16 %v586
      %v598 = vunpack.c.h.b16 %v586
      %v599 = vpack.c.b16 %v591, %v591
      %v600 = vpack.c.b16 %v592, %v592
      %v601 = vpack.c.b16 %v593, %v593
      %v602 = vpack.c.b16 %v594, %v594
      %v603 = vpack.c.b16 %v595, %v595
      %v604 = vpack.c.b16 %v596, %v596
      %v605 = vpack.c.b16 %v597, %v597
      %v606 = vpack.c.b16 %v598, %v598
      %607 = vrot.lane.b32.xlu0 %v599, 4
      %v608 = vpop.permute.xlu0 %607
      %609 = vrot.lane.b32.xlu0 %v600, 4
      %v610 = vpop.permute.xlu0 %609
      %611 = vrot.lane.b32.xlu0 %v601, 4
      %v612 = vpop.permute.xlu0 %611
      %613 = vrot.lane.b32.xlu0 %v602, 4
      %v614 = vpop.permute.xlu0 %613
      %615 = vrot.lane.b32.xlu0 %v603, 4
      %v616 = vpop.permute.xlu0 %615
      %617 = vrot.lane.b32.xlu0 %v604, 4
      %v618 = vpop.permute.xlu0 %617
      %619 = vrot.lane.b32.xlu0 %v605, 4
      %v620 = vpop.permute.xlu0 %619
      %621 = vrot.lane.b32.xlu0 %v606, 4
      %v622 = vpop.permute.xlu0 %621
      %vm631 = vcmask 60448
      %632 = vst.msk [vmem:[#allocation4] sm:$0xf] %vm631, %v608
      %633 = vst.msk [vmem:[#allocation4 + $0x4] sm:$0xf] %vm631, %v610
      %634 = vst.msk [vmem:[#allocation4 + $0x8] sm:$0xf] %vm631, %v612
      %635 = vst.msk [vmem:[#allocation4 + $0xc] sm:$0xf] %vm631, %v614
      %636 = vst.msk [vmem:[#allocation4 + $0x10] sm:$0xf] %vm631, %v616
      %637 = vst.msk [vmem:[#allocation4 + $0x14] sm:$0xf] %vm631, %v618
      %638 = vst.msk [vmem:[#allocation4 + $0x18] sm:$0xf] %vm631, %v620
      %639 = vst.msk [vmem:[#allocation4 + $0x1c] sm:$0xf] %vm631, %v622
      %v640 = vld [vmem:[#allocation2 + $0x2] sm:$0xff]
      %v641 = vld [vmem:[#allocation2 + $0x12] sm:$0xff]
      %v642 = vld [vmem:[#allocation2 + $0x22] sm:$0xff]
      %v643 = vld [vmem:[#allocation2 + $0x32] sm:$0xff]
      %v644 = vld [vmem:[#allocation2 + $0x42] sm:$0xff]
      %v645 = vld [vmem:[#allocation2 + $0x52] sm:$0xff]
      %v646 = vld [vmem:[#allocation2 + $0x62] sm:$0xff]
      %v647 = vld [vmem:[#allocation2 + $0x72] sm:$0xff]
      %v648 = vpack.c.bf16 %v641, %v640
      %v649 = vpack.c.bf16 %v643, %v642
      %v650 = vpack.c.bf16 %v645, %v644
      %v651 = vpack.c.bf16 %v647, %v646
      %v656 = vunpack.c.l.b16 %v648
      %v657 = vunpack.c.h.b16 %v648
      %v658 = vunpack.c.l.b16 %v649
      %v659 = vunpack.c.h.b16 %v649
      %v660 = vunpack.c.l.b16 %v650
      %v661 = vunpack.c.h.b16 %v650
      %v662 = vunpack.c.l.b16 %v651
      %v663 = vunpack.c.h.b16 %v651
      %v664 = vpack.c.b16 %v656, %v656
      %v665 = vpack.c.b16 %v657, %v657
      %v666 = vpack.c.b16 %v658, %v658
      %v667 = vpack.c.b16 %v659, %v659
      %v668 = vpack.c.b16 %v660, %v660
      %v669 = vpack.c.b16 %v661, %v661
      %v670 = vpack.c.b16 %v662, %v662
      %v671 = vpack.c.b16 %v663, %v663
      %672 = vrot.lane.b32.xlu0 %v664, 8
      %v673 = vpop.permute.xlu0 %672
      %674 = vrot.lane.b32.xlu0 %v665, 8
      %v675 = vpop.permute.xlu0 %674
      %676 = vrot.lane.b32.xlu0 %v666, 8
      %v677 = vpop.permute.xlu0 %676
      %678 = vrot.lane.b32.xlu0 %v667, 8
      %v679 = vpop.permute.xlu0 %678
      %680 = vrot.lane.b32.xlu0 %v668, 8
      %v681 = vpop.permute.xlu0 %680
      %682 = vrot.lane.b32.xlu0 %v669, 8
      %v683 = vpop.permute.xlu0 %682
      %684 = vrot.lane.b32.xlu0 %v670, 8
      %v685 = vpop.permute.xlu0 %684
      %686 = vrot.lane.b32.xlu0 %v671, 8
      %v687 = vpop.permute.xlu0 %686
      %vm696 = vcmask 93248
      %697 = vst.msk [vmem:[#allocation4] sm:$0xf] %vm696, %v673
      %698 = vst.msk [vmem:[#allocation4 + $0x4] sm:$0xf] %vm696, %v675
      %699 = vst.msk [vmem:[#allocation4 + $0x8] sm:$0xf] %vm696, %v677
      %700 = vst.msk [vmem:[#allocation4 + $0xc] sm:$0xf] %vm696, %v679
      %701 = vst.msk [vmem:[#allocation4 + $0x10] sm:$0xf] %vm696, %v681
      %702 = vst.msk [vmem:[#allocation4 + $0x14] sm:$0xf] %vm696, %v683
      %703 = vst.msk [vmem:[#allocation4 + $0x18] sm:$0xf] %vm696, %v685
      %704 = vst.msk [vmem:[#allocation4 + $0x1c] sm:$0xf] %vm696, %v687
      %v705 = vld [vmem:[%s517] sm:$0xff]
      %v706 = vld [vmem:[%s517 + $0x10] sm:$0xff]
      %v707 = vld [vmem:[%s517 + $0x20] sm:$0xff]
      %v708 = vld [vmem:[%s517 + $0x30] sm:$0xff]
      %v709 = vld [vmem:[%s517 + $0x40] sm:$0xff]
      %v710 = vld [vmem:[%s517 + $0x50] sm:$0xff]
      %v711 = vld [vmem:[%s517 + $0x60] sm:$0xff]
      %v712 = vld [vmem:[%s517 + $0x70] sm:$0xff]
      %v713 = vpack.c.bf16 %v706, %v705
      %v714 = vpack.c.bf16 %v708, %v707
      %v715 = vpack.c.bf16 %v710, %v709
      %v716 = vpack.c.bf16 %v712, %v711
      %v721 = vunpack.c.l.b16 %v713
      %v722 = vunpack.c.h.b16 %v713
      %v723 = vunpack.c.l.b16 %v714
      %v724 = vunpack.c.h.b16 %v714
      %v725 = vunpack.c.l.b16 %v715
      %v726 = vunpack.c.h.b16 %v715
      %v727 = vunpack.c.l.b16 %v716
      %v728 = vunpack.c.h.b16 %v716
      %v729 = vpack.c.b16 %v721, %v721
      %v730 = vpack.c.b16 %v722, %v722
      %v731 = vpack.c.b16 %v723, %v723
      %v732 = vpack.c.b16 %v724, %v724
      %v733 = vpack.c.b16 %v725, %v725
      %v734 = vpack.c.b16 %v726, %v726
      %v735 = vpack.c.b16 %v727, %v727
      %v736 = vpack.c.b16 %v728, %v728
      %737 = vrot.lane.b32.xlu0 %v729, 12
      %v738 = vpop.permute.xlu0 %737
      %739 = vrot.lane.b32.xlu0 %v730, 12
      %v740 = vpop.permute.xlu0 %739
      %741 = vrot.lane.b32.xlu0 %v731, 12
      %v742 = vpop.permute.xlu0 %741
      %743 = vrot.lane.b32.xlu0 %v732, 12
      %v744 = vpop.permute.xlu0 %743
      %745 = vrot.lane.b32.xlu0 %v733, 12
      %v746 = vpop.permute.xlu0 %745
      %747 = vrot.lane.b32.xlu0 %v734, 12
      %v748 = vpop.permute.xlu0 %747
      %749 = vrot.lane.b32.xlu0 %v735, 12
      %v750 = vpop.permute.xlu0 %749
      %751 = vrot.lane.b32.xlu0 %v736, 12
      %v752 = vpop.permute.xlu0 %751
      %vm761 = vcmask 126048
      %762 = vst.msk [vmem:[#allocation4] sm:$0xf] %vm761, %v738
      %763 = vst.msk [vmem:[#allocation4 + $0x4] sm:$0xf] %vm761, %v740
      %764 = vst.msk [vmem:[#allocation4 + $0x8] sm:$0xf] %vm761, %v742
      %765 = vst.msk [vmem:[#allocation4 + $0xc] sm:$0xf] %vm761, %v744
      %766 = vst.msk [vmem:[#allocation4 + $0x10] sm:$0xf] %vm761, %v746
      %767 = vst.msk [vmem:[#allocation4 + $0x14] sm:$0xf] %vm761, %v748
      %768 = vst.msk [vmem:[#allocation4 + $0x18] sm:$0xf] %vm761, %v750
      %769 = vst.msk [vmem:[#allocation4 + $0x1c] sm:$0xf] %vm761, %v752
      %v770 = vld [vmem:[%s517 + $0x1] sm:$0xff]
      %v771 = vld [vmem:[%s517 + $0x11] sm:$0xff]
      %v772 = vld [vmem:[%s517 + $0x21] sm:$0xff]
      %v773 = vld [vmem:[%s517 + $0x31] sm:$0xff]
      %v774 = vld [vmem:[%s517 + $0x41] sm:$0xff]
      %v775 = vld [vmem:[%s517 + $0x51] sm:$0xff]
      %v776 = vld [vmem:[%s517 + $0x61] sm:$0xff]
      %v777 = vld [vmem:[%s517 + $0x71] sm:$0xff]
      %v778 = vpack.c.bf16 %v771, %v770
      %v779 = vpack.c.bf16 %v773, %v772
      %v780 = vpack.c.bf16 %v775, %v774
      %v781 = vpack.c.bf16 %v777, %v776
      %v786 = vunpack.c.l.b16 %v778
      %v787 = vunpack.c.h.b16 %v778
      %v788 = vunpack.c.l.b16 %v779
      %v789 = vunpack.c.h.b16 %v779
      %v790 = vunpack.c.l.b16 %v780
      %v791 = vunpack.c.h.b16 %v780
      %v792 = vunpack.c.l.b16 %v781
      %v793 = vunpack.c.h.b16 %v781
      %v794 = vpack.c.b16 %v786, %v786
      %v795 = vpack.c.b16 %v787, %v787
      %v796 = vpack.c.b16 %v788, %v788
      %v797 = vpack.c.b16 %v789, %v789
      %v798 = vpack.c.b16 %v790, %v790
      %v799 = vpack.c.b16 %v791, %v791
      %v800 = vpack.c.b16 %v792, %v792
      %v801 = vpack.c.b16 %v793, %v793
      %802 = vrot.lane.b32.xlu0 %v794, 16
      %v803 = vpop.permute.xlu0 %802
      %804 = vrot.lane.b32.xlu0 %v795, 16
      %v805 = vpop.permute.xlu0 %804
      %806 = vrot.lane.b32.xlu0 %v796, 16
      %v807 = vpop.permute.xlu0 %806
      %808 = vrot.lane.b32.xlu0 %v797, 16
      %v809 = vpop.permute.xlu0 %808
      %810 = vrot.lane.b32.xlu0 %v798, 16
      %v811 = vpop.permute.xlu0 %810
      %812 = vrot.lane.b32.xlu0 %v799, 16
      %v813 = vpop.permute.xlu0 %812
      %814 = vrot.lane.b32.xlu0 %v800, 16
      %v815 = vpop.permute.xlu0 %814
      %816 = vrot.lane.b32.xlu0 %v801, 16
      %v817 = vpop.permute.xlu0 %816
      %vm826 = vcmask 158848
      %827 = vst.msk [vmem:[#allocation4] sm:$0xf] %vm826, %v803
      %828 = vst.msk [vmem:[#allocation4 + $0x4] sm:$0xf] %vm826, %v805
      %829 = vst.msk [vmem:[#allocation4 + $0x8] sm:$0xf] %vm826, %v807
      %830 = vst.msk [vmem:[#allocation4 + $0xc] sm:$0xf] %vm826, %v809
      %831 = vst.msk [vmem:[#allocation4 + $0x10] sm:$0xf] %vm826, %v811
      %832 = vst.msk [vmem:[#allocation4 + $0x14] sm:$0xf] %vm826, %v813
      %833 = vst.msk [vmem:[#allocation4 + $0x18] sm:$0xf] %vm826, %v815
      %834 = vst.msk [vmem:[#allocation4 + $0x1c] sm:$0xf] %vm826, %v817
      %v835 = vld [vmem:[%s517 + $0x2] sm:$0xff]
      %v836 = vld [vmem:[%s517 + $0x12] sm:$0xff]
      %v837 = vld [vmem:[%s517 + $0x22] sm:$0xff]
      %v838 = vld [vmem:[%s517 + $0x32] sm:$0xff]
      %v839 = vld [vmem:[%s517 + $0x42] sm:$0xff]
      %v840 = vld [vmem:[%s517 + $0x52] sm:$0xff]
      %v841 = vld [vmem:[%s517 + $0x62] sm:$0xff]
      %v842 = vld [vmem:[%s517 + $0x72] sm:$0xff]
      %v843 = vpack.c.bf16 %v836, %v835
      %v844 = vpack.c.bf16 %v838, %v837
      %v845 = vpack.c.bf16 %v840, %v839
      %v846 = vpack.c.bf16 %v842, %v841
      %v851 = vunpack.c.l.b16 %v843
      %v852 = vunpack.c.h.b16 %v843
      %v853 = vunpack.c.l.b16 %v844
      %v854 = vunpack.c.h.b16 %v844
      %v855 = vunpack.c.l.b16 %v845
      %v856 = vunpack.c.h.b16 %v845
      %v857 = vunpack.c.l.b16 %v846
      %v858 = vunpack.c.h.b16 %v846
      %v859 = vpack.c.b16 %v851, %v851
      %v860 = vpack.c.b16 %v852, %v852
      %v861 = vpack.c.b16 %v853, %v853
      %v862 = vpack.c.b16 %v854, %v854
      %v863 = vpack.c.b16 %v855, %v855
      %v864 = vpack.c.b16 %v856, %v856
      %v865 = vpack.c.b16 %v857, %v857
      %v866 = vpack.c.b16 %v858, %v858
      %867 = vrot.lane.b32.xlu0 %v859, 20
      %v868 = vpop.permute.xlu0 %867
      %869 = vrot.lane.b32.xlu0 %v860, 20
      %v870 = vpop.permute.xlu0 %869
      %871 = vrot.lane.b32.xlu0 %v861, 20
      %v872 = vpop.permute.xlu0 %871
      %873 = vrot.lane.b32.xlu0 %v862, 20
      %v874 = vpop.permute.xlu0 %873
      %875 = vrot.lane.b32.xlu0 %v863, 20
      %v876 = vpop.permute.xlu0 %875
      %877 = vrot.lane.b32.xlu0 %v864, 20
      %v878 = vpop.permute.xlu0 %877
      %879 = vrot.lane.b32.xlu0 %v865, 20
      %v880 = vpop.permute.xlu0 %879
      %881 = vrot.lane.b32.xlu0 %v866, 20
      %v882 = vpop.permute.xlu0 %881
      %vm891 = vcmask 191648
      %892 = vst.msk [vmem:[#allocation4] sm:$0xf] %vm891, %v868
      %893 = vst.msk [vmem:[#allocation4 + $0x4] sm:$0xf] %vm891, %v870
      %894 = vst.msk [vmem:[#allocation4 + $0x8] sm:$0xf] %vm891, %v872
      %895 = vst.msk [vmem:[#allocation4 + $0xc] sm:$0xf] %vm891, %v874
      %896 = vst.msk [vmem:[#allocation4 + $0x10] sm:$0xf] %vm891, %v876
      %897 = vst.msk [vmem:[#allocation4 + $0x14] sm:$0xf] %vm891, %v878
      %898 = vst.msk [vmem:[#allocation4 + $0x18] sm:$0xf] %vm891, %v880
      %899 = vst.msk [vmem:[#allocation4 + $0x1c] sm:$0xf] %vm891, %v882
      %s900 = scalar_lea.vmem [#allocation2], 32
      %v901 = vld [vmem:[%s900] sm:$0xff]
      %v902 = vld [vmem:[%s900 + $0x10] sm:$0xff]
      %v903 = vld [vmem:[%s900 + $0x20] sm:$0xff]
      %v904 = vld [vmem:[%s900 + $0x30] sm:$0xff]
      %v905 = vld [vmem:[%s900 + $0x40] sm:$0xff]
      %v906 = vld [vmem:[%s900 + $0x50] sm:$0xff]
      %v907 = vld [vmem:[%s900 + $0x60] sm:$0xff]
      %v908 = vld [vmem:[%s900 + $0x70] sm:$0xff]
      %v909 = vpack.c.bf16 %v902, %v901
      %v910 = vpack.c.bf16 %v904, %v903
      %v911 = vpack.c.bf16 %v906, %v905
      %v912 = vpack.c.bf16 %v908, %v907
      %v917 = vunpack.c.l.b16 %v909
      %v918 = vunpack.c.h.b16 %v909
      %v919 = vunpack.c.l.b16 %v910
      %v920 = vunpack.c.h.b16 %v910
      %v921 = vunpack.c.l.b16 %v911
      %v922 = vunpack.c.h.b16 %v911
      %v923 = vunpack.c.l.b16 %v912
      %v924 = vunpack.c.h.b16 %v912
      %v925 = vpack.c.b16 %v917, %v917
      %v926 = vpack.c.b16 %v918, %v918
      %v927 = vpack.c.b16 %v919, %v919
      %v928 = vpack.c.b16 %v920, %v920
      %v929 = vpack.c.b16 %v921, %v921
      %v930 = vpack.c.b16 %v922, %v922
      %v931 = vpack.c.b16 %v923, %v923
      %v932 = vpack.c.b16 %v924, %v924
      %933 = vrot.lane.b32.xlu0 %v925, 24
      %v934 = vpop.permute.xlu0 %933
      %935 = vrot.lane.b32.xlu0 %v926, 24
      %v936 = vpop.permute.xlu0 %935
      %937 = vrot.lane.b32.xlu0 %v927, 24
      %v938 = vpop.permute.xlu0 %937
      %939 = vrot.lane.b32.xlu0 %v928, 24
      %v940 = vpop.permute.xlu0 %939
      %941 = vrot.lane.b32.xlu0 %v929, 24
      %v942 = vpop.permute.xlu0 %941
      %943 = vrot.lane.b32.xlu0 %v930, 24
      %v944 = vpop.permute.xlu0 %943
      %945 = vrot.lane.b32.xlu0 %v931, 24
      %v946 = vpop.permute.xlu0 %945
      %947 = vrot.lane.b32.xlu0 %v932, 24
      %v948 = vpop.permute.xlu0 %947
      %vm957 = vcmask 224448
      %958 = vst.msk [vmem:[#allocation4] sm:$0xf] %vm957, %v934
      %959 = vst.msk [vmem:[#allocation4 + $0x4] sm:$0xf] %vm957, %v936
      %960 = vst.msk [vmem:[#allocation4 + $0x8] sm:$0xf] %vm957, %v938
      %961 = vst.msk [vmem:[#allocation4 + $0xc] sm:$0xf] %vm957, %v940
      %962 = vst.msk [vmem:[#allocation4 + $0x10] sm:$0xf] %vm957, %v942
      %963 = vst.msk [vmem:[#allocation4 + $0x14] sm:$0xf] %vm957, %v944
      %964 = vst.msk [vmem:[#allocation4 + $0x18] sm:$0xf] %vm957, %v946
      %965 = vst.msk [vmem:[#allocation4 + $0x1c] sm:$0xf] %vm957, %v948
      %v966 = vld [vmem:[%s900 + $0x1] sm:$0xff]
      %v967 = vld [vmem:[%s900 + $0x11] sm:$0xff]
      %v968 = vld [vmem:[%s900 + $0x21] sm:$0xff]
      %v969 = vld [vmem:[%s900 + $0x31] sm:$0xff]
      %v970 = vld [vmem:[%s900 + $0x41] sm:$0xff]
      %v971 = vld [vmem:[%s900 + $0x51] sm:$0xff]
      %v972 = vld [vmem:[%s900 + $0x61] sm:$0xff]
      %v973 = vld [vmem:[%s900 + $0x71] sm:$0xff]
      %v974 = vpack.c.bf16 %v967, %v966
      %v975 = vpack.c.bf16 %v969, %v968
      %v976 = vpack.c.bf16 %v971, %v970
      %v977 = vpack.c.bf16 %v973, %v972
      %v982 = vunpack.c.l.b16 %v974
      %v983 = vunpack.c.h.b16 %v974
      %v984 = vunpack.c.l.b16 %v975
      %v985 = vunpack.c.h.b16 %v975
      %v986 = vunpack.c.l.b16 %v976
      %v987 = vunpack.c.h.b16 %v976
      %v988 = vunpack.c.l.b16 %v977
      %v989 = vunpack.c.h.b16 %v977
      %v990 = vpack.c.b16 %v982, %v982
      %v991 = vpack.c.b16 %v983, %v983
      %v992 = vpack.c.b16 %v984, %v984
      %v993 = vpack.c.b16 %v985, %v985
      %v994 = vpack.c.b16 %v986, %v986
      %v995 = vpack.c.b16 %v987, %v987
      %v996 = vpack.c.b16 %v988, %v988
      %v997 = vpack.c.b16 %v989, %v989
      %998 = vrot.lane.b32.xlu0 %v990, 28
      %v999 = vpop.permute.xlu0 %998
      %1000 = vrot.lane.b32.xlu0 %v991, 28
      %v1001 = vpop.permute.xlu0 %1000
      %1002 = vrot.lane.b32.xlu0 %v992, 28
      %v1003 = vpop.permute.xlu0 %1002
      %1004 = vrot.lane.b32.xlu0 %v993, 28
      %v1005 = vpop.permute.xlu0 %1004
      %1006 = vrot.lane.b32.xlu0 %v994, 28
      %v1007 = vpop.permute.xlu0 %1006
      %1008 = vrot.lane.b32.xlu0 %v995, 28
      %v1009 = vpop.permute.xlu0 %1008
      %1010 = vrot.lane.b32.xlu0 %v996, 28
      %v1011 = vpop.permute.xlu0 %1010
      %1012 = vrot.lane.b32.xlu0 %v997, 28
      %v1013 = vpop.permute.xlu0 %1012
      %vm1022 = vcmask 257248
      %1023 = vst.msk [vmem:[#allocation4] sm:$0xf] %vm1022, %v999
      %1024 = vst.msk [vmem:[#allocation4 + $0x4] sm:$0xf] %vm1022, %v1001
      %1025 = vst.msk [vmem:[#allocation4 + $0x8] sm:$0xf] %vm1022, %v1003
      %1026 = vst.msk [vmem:[#allocation4 + $0xc] sm:$0xf] %vm1022, %v1005
      %1027 = vst.msk [vmem:[#allocation4 + $0x10] sm:$0xf] %vm1022, %v1007
      %1028 = vst.msk [vmem:[#allocation4 + $0x14] sm:$0xf] %vm1022, %v1009
      %1029 = vst.msk [vmem:[#allocation4 + $0x18] sm:$0xf] %vm1022, %v1011
      %1030 = vst.msk [vmem:[#allocation4 + $0x1c] sm:$0xf] %vm1022, %v1013
      %v1031 = vld [vmem:[%s900 + $0x2] sm:$0xff]
      %v1032 = vld [vmem:[%s900 + $0x12] sm:$0xff]
      %v1033 = vld [vmem:[%s900 + $0x22] sm:$0xff]
      %v1034 = vld [vmem:[%s900 + $0x32] sm:$0xff]
      %v1035 = vld [vmem:[%s900 + $0x42] sm:$0xff]
      %v1036 = vld [vmem:[%s900 + $0x52] sm:$0xff]
      %v1037 = vld [vmem:[%s900 + $0x62] sm:$0xff]
      %v1038 = vld [vmem:[%s900 + $0x72] sm:$0xff]
      %v1039 = vpack.c.bf16 %v1032, %v1031
      %v1040 = vpack.c.bf16 %v1034, %v1033
      %v1041 = vpack.c.bf16 %v1036, %v1035
      %v1042 = vpack.c.bf16 %v1038, %v1037
      %v1047 = vunpack.c.l.b16 %v1039
      %v1048 = vunpack.c.h.b16 %v1039
      %v1049 = vunpack.c.l.b16 %v1040
      %v1050 = vunpack.c.h.b16 %v1040
      %v1051 = vunpack.c.l.b16 %v1041
      %v1052 = vunpack.c.h.b16 %v1041
      %v1053 = vunpack.c.l.b16 %v1042
      %v1054 = vunpack.c.h.b16 %v1042
      %v1055 = vpack.c.b16 %v1047, %v1047
      %v1056 = vpack.c.b16 %v1048, %v1048
      %v1057 = vpack.c.b16 %v1049, %v1049
      %v1058 = vpack.c.b16 %v1050, %v1050
      %v1059 = vpack.c.b16 %v1051, %v1051
      %v1060 = vpack.c.b16 %v1052, %v1052
      %v1061 = vpack.c.b16 %v1053, %v1053
      %v1062 = vpack.c.b16 %v1054, %v1054
      %1063 = vrot.lane.b32.xlu0 %v1055, 32
      %v1064 = vpop.permute.xlu0 %1063
      %1065 = vrot.lane.b32.xlu0 %v1056, 32
      %v1066 = vpop.permute.xlu0 %1065
      %1067 = vrot.lane.b32.xlu0 %v1057, 32
      %v1068 = vpop.permute.xlu0 %1067
      %1069 = vrot.lane.b32.xlu0 %v1058, 32
      %v1070 = vpop.permute.xlu0 %1069
      %1071 = vrot.lane.b32.xlu0 %v1059, 32
      %v1072 = vpop.permute.xlu0 %1071
      %1073 = vrot.lane.b32.xlu0 %v1060, 32
      %v1074 = vpop.permute.xlu0 %1073
      %1075 = vrot.lane.b32.xlu0 %v1061, 32
      %v1076 = vpop.permute.xlu0 %1075
      %1077 = vrot.lane.b32.xlu0 %v1062, 32
      %v1078 = vpop.permute.xlu0 %1077
      %vm1087 = vcmask 290048
      %1088 = vst.msk [vmem:[#allocation4] sm:$0xf] %vm1087, %v1064
      %1089 = vst.msk [vmem:[#allocation4 + $0x4] sm:$0xf] %vm1087, %v1066
      %1090 = vst.msk [vmem:[#allocation4 + $0x8] sm:$0xf] %vm1087, %v1068
      %1091 = vst.msk [vmem:[#allocation4 + $0xc] sm:$0xf] %vm1087, %v1070
      %1092 = vst.msk [vmem:[#allocation4 + $0x10] sm:$0xf] %vm1087, %v1072
      %1093 = vst.msk [vmem:[#allocation4 + $0x14] sm:$0xf] %vm1087, %v1074
      %1094 = vst.msk [vmem:[#allocation4 + $0x18] sm:$0xf] %vm1087, %v1076
      %1095 = vst.msk [vmem:[#allocation4 + $0x1c] sm:$0xf] %vm1087, %v1078
      %v1096 = vld [vmem:[#allocation4] sm:$0xf]
      %v1097 = vld [vmem:[#allocation4 + $0x4] sm:$0xf]
      %v1098 = vld [vmem:[#allocation4 + $0x8] sm:$0xf]
      %v1099 = vld [vmem:[#allocation4 + $0xc] sm:$0xf]
      %v1100 = vld [vmem:[#allocation4 + $0x10] sm:$0xf]
      %v1101 = vld [vmem:[#allocation4 + $0x14] sm:$0xf]
      %v1102 = vld [vmem:[#allocation4 + $0x18] sm:$0xf]
      %v1103 = vld [vmem:[#allocation4 + $0x1c] sm:$0xf]
      %v1104 = vld [vmem:[%s1] sm:$0xf]
      %v1105 = vld [vmem:[%s1 + $0x4] sm:$0xf]
      %v1106 = vld [vmem:[%s1 + $0x8] sm:$0xf]
      %v1107 = vld [vmem:[%s1 + $0xc] sm:$0xf]
      %v1108 = vld [vmem:[%s1 + $0x10] sm:$0x3]
      %v1109 = vld [vmem:[%s2] sm:$0x1]
      %v1111 = vlaneseq
      %v1112 = vshrl.u32 %v1111, 7
      %v1113 = vsub.s32 0, %v1112
      %v1114 = vrot.slane %v1109, %v1113
      %v1124 = vunpack.c.l.b16 %v1096
      %v1125 = vunpack.c.l.b16 %v1097
      %v1126 = vunpack.c.l.b16 %v1098
      %v1127 = vunpack.c.l.b16 %v1099
      %v1128 = vunpack.c.l.b16 %v1100
      %v1129 = vunpack.c.l.b16 %v1101
      %v1130 = vunpack.c.l.b16 %v1102
      %v1131 = vunpack.c.l.b16 %v1103
      %v1132 = vpack.c.b16 %v1125, %v1124
      %v1133 = vpack.c.b16 %v1127, %v1126
      %v1134 = vpack.c.b16 %v1129, %v1128
      %v1135 = vpack.c.b16 %v1131, %v1130
      %v1141 = vunpack.c.l.b16 %v1104
      %v1142 = vunpack.c.l.b16 %v1105
      %v1143 = vunpack.c.l.b16 %v1106
      %v1144 = vunpack.c.l.b16 %v1107
      %v1145 = vunpack.c.l.b16 %v1108
      %v1146 = vpack.c.b16 %v1142, %v1141
      %v1147 = vpack.c.b16 %v1144, %v1143
      %v1148 = vpack.c.b16 %v1145, %v1145
      %vm1151 = vcmask 293888
      %v1153 = vsel %vm1151, %v1132, 0
      %v1156 = vsel %vm1151, %v1133, 0
      %v1159 = vsel %vm1151, %v1134, 0
      %v1162 = vsel %vm1151, %v1135, 0
      %vm1164 = vcmask 1041408
      %v1166 = vsel %vm1164, %v1148, 0
      %1168 = vmatprep.subr.bf16.mxu0 0
      %1169 = vmatpush1.bf16.msra.mxu0 0
      %1170 = vmatprep.subr.bf16.mxu0 0
      %1171 = vmatpush1.bf16.msra.mxu0 0
      %1172 = vmatprep.subr.bf16.mxu0 0
      %1173 = vmatpush1.bf16.msra.mxu0 0
      %1174 = vmatprep.subr.bf16.mxu0 0
      %1175 = vmatpush1.bf16.msra.mxu0 0
      %1176 = vmatprep.subr.bf16.mxu0 0
      %1177 = vmatpush1.bf16.msra.mxu0 0
      %1178 = vmatprep.subr.bf16.mxu0 0
      %1179 = vmatpush1.bf16.msra.mxu0 %v1166
      %1180 = vmatprep.subr.bf16.mxu0 0
      %1181 = vmatpush1.bf16.msra.mxu0 %v1147
      %1182 = vmatprep.subr.bf16.mxu0 0
      %1183 = vmatpush1.bf16.msra.mxu0 %v1146
      %1184 = vmatprep.subr.bf16.mxu0 0
      %1185 = vmatpush2.bf16.msra.mxu0 0
      %1186 = vmatprep.subr.bf16.mxu0 0
      %1187 = vmatpush2.bf16.msra.mxu0 0
      %1188 = vmatprep.subr.bf16.mxu0 0
      %1189 = vmatpush2.bf16.msra.mxu0 0
      %1190 = vmatprep.subr.bf16.mxu0 0
      %1191 = vmatpush2.bf16.msra.mxu0 0
      %1192 = vmatprep.subr.bf16.mxu0 0
      %1193 = vmatpush2.bf16.msra.mxu0 0
      %1194 = vmatprep.subr.bf16.mxu0 0
      %1195 = vmatpush2.bf16.msra.mxu0 0
      %1196 = vmatprep.subr.bf16.mxu0 0
      %1197 = vmatpush2.bf16.msra.mxu0 0
      %1198 = vmatprep.subr.bf16.mxu0 0
      %1199 = vmatpush2.bf16.msra.mxu0 0
      %1200 = vmatprep.mubr.bf16.mxu0 0
      %1201 = vmatmul.mubr.bf16.gmra.mxu0 %v1153
      %v1202 = vpop.f32.mrf.mxu0
      %v1203 = vadd.f32 %v1114, %v1202
      %v1204 = vpop.f32.mrf.mxu0
      %v1205 = vpop.f32.mrf.mxu0
      %v1206 = vadd.f32 %v1114, %v1205
      %v1207 = vpop.f32.mrf.mxu0
      %1208 = vmatprep.mubr.bf16.mxu0 0
      %1209 = vmatmul.mubr.bf16.gmra.mxu0 %v1156
      %v1210 = vpop.f32.mrf.mxu0
      %v1211 = vadd.f32 %v1114, %v1210
      %v1212 = vpop.f32.mrf.mxu0
      %v1213 = vpop.f32.mrf.mxu0
      %v1214 = vadd.f32 %v1114, %v1213
      %v1215 = vpop.f32.mrf.mxu0
      %1216 = vmatprep.mubr.bf16.mxu0 0
      %1217 = vmatmul.mubr.bf16.gmra.mxu0 %v1159
      %v1218 = vpop.f32.mrf.mxu0
      %v1219 = vadd.f32 %v1114, %v1218
      %v1220 = vpop.f32.mrf.mxu0
      %v1221 = vpop.f32.mrf.mxu0
      %v1222 = vadd.f32 %v1114, %v1221
      %v1223 = vpop.f32.mrf.mxu0
      %1224 = vmatprep.mubr.bf16.mxu0 0
      %1225 = vmatmul.mubr.bf16.gmra.mxu0 %v1162
      %v1226 = vpop.f32.mrf.mxu0
      %v1227 = vadd.f32 %v1114, %v1226
      %v1228 = vpop.f32.mrf.mxu0
      %v1229 = vpop.f32.mrf.mxu0
      %v1230 = vadd.f32 %v1114, %v1229
      %v1231 = vpop.f32.mrf.mxu0
      %1232 = vdwg.mxu0
      %vm1233 = vcmp.gt.f32.partialorder %v1203, 0.0
      %vm1234 = vcmp.gt.f32.partialorder %v1206, 0.0
      %vm1235 = vcmp.gt.f32.partialorder %v1211, 0.0
      %vm1236 = vcmp.gt.f32.partialorder %v1214, 0.0
      %vm1237 = vcmp.gt.f32.partialorder %v1219, 0.0
      %vm1238 = vcmp.gt.f32.partialorder %v1222, 0.0
      %vm1239 = vcmp.gt.f32.partialorder %v1227, 0.0
      %vm1240 = vcmp.gt.f32.partialorder %v1230, 0.0
      %v1241 = vmul.f32 %v1203, 0.01
      %v1242 = vmul.f32 %v1206, 0.01
      %v1243 = vmul.f32 %v1211, 0.01
      %v1244 = vmul.f32 %v1214, 0.01
      %v1245 = vmul.f32 %v1219, 0.01
      %v1246 = vmul.f32 %v1222, 0.01
      %v1247 = vmul.f32 %v1227, 0.01
      %v1248 = vmul.f32 %v1230, 0.01
      %v1249 = vsel %vm1233, %v1203, %v1241
      %v1250 = vsel %vm1234, %v1206, %v1242
      %v1251 = vsel %vm1235, %v1211, %v1243
      %v1252 = vsel %vm1236, %v1214, %v1244
      %v1253 = vsel %vm1237, %v1219, %v1245
      %v1254 = vsel %vm1238, %v1222, %v1246
      %v1255 = vsel %vm1239, %v1227, %v1247
      %v1256 = vsel %vm1240, %v1230, %v1248
      %v1257 = vld [vmem:[%s3] sm:$0x3]
      %v1258 = vpack.c.bf16 %v510, %v509
      %v1259 = vpack.c.bf16 %v512, %v511
      %v1260 = vpack.c.bf16 %v514, %v513
      %v1261 = vpack.c.bf16 %v516, %v515
      %v1263 = vsel %vm453, %v1258, 0
      %v1266 = vsel %vm453, %v1259, 0
      %v1269 = vsel %vm453, %v1260, 0
      %v1272 = vsel %vm453, %v1261, 0
      %v1275 = vsel %vm1164, %v1257, 0
      %1277 = vmatprep.subr.bf16.mxu0 0
      %1278 = vmatpush1.bf16.msra.mxu0 0
      %1279 = vmatprep.subr.bf16.mxu0 0
      %1280 = vmatpush1.bf16.msra.mxu0 0
      %1281 = vmatprep.subr.bf16.mxu0 0
      %1282 = vmatpush1.bf16.msra.mxu0 0
      %1283 = vmatprep.subr.bf16.mxu0 0
      %1284 = vmatpush1.bf16.msra.mxu0 0
      %1285 = vmatprep.subr.bf16.mxu0 0
      %1286 = vmatpush1.bf16.msra.mxu0 0
      %1287 = vmatprep.subr.bf16.mxu0 0
      %1288 = vmatpush1.bf16.msra.mxu0 0
      %1289 = vmatprep.subr.bf16.mxu0 0
      %1290 = vmatpush1.bf16.msra.mxu0 0
      %1291 = vmatprep.subr.bf16.mxu0 0
      %1292 = vmatpush1.bf16.msra.mxu0 %v1275
      %1293 = vmatprep.subr.bf16.mxu0 0
      %1294 = vmatpush2.bf16.msra.mxu0 0
      %1295 = vmatprep.subr.bf16.mxu0 0
      %1296 = vmatpush2.bf16.msra.mxu0 0
      %1297 = vmatprep.subr.bf16.mxu0 0
      %1298 = vmatpush2.bf16.msra.mxu0 0
      %1299 = vmatprep.subr.bf16.mxu0 0
      %1300 = vmatpush2.bf16.msra.mxu0 0
      %1301 = vmatprep.subr.bf16.mxu0 0
      %1302 = vmatpush2.bf16.msra.mxu0 0
      %1303 = vmatprep.subr.bf16.mxu0 0
      %1304 = vmatpush2.bf16.msra.mxu0 0
      %1305 = vmatprep.subr.bf16.mxu0 0
      %1306 = vmatpush2.bf16.msra.mxu0 0
      %1307 = vmatprep.subr.bf16.mxu0 0
      %1308 = vmatpush2.bf16.msra.mxu0 0
      %1309 = vmatprep.mubr.bf16.mxu0 0
      %1310 = vmatmul.mubr.bf16.gmra.mxu0 %v1263
      %v1311 = vpop.f32.mrf.mxu0
      %v1312 = vadd.f32 0.0, %v1311
      %v1313 = vpop.f32.mrf.mxu0
      %v1314 = vpop.f32.mrf.mxu0
      %v1315 = vadd.f32 0.0, %v1314
      %v1316 = vpop.f32.mrf.mxu0
      %1317 = vmatprep.mubr.bf16.mxu0 0
      %1318 = vmatmul.mubr.bf16.gmra.mxu0 %v1266
      %v1319 = vpop.f32.mrf.mxu0
      %v1320 = vadd.f32 0.0, %v1319
      %v1321 = vpop.f32.mrf.mxu0
      %v1322 = vpop.f32.mrf.mxu0
      %v1323 = vadd.f32 0.0, %v1322
      %v1324 = vpop.f32.mrf.mxu0
      %1325 = vmatprep.mubr.bf16.mxu0 0
      %1326 = vmatmul.mubr.bf16.gmra.mxu0 %v1269
      %v1327 = vpop.f32.mrf.mxu0
      %v1328 = vadd.f32 0.0, %v1327
      %v1329 = vpop.f32.mrf.mxu0
      %v1330 = vpop.f32.mrf.mxu0
      %v1331 = vadd.f32 0.0, %v1330
      %v1332 = vpop.f32.mrf.mxu0
      %1333 = vmatprep.mubr.bf16.mxu0 0
      %1334 = vmatmul.mubr.bf16.gmra.mxu0 %v1272
      %v1335 = vpop.f32.mrf.mxu0
      %v1336 = vadd.f32 0.0, %v1335
      %v1337 = vpop.f32.mrf.mxu0
      %v1338 = vpop.f32.mrf.mxu0
      %v1339 = vadd.f32 0.0, %v1338
      %v1340 = vpop.f32.mrf.mxu0
      %1341 = vdwg.mxu0
      %v1342 = vld [vmem:[%s4] sm:$0xf]
      %v1343 = vld [vmem:[%s4 + $0x4] sm:$0xf]
      %v1344 = vld [vmem:[%s4 + $0x8] sm:$0xf]
      %v1345 = vld [vmem:[%s4 + $0xc] sm:$0xf]
      %v1346 = vpack.c.bf16 %v1250, %v1249
      %v1347 = vpack.c.bf16 %v1252, %v1251
      %v1348 = vpack.c.bf16 %v1254, %v1253
      %v1349 = vpack.c.bf16 %v1256, %v1255
      %v1354 = vunpack.c.l.b16 %v1342
      %v1355 = vunpack.c.l.b16 %v1343
      %v1356 = vunpack.c.l.b16 %v1344
      %v1357 = vunpack.c.l.b16 %v1345
      %v1358 = vpack.c.b16 %v1355, %v1354
      %v1359 = vpack.c.b16 %v1357, %v1356
      %v1363 = vsel %vm481, %v1346, 0
      %v1366 = vsel %vm481, %v1347, 0
      %v1369 = vsel %vm481, %v1348, 0
      %v1372 = vsel %vm481, %v1349, 0
      %1374 = vmatprep.subr.bf16.mxu0 0
      %1375 = vmatpush1.bf16.msra.mxu0 0
      %1376 = vmatprep.subr.bf16.mxu0 0
      %1377 = vmatpush1.bf16.msra.mxu0 0
      %1378 = vmatprep.subr.bf16.mxu0 0
      %1379 = vmatpush1.bf16.msra.mxu0 0
      %1380 = vmatprep.subr.bf16.mxu0 0
      %1381 = vmatpush1.bf16.msra.mxu0 0
      %1382 = vmatprep.subr.bf16.mxu0 0
      %1383 = vmatpush1.bf16.msra.mxu0 0
      %1384 = vmatprep.subr.bf16.mxu0 0
      %1385 = vmatpush1.bf16.msra.mxu0 0
      %1386 = vmatprep.subr.bf16.mxu0 0
      %1387 = vmatpush1.bf16.msra.mxu0 %v1359
      %1388 = vmatprep.subr.bf16.mxu0 0
      %1389 = vmatpush1.bf16.msra.mxu0 %v1358
      %1390 = vmatprep.subr.bf16.mxu0 0
      %1391 = vmatpush2.bf16.msra.mxu0 0
      %1392 = vmatprep.subr.bf16.mxu0 0
      %1393 = vmatpush2.bf16.msra.mxu0 0
      %1394 = vmatprep.subr.bf16.mxu0 0
      %1395 = vmatpush2.bf16.msra.mxu0 0
      %1396 = vmatprep.subr.bf16.mxu0 0
      %1397 = vmatpush2.bf16.msra.mxu0 0
      %1398 = vmatprep.subr.bf16.mxu0 0
      %1399 = vmatpush2.bf16.msra.mxu0 0
      %1400 = vmatprep.subr.bf16.mxu0 0
      %1401 = vmatpush2.bf16.msra.mxu0 0
      %1402 = vmatprep.subr.bf16.mxu0 0
      %1403 = vmatpush2.bf16.msra.mxu0 0
      %1404 = vmatprep.subr.bf16.mxu0 0
      %1405 = vmatpush2.bf16.msra.mxu0 0
      %1406 = vmatprep.mubr.bf16.mxu0 0
      %1407 = vmatmul.mubr.bf16.gmra.mxu0 %v1363
      %v1408 = vpop.f32.mrf.mxu0
      %v1409 = vadd.f32 0.0, %v1408
      %v1410 = vpop.f32.mrf.mxu0
      %v1411 = vpop.f32.mrf.mxu0
      %v1412 = vadd.f32 0.0, %v1411
      %v1413 = vpop.f32.mrf.mxu0
      %1414 = vmatprep.mubr.bf16.mxu0 0
      %1415 = vmatmul.mubr.bf16.gmra.mxu0 %v1366
      %v1416 = vpop.f32.mrf.mxu0
      %v1417 = vadd.f32 0.0, %v1416
      %v1418 = vpop.f32.mrf.mxu0
      %v1419 = vpop.f32.mrf.mxu0
      %v1420 = vadd.f32 0.0, %v1419
      %v1421 = vpop.f32.mrf.mxu0
      %1422 = vmatprep.mubr.bf16.mxu0 0
      %1423 = vmatmul.mubr.bf16.gmra.mxu0 %v1369
      %v1424 = vpop.f32.mrf.mxu0
      %v1425 = vadd.f32 0.0, %v1424
      %v1426 = vpop.f32.mrf.mxu0
      %v1427 = vpop.f32.mrf.mxu0
      %v1428 = vadd.f32 0.0, %v1427
      %v1429 = vpop.f32.mrf.mxu0
      %1430 = vmatprep.mubr.bf16.mxu0 0
      %1431 = vmatmul.mubr.bf16.gmra.mxu0 %v1372
      %v1432 = vpop.f32.mrf.mxu0
      %v1433 = vadd.f32 0.0, %v1432
      %v1434 = vpop.f32.mrf.mxu0
      %v1435 = vpop.f32.mrf.mxu0
      %v1436 = vadd.f32 0.0, %v1435
      %v1437 = vpop.f32.mrf.mxu0
      %1438 = vdwg.mxu0
      %v1439 = vadd.f32 %v1312, %v1409
      %v1440 = vadd.f32 %v1315, %v1412
      %v1441 = vadd.f32 %v1320, %v1417
      %v1442 = vadd.f32 %v1323, %v1420
      %v1443 = vadd.f32 %v1328, %v1425
      %v1444 = vadd.f32 %v1331, %v1428
      %v1445 = vadd.f32 %v1336, %v1433
      %v1446 = vadd.f32 %v1339, %v1436
      %v1447 = vld [vmem:[%s5] sm:$0x1]
      %v1449 = vlaneseq
      %v1450 = vshrl.u32 %v1449, 7
      %v1451 = vsub.s32 0, %v1450
      %v1452 = vrot.slane %v1447, %v1451
      %v1454 = vadd.f32 %v1439, %v1452
      %v1455 = vadd.f32 %v1440, %v1452
      %v1456 = vadd.f32 %v1441, %v1452
      %v1457 = vadd.f32 %v1442, %v1452
      %v1458 = vadd.f32 %v1443, %v1452
      %v1459 = vadd.f32 %v1444, %v1452
      %v1460 = vadd.f32 %v1445, %v1452
      %v1461 = vadd.f32 %v1446, %v1452
      %s1462 = scalar_lea.vmem [#allocation3], 16
      %1463 = vst.msk [vmem:[%s1462 + $0x1] sm:$0xff] %vm481, %v1454
      %1464 = vst.msk [vmem:[%s1462 + $0x11] sm:$0xff] %vm481, %v1455
      %1465 = vst.msk [vmem:[%s1462 + $0x21] sm:$0xff] %vm481, %v1456
      %1466 = vst.msk [vmem:[%s1462 + $0x31] sm:$0xff] %vm481, %v1457
      %1467 = vst.msk [vmem:[%s1462 + $0x41] sm:$0xff] %vm481, %v1458
      %1468 = vst.msk [vmem:[%s1462 + $0x51] sm:$0xff] %vm481, %v1459
      %1469 = vst.msk [vmem:[%s1462 + $0x61] sm:$0xff] %vm481, %v1460
      %1470 = vst.msk [vmem:[%s1462 + $0x71] sm:$0xff] %vm481, %v1461
      %v1471 = vld [vmem:[#allocation3] sm:$0xff]
      %v1472 = vld [vmem:[#allocation3 + $0x10] sm:$0xff]
      %v1473 = vld [vmem:[#allocation3 + $0x20] sm:$0xff]
      %v1474 = vld [vmem:[#allocation3 + $0x30] sm:$0xff]
      %v1475 = vld [vmem:[#allocation3 + $0x40] sm:$0xff]
      %v1476 = vld [vmem:[#allocation3 + $0x50] sm:$0xff]
      %v1477 = vld [vmem:[#allocation3 + $0x60] sm:$0xff]
      %v1478 = vld [vmem:[#allocation3 + $0x70] sm:$0xff]
      %v1479 = vpack.c.bf16 %v1472, %v1471
      %v1480 = vpack.c.bf16 %v1474, %v1473
      %v1481 = vpack.c.bf16 %v1476, %v1475
      %v1482 = vpack.c.bf16 %v1478, %v1477
      %v1487 = vunpack.c.l.b16 %v1479
      %v1488 = vunpack.c.h.b16 %v1479
      %v1489 = vunpack.c.l.b16 %v1480
      %v1490 = vunpack.c.h.b16 %v1480
      %v1491 = vunpack.c.l.b16 %v1481
      %v1492 = vunpack.c.h.b16 %v1481
      %v1493 = vunpack.c.l.b16 %v1482
      %v1494 = vunpack.c.h.b16 %v1482
      %v1495 = vpack.c.b16 %v1487, %v1487
      %v1496 = vpack.c.b16 %v1488, %v1488
      %v1497 = vpack.c.b16 %v1489, %v1489
      %v1498 = vpack.c.b16 %v1490, %v1490
      %v1499 = vpack.c.b16 %v1491, %v1491
      %v1500 = vpack.c.b16 %v1492, %v1492
      %v1501 = vpack.c.b16 %v1493, %v1493
      %v1502 = vpack.c.b16 %v1494, %v1494
      %vm1511 = vcmask 257024
      %1512 = vst.msk [vmem:[#allocation5] sm:$0xf] %vm1511, %v1495
      %1513 = vst.msk [vmem:[#allocation5 + $0xc] sm:$0xf] %vm1511, %v1496
      %1514 = vst.msk [vmem:[#allocation5 + $0x18] sm:$0xf] %vm1511, %v1497
      %1515 = vst.msk [vmem:[#allocation5 + $0x24] sm:$0xf] %vm1511, %v1498
      %1516 = vst.msk [vmem:[#allocation5 + $0x30] sm:$0xf] %vm1511, %v1499
      %1517 = vst.msk [vmem:[#allocation5 + $0x3c] sm:$0xf] %vm1511, %v1500
      %1518 = vst.msk [vmem:[#allocation5 + $0x48] sm:$0xf] %vm1511, %v1501
      %1519 = vst.msk [vmem:[#allocation5 + $0x54] sm:$0xf] %vm1511, %v1502
      %v1520 = vld [vmem:[#allocation3 + $0x1] sm:$0xff]
      %v1521 = vld [vmem:[#allocation3 + $0x11] sm:$0xff]
      %v1522 = vld [vmem:[#allocation3 + $0x21] sm:$0xff]
      %v1523 = vld [vmem:[#allocation3 + $0x31] sm:$0xff]
      %v1524 = vld [vmem:[#allocation3 + $0x41] sm:$0xff]
      %v1525 = vld [vmem:[#allocation3 + $0x51] sm:$0xff]
      %v1526 = vld [vmem:[#allocation3 + $0x61] sm:$0xff]
      %v1527 = vld [vmem:[#allocation3 + $0x71] sm:$0xff]
      %v1528 = vpack.c.bf16 %v1521, %v1520
      %v1529 = vpack.c.bf16 %v1523, %v1522
      %v1530 = vpack.c.bf16 %v1525, %v1524
      %v1531 = vpack.c.bf16 %v1527, %v1526
      %v1536 = vunpack.c.l.b16 %v1528
      %v1537 = vunpack.c.h.b16 %v1528
      %v1538 = vunpack.c.l.b16 %v1529
      %v1539 = vunpack.c.h.b16 %v1529
      %v1540 = vunpack.c.l.b16 %v1530
      %v1541 = vunpack.c.h.b16 %v1530
      %v1542 = vunpack.c.l.b16 %v1531
      %v1543 = vunpack.c.h.b16 %v1531
      %v1544 = vpack.c.b16 %v1536, %v1536
      %v1545 = vpack.c.b16 %v1537, %v1537
      %v1546 = vpack.c.b16 %v1538, %v1538
      %v1547 = vpack.c.b16 %v1539, %v1539
      %v1548 = vpack.c.b16 %v1540, %v1540
      %v1549 = vpack.c.b16 %v1541, %v1541
      %v1550 = vpack.c.b16 %v1542, %v1542
      %v1551 = vpack.c.b16 %v1543, %v1543
      %1552 = vrot.lane.b32.xlu0 %v1544, 32
      %v1553 = vpop.permute.xlu0 %1552
      %1554 = vrot.lane.b32.xlu0 %v1545, 32
      %v1555 = vpop.permute.xlu0 %1554
      %1556 = vrot.lane.b32.xlu0 %v1546, 32
      %v1557 = vpop.permute.xlu0 %1556
      %1558 = vrot.lane.b32.xlu0 %v1547, 32
      %v1559 = vpop.permute.xlu0 %1558
      %1560 = vrot.lane.b32.xlu0 %v1548, 32
      %v1561 = vpop.permute.xlu0 %1560
      %1562 = vrot.lane.b32.xlu0 %v1549, 32
      %v1563 = vpop.permute.xlu0 %1562
      %1564 = vrot.lane.b32.xlu0 %v1550, 32
      %v1565 = vpop.permute.xlu0 %1564
      %1566 = vrot.lane.b32.xlu0 %v1551, 32
      %v1567 = vpop.permute.xlu0 %1566
      %vm1576 = vcmask 519424
      %1577 = vst.msk [vmem:[#allocation5] sm:$0xf] %vm1576, %v1553
      %1578 = vst.msk [vmem:[#allocation5 + $0xc] sm:$0xf] %vm1576, %v1555
      %1579 = vst.msk [vmem:[#allocation5 + $0x18] sm:$0xf] %vm1576, %v1557
      %1580 = vst.msk [vmem:[#allocation5 + $0x24] sm:$0xf] %vm1576, %v1559
      %1581 = vst.msk [vmem:[#allocation5 + $0x30] sm:$0xf] %vm1576, %v1561
      %1582 = vst.msk [vmem:[#allocation5 + $0x3c] sm:$0xf] %vm1576, %v1563
      %1583 = vst.msk [vmem:[#allocation5 + $0x48] sm:$0xf] %vm1576, %v1565
      %1584 = vst.msk [vmem:[#allocation5 + $0x54] sm:$0xf] %vm1576, %v1567
      %v1585 = vld [vmem:[#allocation3 + $0x2] sm:$0xff]
      %v1586 = vld [vmem:[#allocation3 + $0x12] sm:$0xff]
      %v1587 = vld [vmem:[#allocation3 + $0x22] sm:$0xff]
      %v1588 = vld [vmem:[#allocation3 + $0x32] sm:$0xff]
      %v1589 = vld [vmem:[#allocation3 + $0x42] sm:$0xff]
      %v1590 = vld [vmem:[#allocation3 + $0x52] sm:$0xff]
      %v1591 = vld [vmem:[#allocation3 + $0x62] sm:$0xff]
      %v1592 = vld [vmem:[#allocation3 + $0x72] sm:$0xff]
      %v1593 = vpack.c.bf16 %v1586, %v1585
      %v1594 = vpack.c.bf16 %v1588, %v1587
      %v1595 = vpack.c.bf16 %v1590, %v1589
      %v1596 = vpack.c.bf16 %v1592, %v1591
      %v1601 = vunpack.c.l.b16 %v1593
      %v1602 = vunpack.c.h.b16 %v1593
      %v1603 = vunpack.c.l.b16 %v1594
      %v1604 = vunpack.c.h.b16 %v1594
      %v1605 = vunpack.c.l.b16 %v1595
      %v1606 = vunpack.c.h.b16 %v1595
      %v1607 = vunpack.c.l.b16 %v1596
      %v1608 = vunpack.c.h.b16 %v1596
      %v1609 = vpack.c.b16 %v1601, %v1601
      %v1610 = vpack.c.b16 %v1602, %v1602
      %v1611 = vpack.c.b16 %v1603, %v1603
      %v1612 = vpack.c.b16 %v1604, %v1604
      %v1613 = vpack.c.b16 %v1605, %v1605
      %v1614 = vpack.c.b16 %v1606, %v1606
      %v1615 = vpack.c.b16 %v1607, %v1607
      %v1616 = vpack.c.b16 %v1608, %v1608
      %1617 = vrot.lane.b32.xlu0 %v1609, 64
      %v1618 = vpop.permute.xlu0 %1617
      %1619 = vrot.lane.b32.xlu0 %v1610, 64
      %v1620 = vpop.permute.xlu0 %1619
      %1621 = vrot.lane.b32.xlu0 %v1611, 64
      %v1622 = vpop.permute.xlu0 %1621
      %1623 = vrot.lane.b32.xlu0 %v1612, 64
      %v1624 = vpop.permute.xlu0 %1623
      %1625 = vrot.lane.b32.xlu0 %v1613, 64
      %v1626 = vpop.permute.xlu0 %1625
      %1627 = vrot.lane.b32.xlu0 %v1614, 64
      %v1628 = vpop.permute.xlu0 %1627
      %1629 = vrot.lane.b32.xlu0 %v1615, 64
      %v1630 = vpop.permute.xlu0 %1629
      %1631 = vrot.lane.b32.xlu0 %v1616, 64
      %v1632 = vpop.permute.xlu0 %1631
      %vm1641 = vcmask 781824
      %1642 = vst.msk [vmem:[#allocation5] sm:$0xf] %vm1641, %v1618
      %1643 = vst.msk [vmem:[#allocation5 + $0xc] sm:$0xf] %vm1641, %v1620
      %1644 = vst.msk [vmem:[#allocation5 + $0x18] sm:$0xf] %vm1641, %v1622
      %1645 = vst.msk [vmem:[#allocation5 + $0x24] sm:$0xf] %vm1641, %v1624
      %1646 = vst.msk [vmem:[#allocation5 + $0x30] sm:$0xf] %vm1641, %v1626
      %1647 = vst.msk [vmem:[#allocation5 + $0x3c] sm:$0xf] %vm1641, %v1628
      %1648 = vst.msk [vmem:[#allocation5 + $0x48] sm:$0xf] %vm1641, %v1630
      %1649 = vst.msk [vmem:[#allocation5 + $0x54] sm:$0xf] %vm1641, %v1632
      %v1650 = vld [vmem:[%s1462] sm:$0xff]
      %v1651 = vld [vmem:[%s1462 + $0x10] sm:$0xff]
      %v1652 = vld [vmem:[%s1462 + $0x20] sm:$0xff]
      %v1653 = vld [vmem:[%s1462 + $0x30] sm:$0xff]
      %v1654 = vld [vmem:[%s1462 + $0x40] sm:$0xff]
      %v1655 = vld [vmem:[%s1462 + $0x50] sm:$0xff]
      %v1656 = vld [vmem:[%s1462 + $0x60] sm:$0xff]
      %v1657 = vld [vmem:[%s1462 + $0x70] sm:$0xff]
      %v1658 = vpack.c.bf16 %v1651, %v1650
      %v1659 = vpack.c.bf16 %v1653, %v1652
      %v1660 = vpack.c.bf16 %v1655, %v1654
      %v1661 = vpack.c.bf16 %v1657, %v1656
      %v1666 = vunpack.c.l.b16 %v1658
      %v1667 = vunpack.c.h.b16 %v1658
      %v1668 = vunpack.c.l.b16 %v1659
      %v1669 = vunpack.c.h.b16 %v1659
      %v1670 = vunpack.c.l.b16 %v1660
      %v1671 = vunpack.c.h.b16 %v1660
      %v1672 = vunpack.c.l.b16 %v1661
      %v1673 = vunpack.c.h.b16 %v1661
      %v1674 = vpack.c.b16 %v1666, %v1666
      %v1675 = vpack.c.b16 %v1667, %v1667
      %v1676 = vpack.c.b16 %v1668, %v1668
      %v1677 = vpack.c.b16 %v1669, %v1669
      %v1678 = vpack.c.b16 %v1670, %v1670
      %v1679 = vpack.c.b16 %v1671, %v1671
      %v1680 = vpack.c.b16 %v1672, %v1672
      %v1681 = vpack.c.b16 %v1673, %v1673
      %1682 = vrot.lane.b32.xlu0 %v1674, 96
      %v1683 = vpop.permute.xlu0 %1682
      %1684 = vrot.lane.b32.xlu0 %v1675, 96
      %v1685 = vpop.permute.xlu0 %1684
      %1686 = vrot.lane.b32.xlu0 %v1676, 96
      %v1687 = vpop.permute.xlu0 %1686
      %1688 = vrot.lane.b32.xlu0 %v1677, 96
      %v1689 = vpop.permute.xlu0 %1688
      %1690 = vrot.lane.b32.xlu0 %v1678, 96
      %v1691 = vpop.permute.xlu0 %1690
      %1692 = vrot.lane.b32.xlu0 %v1679, 96
      %v1693 = vpop.permute.xlu0 %1692
      %1694 = vrot.lane.b32.xlu0 %v1680, 96
      %v1695 = vpop.permute.xlu0 %1694
      %1696 = vrot.lane.b32.xlu0 %v1681, 96
      %v1697 = vpop.permute.xlu0 %1696
      %vm1706 = vcmask 1044224
      %1707 = vst.msk [vmem:[#allocation5] sm:$0xf] %vm1706, %v1683
      %1708 = vst.msk [vmem:[#allocation5 + $0xc] sm:$0xf] %vm1706, %v1685
      %1709 = vst.msk [vmem:[#allocation5 + $0x18] sm:$0xf] %vm1706, %v1687
      %1710 = vst.msk [vmem:[#allocation5 + $0x24] sm:$0xf] %vm1706, %v1689
      %1711 = vst.msk [vmem:[#allocation5 + $0x30] sm:$0xf] %vm1706, %v1691
      %1712 = vst.msk [vmem:[#allocation5 + $0x3c] sm:$0xf] %vm1706, %v1693
      %1713 = vst.msk [vmem:[#allocation5 + $0x48] sm:$0xf] %vm1706, %v1695
      %1714 = vst.msk [vmem:[#allocation5 + $0x54] sm:$0xf] %vm1706, %v1697
      %v1715 = vld [vmem:[%s1462 + $0x1] sm:$0xff]
      %v1716 = vld [vmem:[%s1462 + $0x11] sm:$0xff]
      %v1717 = vld [vmem:[%s1462 + $0x21] sm:$0xff]
      %v1718 = vld [vmem:[%s1462 + $0x31] sm:$0xff]
      %v1719 = vld [vmem:[%s1462 + $0x41] sm:$0xff]
      %v1720 = vld [vmem:[%s1462 + $0x51] sm:$0xff]
      %v1721 = vld [vmem:[%s1462 + $0x61] sm:$0xff]
      %v1722 = vld [vmem:[%s1462 + $0x71] sm:$0xff]
      %v1723 = vpack.c.bf16 %v1716, %v1715
      %v1724 = vpack.c.bf16 %v1718, %v1717
      %v1725 = vpack.c.bf16 %v1720, %v1719
      %v1726 = vpack.c.bf16 %v1722, %v1721
      %v1731 = vunpack.c.l.b16 %v1723
      %v1732 = vunpack.c.h.b16 %v1723
      %v1733 = vunpack.c.l.b16 %v1724
      %v1734 = vunpack.c.h.b16 %v1724
      %v1735 = vunpack.c.l.b16 %v1725
      %v1736 = vunpack.c.h.b16 %v1725
      %v1737 = vunpack.c.l.b16 %v1726
      %v1738 = vunpack.c.h.b16 %v1726
      %v1739 = vpack.c.b16 %v1731, %v1731
      %v1740 = vpack.c.b16 %v1732, %v1732
      %v1741 = vpack.c.b16 %v1733, %v1733
      %v1742 = vpack.c.b16 %v1734, %v1734
      %v1743 = vpack.c.b16 %v1735, %v1735
      %v1744 = vpack.c.b16 %v1736, %v1736
      %v1745 = vpack.c.b16 %v1737, %v1737
      %v1746 = vpack.c.b16 %v1738, %v1738
      %1755 = vst.msk [vmem:[#allocation5 + $0x4] sm:$0xf] %vm1511, %v1739
      %1756 = vst.msk [vmem:[#allocation5 + $0x10] sm:$0xf] %vm1511, %v1740
      %1757 = vst.msk [vmem:[#allocation5 + $0x1c] sm:$0xf] %vm1511, %v1741
      %1758 = vst.msk [vmem:[#allocation5 + $0x28] sm:$0xf] %vm1511, %v1742
      %1759 = vst.msk [vmem:[#allocation5 + $0x34] sm:$0xf] %vm1511, %v1743
      %1760 = vst.msk [vmem:[#allocation5 + $0x40] sm:$0xf] %vm1511, %v1744
      %1761 = vst.msk [vmem:[#allocation5 + $0x4c] sm:$0xf] %vm1511, %v1745
      %1762 = vst.msk [vmem:[#allocation5 + $0x58] sm:$0xf] %vm1511, %v1746
      %v1763 = vld [vmem:[%s1462 + $0x2] sm:$0xff]
      %v1764 = vld [vmem:[%s1462 + $0x12] sm:$0xff]
      %v1765 = vld [vmem:[%s1462 + $0x22] sm:$0xff]
      %v1766 = vld [vmem:[%s1462 + $0x32] sm:$0xff]
      %v1767 = vld [vmem:[%s1462 + $0x42] sm:$0xff]
      %v1768 = vld [vmem:[%s1462 + $0x52] sm:$0xff]
      %v1769 = vld [vmem:[%s1462 + $0x62] sm:$0xff]
      %v1770 = vld [vmem:[%s1462 + $0x72] sm:$0xff]
      %v1771 = vpack.c.bf16 %v1764, %v1763
      %v1772 = vpack.c.bf16 %v1766, %v1765
      %v1773 = vpack.c.bf16 %v1768, %v1767
      %v1774 = vpack.c.bf16 %v1770, %v1769
      %v1779 = vunpack.c.l.b16 %v1771
      %v1780 = vunpack.c.h.b16 %v1771
      %v1781 = vunpack.c.l.b16 %v1772
      %v1782 = vunpack.c.h.b16 %v1772
      %v1783 = vunpack.c.l.b16 %v1773
      %v1784 = vunpack.c.h.b16 %v1773
      %v1785 = vunpack.c.l.b16 %v1774
      %v1786 = vunpack.c.h.b16 %v1774
      %v1787 = vpack.c.b16 %v1779, %v1779
      %v1788 = vpack.c.b16 %v1780, %v1780
      %v1789 = vpack.c.b16 %v1781, %v1781
      %v1790 = vpack.c.b16 %v1782, %v1782
      %v1791 = vpack.c.b16 %v1783, %v1783
      %v1792 = vpack.c.b16 %v1784, %v1784
      %v1793 = vpack.c.b16 %v1785, %v1785
      %v1794 = vpack.c.b16 %v1786, %v1786
      %1795 = vrot.lane.b32.xlu0 %v1787, 32
      %v1796 = vpop.permute.xlu0 %1795
      %1797 = vrot.lane.b32.xlu0 %v1788, 32
      %v1798 = vpop.permute.xlu0 %1797
      %1799 = vrot.lane.b32.xlu0 %v1789, 32
      %v1800 = vpop.permute.xlu0 %1799
      %1801 = vrot.lane.b32.xlu0 %v1790, 32
      %v1802 = vpop.permute.xlu0 %1801
      %1803 = vrot.lane.b32.xlu0 %v1791, 32
      %v1804 = vpop.permute.xlu0 %1803
      %1805 = vrot.lane.b32.xlu0 %v1792, 32
      %v1806 = vpop.permute.xlu0 %1805
      %1807 = vrot.lane.b32.xlu0 %v1793, 32
      %v1808 = vpop.permute.xlu0 %1807
      %1809 = vrot.lane.b32.xlu0 %v1794, 32
      %v1810 = vpop.permute.xlu0 %1809
      %1819 = vst.msk [vmem:[#allocation5 + $0x4] sm:$0xf] %vm1576, %v1796
      %1820 = vst.msk [vmem:[#allocation5 + $0x10] sm:$0xf] %vm1576, %v1798
      %1821 = vst.msk [vmem:[#allocation5 + $0x1c] sm:$0xf] %vm1576, %v1800
      %1822 = vst.msk [vmem:[#allocation5 + $0x28] sm:$0xf] %vm1576, %v1802
      %1823 = vst.msk [vmem:[#allocation5 + $0x34] sm:$0xf] %vm1576, %v1804
      %1824 = vst.msk [vmem:[#allocation5 + $0x40] sm:$0xf] %vm1576, %v1806
      %1825 = vst.msk [vmem:[#allocation5 + $0x4c] sm:$0xf] %vm1576, %v1808
      %1826 = vst.msk [vmem:[#allocation5 + $0x58] sm:$0xf] %vm1576, %v1810
      %s1827 = scalar_lea.vmem [#allocation3], 32
      %v1828 = vld [vmem:[%s1827] sm:$0xff]
      %v1829 = vld [vmem:[%s1827 + $0x10] sm:$0xff]
      %v1830 = vld [vmem:[%s1827 + $0x20] sm:$0xff]
      %v1831 = vld [vmem:[%s1827 + $0x30] sm:$0xff]
      %v1832 = vld [vmem:[%s1827 + $0x40] sm:$0xff]
      %v1833 = vld [vmem:[%s1827 + $0x50] sm:$0xff]
      %v1834 = vld [vmem:[%s1827 + $0x60] sm:$0xff]
      %v1835 = vld [vmem:[%s1827 + $0x70] sm:$0xff]
      %v1836 = vpack.c.bf16 %v1829, %v1828
      %v1837 = vpack.c.bf16 %v1831, %v1830
      %v1838 = vpack.c.bf16 %v1833, %v1832
      %v1839 = vpack.c.bf16 %v1835, %v1834
      %v1844 = vunpack.c.l.b16 %v1836
      %v1845 = vunpack.c.h.b16 %v1836
      %v1846 = vunpack.c.l.b16 %v1837
      %v1847 = vunpack.c.h.b16 %v1837
      %v1848 = vunpack.c.l.b16 %v1838
      %v1849 = vunpack.c.h.b16 %v1838
      %v1850 = vunpack.c.l.b16 %v1839
      %v1851 = vunpack.c.h.b16 %v1839
      %v1852 = vpack.c.b16 %v1844, %v1844
      %v1853 = vpack.c.b16 %v1845, %v1845
      %v1854 = vpack.c.b16 %v1846, %v1846
      %v1855 = vpack.c.b16 %v1847, %v1847
      %v1856 = vpack.c.b16 %v1848, %v1848
      %v1857 = vpack.c.b16 %v1849, %v1849
      %v1858 = vpack.c.b16 %v1850, %v1850
      %v1859 = vpack.c.b16 %v1851, %v1851
      %1860 = vrot.lane.b32.xlu0 %v1852, 64
      %v1861 = vpop.permute.xlu0 %1860
      %1862 = vrot.lane.b32.xlu0 %v1853, 64
      %v1863 = vpop.permute.xlu0 %1862
      %1864 = vrot.lane.b32.xlu0 %v1854, 64
      %v1865 = vpop.permute.xlu0 %1864
      %1866 = vrot.lane.b32.xlu0 %v1855, 64
      %v1867 = vpop.permute.xlu0 %1866
      %1868 = vrot.lane.b32.xlu0 %v1856, 64
      %v1869 = vpop.permute.xlu0 %1868
      %1870 = vrot.lane.b32.xlu0 %v1857, 64
      %v1871 = vpop.permute.xlu0 %1870
      %1872 = vrot.lane.b32.xlu0 %v1858, 64
      %v1873 = vpop.permute.xlu0 %1872
      %1874 = vrot.lane.b32.xlu0 %v1859, 64
      %v1875 = vpop.permute.xlu0 %1874
      %1884 = vst.msk [vmem:[#allocation5 + $0x4] sm:$0xf] %vm1641, %v1861
      %1885 = vst.msk [vmem:[#allocation5 + $0x10] sm:$0xf] %vm1641, %v1863
      %1886 = vst.msk [vmem:[#allocation5 + $0x1c] sm:$0xf] %vm1641, %v1865
      %1887 = vst.msk [vmem:[#allocation5 + $0x28] sm:$0xf] %vm1641, %v1867
      %1888 = vst.msk [vmem:[#allocation5 + $0x34] sm:$0xf] %vm1641, %v1869
      %1889 = vst.msk [vmem:[#allocation5 + $0x40] sm:$0xf] %vm1641, %v1871
      %1890 = vst.msk [vmem:[#allocation5 + $0x4c] sm:$0xf] %vm1641, %v1873
      %1891 = vst.msk [vmem:[#allocation5 + $0x58] sm:$0xf] %vm1641, %v1875
      %v1892 = vld [vmem:[%s1827 + $0x1] sm:$0xff]
      %v1893 = vld [vmem:[%s1827 + $0x11] sm:$0xff]
      %v1894 = vld [vmem:[%s1827 + $0x21] sm:$0xff]
      %v1895 = vld [vmem:[%s1827 + $0x31] sm:$0xff]
      %v1896 = vld [vmem:[%s1827 + $0x41] sm:$0xff]
      %v1897 = vld [vmem:[%s1827 + $0x51] sm:$0xff]
      %v1898 = vld [vmem:[%s1827 + $0x61] sm:$0xff]
      %v1899 = vld [vmem:[%s1827 + $0x71] sm:$0xff]
      %v1900 = vpack.c.bf16 %v1893, %v1892
      %v1901 = vpack.c.bf16 %v1895, %v1894
      %v1902 = vpack.c.bf16 %v1897, %v1896
      %v1903 = vpack.c.bf16 %v1899, %v1898
      %v1908 = vunpack.c.l.b16 %v1900
      %v1909 = vunpack.c.h.b16 %v1900
      %v1910 = vunpack.c.l.b16 %v1901
      %v1911 = vunpack.c.h.b16 %v1901
      %v1912 = vunpack.c.l.b16 %v1902
      %v1913 = vunpack.c.h.b16 %v1902
      %v1914 = vunpack.c.l.b16 %v1903
      %v1915 = vunpack.c.h.b16 %v1903
      %v1916 = vpack.c.b16 %v1908, %v1908
      %v1917 = vpack.c.b16 %v1909, %v1909
      %v1918 = vpack.c.b16 %v1910, %v1910
      %v1919 = vpack.c.b16 %v1911, %v1911
      %v1920 = vpack.c.b16 %v1912, %v1912
      %v1921 = vpack.c.b16 %v1913, %v1913
      %v1922 = vpack.c.b16 %v1914, %v1914
      %v1923 = vpack.c.b16 %v1915, %v1915
      %1924 = vrot.lane.b32.xlu0 %v1916, 96
      %v1925 = vpop.permute.xlu0 %1924
      %1926 = vrot.lane.b32.xlu0 %v1917, 96
      %v1927 = vpop.permute.xlu0 %1926
      %1928 = vrot.lane.b32.xlu0 %v1918, 96
      %v1929 = vpop.permute.xlu0 %1928
      %1930 = vrot.lane.b32.xlu0 %v1919, 96
      %v1931 = vpop.permute.xlu0 %1930
      %1932 = vrot.lane.b32.xlu0 %v1920, 96
      %v1933 = vpop.permute.xlu0 %1932
      %1934 = vrot.lane.b32.xlu0 %v1921, 96
      %v1935 = vpop.permute.xlu0 %1934
      %1936 = vrot.lane.b32.xlu0 %v1922, 96
      %v1937 = vpop.permute.xlu0 %1936
      %1938 = vrot.lane.b32.xlu0 %v1923, 96
      %v1939 = vpop.permute.xlu0 %1938
      %1948 = vst.msk [vmem:[#allocation5 + $0x4] sm:$0xf] %vm1706, %v1925
      %1949 = vst.msk [vmem:[#allocation5 + $0x10] sm:$0xf] %vm1706, %v1927
      %1950 = vst.msk [vmem:[#allocation5 + $0x1c] sm:$0xf] %vm1706, %v1929
      %1951 = vst.msk [vmem:[#allocation5 + $0x28] sm:$0xf] %vm1706, %v1931
      %1952 = vst.msk [vmem:[#allocation5 + $0x34] sm:$0xf] %vm1706, %v1933
      %1953 = vst.msk [vmem:[#allocation5 + $0x40] sm:$0xf] %vm1706, %v1935
      %1954 = vst.msk [vmem:[#allocation5 + $0x4c] sm:$0xf] %vm1706, %v1937
      %1955 = vst.msk [vmem:[#allocation5 + $0x58] sm:$0xf] %vm1706, %v1939
      %v1956 = vld [vmem:[%s1827 + $0x2] sm:$0xff]
      %v1957 = vld [vmem:[%s1827 + $0x12] sm:$0xff]
      %v1958 = vld [vmem:[%s1827 + $0x22] sm:$0xff]
      %v1959 = vld [vmem:[%s1827 + $0x32] sm:$0xff]
      %v1960 = vld [vmem:[%s1827 + $0x42] sm:$0xff]
      %v1961 = vld [vmem:[%s1827 + $0x52] sm:$0xff]
      %v1962 = vld [vmem:[%s1827 + $0x62] sm:$0xff]
      %v1963 = vld [vmem:[%s1827 + $0x72] sm:$0xff]
      %v1964 = vpack.c.bf16 %v1957, %v1956
      %v1965 = vpack.c.bf16 %v1959, %v1958
      %v1966 = vpack.c.bf16 %v1961, %v1960
      %v1967 = vpack.c.bf16 %v1963, %v1962
      %v1972 = vunpack.c.l.b16 %v1964
      %v1973 = vunpack.c.h.b16 %v1964
      %v1974 = vunpack.c.l.b16 %v1965
      %v1975 = vunpack.c.h.b16 %v1965
      %v1976 = vunpack.c.l.b16 %v1966
      %v1977 = vunpack.c.h.b16 %v1966
      %v1978 = vunpack.c.l.b16 %v1967
      %v1979 = vunpack.c.h.b16 %v1967
      %v1980 = vpack.c.b16 %v1972, %v1972
      %v1981 = vpack.c.b16 %v1973, %v1973
      %v1982 = vpack.c.b16 %v1974, %v1974
      %v1983 = vpack.c.b16 %v1975, %v1975
      %v1984 = vpack.c.b16 %v1976, %v1976
      %v1985 = vpack.c.b16 %v1977, %v1977
      %v1986 = vpack.c.b16 %v1978, %v1978
      %v1987 = vpack.c.b16 %v1979, %v1979
      %1996 = vst.msk [vmem:[#allocation5 + $0x8] sm:$0xf] %vm1511, %v1980
      %1997 = vst.msk [vmem:[#allocation5 + $0x14] sm:$0xf] %vm1511, %v1981
      %1998 = vst.msk [vmem:[#allocation5 + $0x20] sm:$0xf] %vm1511, %v1982
      %1999 = vst.msk [vmem:[#allocation5 + $0x2c] sm:$0xf] %vm1511, %v1983
      %2000 = vst.msk [vmem:[#allocation5 + $0x38] sm:$0xf] %vm1511, %v1984
      %2001 = vst.msk [vmem:[#allocation5 + $0x44] sm:$0xf] %vm1511, %v1985
      %2002 = vst.msk [vmem:[#allocation5 + $0x50] sm:$0xf] %vm1511, %v1986
      %2003 = vst.msk [vmem:[#allocation5 + $0x5c] sm:$0xf] %vm1511, %v1987
      %v2004 = vld [vmem:[#allocation5] sm:$0xff]
      %v2005 = vld [vmem:[#allocation5 + $0x8] sm:$0xf]
      %v2006 = vld [vmem:[#allocation5 + $0xc] sm:$0xff]
      %v2007 = vld [vmem:[#allocation5 + $0x14] sm:$0xf]
      %v2008 = vld [vmem:[#allocation5 + $0x18] sm:$0xff]
      %v2009 = vld [vmem:[#allocation5 + $0x20] sm:$0xf]
      %v2010 = vld [vmem:[#allocation5 + $0x24] sm:$0xff]
      %v2011 = vld [vmem:[#allocation5 + $0x2c] sm:$0xf]
      %v2012 = vld [vmem:[#allocation5 + $0x30] sm:$0xff]
      %v2013 = vld [vmem:[#allocation5 + $0x38] sm:$0xf]
      %v2014 = vld [vmem:[#allocation5 + $0x3c] sm:$0xff]
      %v2015 = vld [vmem:[#allocation5 + $0x44] sm:$0xf]
      %v2016 = vld [vmem:[#allocation5 + $0x48] sm:$0xff]
      %v2017 = vld [vmem:[#allocation5 + $0x50] sm:$0xf]
      %v2018 = vld [vmem:[#allocation5 + $0x54] sm:$0xff]
      %v2019 = vld [vmem:[#allocation5 + $0x5c] sm:$0xf]
      %v2020 = vld [vmem:[%s6] sm:$0xf]
      %v2021 = vld [vmem:[%s6 + $0x4] sm:$0xf]
      %v2022 = vld [vmem:[%s6 + $0x8] sm:$0xf]
      %v2023 = vld [vmem:[%s6 + $0xc] sm:$0xf]
      %v2024 = vld [vmem:[%s6 + $0x10] sm:$0xf]
      %v2025 = vld [vmem:[%s6 + $0x14] sm:$0xf]
      %v2026 = vld [vmem:[%s6 + $0x18] sm:$0xf]
      %v2027 = vld [vmem:[%s6 + $0x1c] sm:$0xf]
      %v2028 = vld [vmem:[%s6 + $0x20] sm:$0xf]
      %v2029 = vld [vmem:[%s6 + $0x24] sm:$0xf]
      %v2030 = vld [vmem:[%s6 + $0x28] sm:$0xf]
      %v2031 = vld [vmem:[%s6 + $0x2c] sm:$0xf]
      %v2032 = vld [vmem:[%s6 + $0x30] sm:$0xf]
      %v2033 = vld [vmem:[%s6 + $0x34] sm:$0xf]
      %v2034 = vld [vmem:[%s6 + $0x38] sm:$0xf]
      %v2035 = vld [vmem:[%s6 + $0x3c] sm:$0xf]
      %v2036 = vld [vmem:[%s6 + $0x40] sm:$0xf]
      %v2037 = vld [vmem:[%s6 + $0x44] sm:$0xf]
      %v2038 = vld [vmem:[%s6 + $0x48] sm:$0xf]
      %v2039 = vld [vmem:[%s6 + $0x4c] sm:$0xf]
      %v2040 = vld [vmem:[%s6 + $0x50] sm:$0xf]
      %v2041 = vld [vmem:[%s6 + $0x54] sm:$0xf]
      %v2042 = vld [vmem:[%s6 + $0x58] sm:$0xf]
      %v2043 = vld [vmem:[%s6 + $0x5c] sm:$0xf]
      %v2044 = vld [vmem:[%s6 + $0x60] sm:$0xf]
      %v2045 = vld [vmem:[%s6 + $0x64] sm:$0xf]
      %v2046 = vld [vmem:[%s6 + $0x68] sm:$0xf]
      %v2047 = vld [vmem:[%s6 + $0x6c] sm:$0xf]
      %v2048 = vld [vmem:[%s6 + $0x70] sm:$0xf]
      %v2049 = vld [vmem:[%s6 + $0x74] sm:$0xf]
      %v2050 = vld [vmem:[%s6 + $0x78] sm:$0xf]
      %v2051 = vld [vmem:[%s6 + $0x7c] sm:$0xf]
      %v2052 = vld [vmem:[%s6 + $0x80] sm:$0xf]
      %v2053 = vld [vmem:[%s6 + $0x84] sm:$0xf]
      %v2054 = vld [vmem:[%s6 + $0x88] sm:$0xf]
      %v2055 = vld [vmem:[%s6 + $0x8c] sm:$0xf]
      %v2056 = vld [vmem:[%s7] sm:$0x1]
      %v2058 = vlaneseq
      %v2059 = vshrl.u32 %v2058, 7
      %v2060 = vsub.s32 0, %v2059
      %v2061 = vrot.slane %v2056, %v2060
      %v2079 = vunpack.c.l.b16 %v2004
      %v2080 = vunpack.c.h.b16 %v2004
      %v2081 = vunpack.c.l.b16 %v2005
      %v2082 = vunpack.c.l.b16 %v2006
      %v2083 = vunpack.c.h.b16 %v2006
      %v2084 = vunpack.c.l.b16 %v2007
      %v2085 = vunpack.c.l.b16 %v2008
      %v2086 = vunpack.c.h.b16 %v2008
      %v2087 = vunpack.c.l.b16 %v2009
      %v2088 = vunpack.c.l.b16 %v2010
      %v2089 = vunpack.c.h.b16 %v2010
      %v2090 = vunpack.c.l.b16 %v2011
      %v2091 = vunpack.c.l.b16 %v2012
      %v2092 = vunpack.c.h.b16 %v2012
      %v2093 = vunpack.c.l.b16 %v2013
      %v2094 = vunpack.c.l.b16 %v2014
      %v2095 = vunpack.c.h.b16 %v2014
      %v2096 = vunpack.c.l.b16 %v2015
      %v2097 = vunpack.c.l.b16 %v2016
      %v2098 = vunpack.c.h.b16 %v2016
      %v2099 = vunpack.c.l.b16 %v2017
      %v2100 = vunpack.c.l.b16 %v2018
      %v2101 = vunpack.c.h.b16 %v2018
      %v2102 = vunpack.c.l.b16 %v2019
      %v2103 = vpack.c.b16 %v2082, %v2079
      %v2104 = vpack.c.b16 %v2083, %v2080
      %v2105 = vpack.c.b16 %v2084, %v2081
      %v2106 = vpack.c.b16 %v2088, %v2085
      %v2107 = vpack.c.b16 %v2089, %v2086
      %v2108 = vpack.c.b16 %v2090, %v2087
      %v2109 = vpack.c.b16 %v2094, %v2091
      %v2110 = vpack.c.b16 %v2095, %v2092
      %v2111 = vpack.c.b16 %v2096, %v2093
      %v2112 = vpack.c.b16 %v2100, %v2097
      %v2113 = vpack.c.b16 %v2101, %v2098
      %v2114 = vpack.c.b16 %v2102, %v2099
      %v2159 = vunpack.c.l.b16 %v2020
      %v2160 = vunpack.c.l.b16 %v2021
      %v2161 = vunpack.c.l.b16 %v2022
      %v2162 = vunpack.c.l.b16 %v2023
      %v2163 = vunpack.c.l.b16 %v2024
      %v2164 = vunpack.c.l.b16 %v2025
      %v2165 = vunpack.c.l.b16 %v2026
      %v2166 = vunpack.c.l.b16 %v2027
      %v2167 = vunpack.c.l.b16 %v2028
      %v2168 = vunpack.c.l.b16 %v2029
      %v2169 = vunpack.c.l.b16 %v2030
      %v2170 = vunpack.c.l.b16 %v2031
      %v2171 = vunpack.c.l.b16 %v2032
      %v2172 = vunpack.c.l.b16 %v2033
      %v2173 = vunpack.c.l.b16 %v2034
      %v2174 = vunpack.c.l.b16 %v2035
      %v2175 = vunpack.c.l.b16 %v2036
      %v2176 = vunpack.c.l.b16 %v2037
      %v2177 = vunpack.c.l.b16 %v2038
      %v2178 = vunpack.c.l.b16 %v2039
      %v2179 = vunpack.c.l.b16 %v2040
      %v2180 = vunpack.c.l.b16 %v2041
      %v2181 = vunpack.c.l.b16 %v2042
      %v2182 = vunpack.c.l.b16 %v2043
      %v2183 = vunpack.c.l.b16 %v2044
      %v2184 = vunpack.c.l.b16 %v2045
      %v2185 = vunpack.c.l.b16 %v2046
      %v2186 = vunpack.c.l.b16 %v2047
      %v2187 = vunpack.c.l.b16 %v2048
      %v2188 = vunpack.c.l.b16 %v2049
      %v2189 = vunpack.c.l.b16 %v2050
      %v2190 = vunpack.c.l.b16 %v2051
      %v2191 = vunpack.c.l.b16 %v2052
      %v2192 = vunpack.c.l.b16 %v2053
      %v2193 = vunpack.c.l.b16 %v2054
      %v2194 = vunpack.c.l.b16 %v2055
      %v2195 = vpack.c.b16 %v2160, %v2159
      %v2196 = vpack.c.b16 %v2162, %v2161
      %v2197 = vpack.c.b16 %v2164, %v2163
      %v2198 = vpack.c.b16 %v2166, %v2165
      %v2199 = vpack.c.b16 %v2168, %v2167
      %v2200 = vpack.c.b16 %v2170, %v2169
      %v2201 = vpack.c.b16 %v2172, %v2171
      %v2202 = vpack.c.b16 %v2174, %v2173
      %v2203 = vpack.c.b16 %v2176, %v2175
      %v2204 = vpack.c.b16 %v2178, %v2177
      %v2205 = vpack.c.b16 %v2180, %v2179
      %v2206 = vpack.c.b16 %v2182, %v2181
      %v2207 = vpack.c.b16 %v2184, %v2183
      %v2208 = vpack.c.b16 %v2186, %v2185
      %v2209 = vpack.c.b16 %v2188, %v2187
      %v2210 = vpack.c.b16 %v2190, %v2189
      %v2211 = vpack.c.b16 %v2192, %v2191
      %v2212 = vpack.c.b16 %v2194, %v2193
      %v2232 = vsel %vm481, %v2105, 0
      %v2235 = vsel %vm481, %v2108, 0
      %v2238 = vsel %vm481, %v2111, 0
      %v2241 = vsel %vm481, %v2114, 0
      %2243 = vmatprep.subr.bf16.mxu0 0
      %2244 = vmatpush1.bf16.msra.mxu0 %v2202
      %2245 = vmatprep.subr.bf16.mxu0 0
      %2246 = vmatpush1.bf16.msra.mxu0 %v2201
      %2247 = vmatprep.subr.bf16.mxu0 0
      %2248 = vmatpush1.bf16.msra.mxu0 %v2200
      %2249 = vmatprep.subr.bf16.mxu0 0
      %2250 = vmatpush1.bf16.msra.mxu0 %v2199
      %2251 = vmatprep.subr.bf16.mxu0 0
      %2252 = vmatpush1.bf16.msra.mxu0 %v2198
      %2253 = vmatprep.subr.bf16.mxu0 0
      %2254 = vmatpush1.bf16.msra.mxu0 %v2197
      %2255 = vmatprep.subr.bf16.mxu0 0
      %2256 = vmatpush1.bf16.msra.mxu0 %v2196
      %2257 = vmatprep.subr.bf16.mxu0 0
      %2258 = vmatpush1.bf16.msra.mxu0 %v2195
      %2259 = vmatprep.subr.bf16.mxu0 0
      %2260 = vmatpush2.bf16.msra.mxu0 %v2210
      %2261 = vmatprep.subr.bf16.mxu0 0
      %2262 = vmatpush2.bf16.msra.mxu0 %v2209
      %2263 = vmatprep.subr.bf16.mxu0 0
      %2264 = vmatpush2.bf16.msra.mxu0 %v2208
      %2265 = vmatprep.subr.bf16.mxu0 0
      %2266 = vmatpush2.bf16.msra.mxu0 %v2207
      %2267 = vmatprep.subr.bf16.mxu0 0
      %2268 = vmatpush2.bf16.msra.mxu0 %v2206
      %2269 = vmatprep.subr.bf16.mxu0 0
      %2270 = vmatpush2.bf16.msra.mxu0 %v2205
      %2271 = vmatprep.subr.bf16.mxu0 0
      %2272 = vmatpush2.bf16.msra.mxu0 %v2204
      %2273 = vmatprep.subr.bf16.mxu0 0
      %2274 = vmatpush2.bf16.msra.mxu0 %v2203
      %2275 = vmatprep.mubr.bf16.mxu0 %v2104
      %2276 = vmatmul.mubr.bf16.gmra.mxu0 %v2103
      %v2277 = vpop.f32.mrf.mxu0
      %v2278 = vadd.f32 %v2061, %v2277
      %v2279 = vpop.f32.mrf.mxu0
      %v2280 = vpop.f32.mrf.mxu0
      %v2281 = vadd.f32 %v2061, %v2280
      %v2282 = vpop.f32.mrf.mxu0
      %2283 = vmatprep.mubr.bf16.mxu0 %v2107
      %2284 = vmatmul.mubr.bf16.gmra.mxu0 %v2106
      %v2285 = vpop.f32.mrf.mxu0
      %v2286 = vadd.f32 %v2061, %v2285
      %v2287 = vpop.f32.mrf.mxu0
      %v2288 = vpop.f32.mrf.mxu0
      %v2289 = vadd.f32 %v2061, %v2288
      %v2290 = vpop.f32.mrf.mxu0
      %2291 = vmatprep.mubr.bf16.mxu0 %v2110
      %2292 = vmatmul.mubr.bf16.gmra.mxu0 %v2109
      %v2293 = vpop.f32.mrf.mxu0
      %v2294 = vadd.f32 %v2061, %v2293
      %v2295 = vpop.f32.mrf.mxu0
      %v2296 = vpop.f32.mrf.mxu0
      %v2297 = vadd.f32 %v2061, %v2296
      %v2298 = vpop.f32.mrf.mxu0
      %2299 = vmatprep.mubr.bf16.mxu0 %v2113
      %2300 = vmatmul.mubr.bf16.gmra.mxu0 %v2112
      %v2301 = vpop.f32.mrf.mxu0
      %v2302 = vadd.f32 %v2061, %v2301
      %v2303 = vpop.f32.mrf.mxu0
      %v2304 = vpop.f32.mrf.mxu0
      %v2305 = vadd.f32 %v2061, %v2304
      %v2306 = vpop.f32.mrf.mxu0
      %2307 = vdwg.mxu0
      %2308 = vmatprep.subr.bf16.mxu0 0
      %2309 = vmatpush1.bf16.msra.mxu0 0
      %2310 = vmatprep.subr.bf16.mxu0 0
      %2311 = vmatpush1.bf16.msra.mxu0 0
      %2312 = vmatprep.subr.bf16.mxu0 0
      %2313 = vmatpush1.bf16.msra.mxu0 0
      %2314 = vmatprep.subr.bf16.mxu0 0
      %2315 = vmatpush1.bf16.msra.mxu0 0
      %2316 = vmatprep.subr.bf16.mxu0 0
      %2317 = vmatpush1.bf16.msra.mxu0 0
      %2318 = vmatprep.subr.bf16.mxu0 0
      %2319 = vmatpush1.bf16.msra.mxu0 0
      %2320 = vmatprep.subr.bf16.mxu0 0
      %2321 = vmatpush1.bf16.msra.mxu0 %v2212
      %2322 = vmatprep.subr.bf16.mxu0 0
      %2323 = vmatpush1.bf16.msra.mxu0 %v2211
      %2324 = vmatprep.subr.bf16.mxu0 0
      %2325 = vmatpush2.bf16.msra.mxu0 0
      %2326 = vmatprep.subr.bf16.mxu0 0
      %2327 = vmatpush2.bf16.msra.mxu0 0
      %2328 = vmatprep.subr.bf16.mxu0 0
      %2329 = vmatpush2.bf16.msra.mxu0 0
      %2330 = vmatprep.subr.bf16.mxu0 0
      %2331 = vmatpush2.bf16.msra.mxu0 0
      %2332 = vmatprep.subr.bf16.mxu0 0
      %2333 = vmatpush2.bf16.msra.mxu0 0
      %2334 = vmatprep.subr.bf16.mxu0 0
      %2335 = vmatpush2.bf16.msra.mxu0 0
      %2336 = vmatprep.subr.bf16.mxu0 0
      %2337 = vmatpush2.bf16.msra.mxu0 0
      %2338 = vmatprep.subr.bf16.mxu0 0
      %2339 = vmatpush2.bf16.msra.mxu0 0
      %2340 = vmatprep.mubr.bf16.mxu0 0
      %2341 = vmatmul.mubr.bf16.gmra.mxu0 %v2232
      %v2342 = vpop.f32.mrf.mxu0
      %v2343 = vadd.f32 %v2278, %v2342
      %v2344 = vpop.f32.mrf.mxu0
      %v2345 = vpop.f32.mrf.mxu0
      %v2346 = vadd.f32 %v2281, %v2345
      %v2347 = vpop.f32.mrf.mxu0
      %2348 = vmatprep.mubr.bf16.mxu0 0
      %2349 = vmatmul.mubr.bf16.gmra.mxu0 %v2235
      %v2350 = vpop.f32.mrf.mxu0
      %v2351 = vadd.f32 %v2286, %v2350
      %v2352 = vpop.f32.mrf.mxu0
      %v2353 = vpop.f32.mrf.mxu0
      %v2354 = vadd.f32 %v2289, %v2353
      %v2355 = vpop.f32.mrf.mxu0
      %2356 = vmatprep.mubr.bf16.mxu0 0
      %2357 = vmatmul.mubr.bf16.gmra.mxu0 %v2238
      %v2358 = vpop.f32.mrf.mxu0
      %v2359 = vadd.f32 %v2294, %v2358
      %v2360 = vpop.f32.mrf.mxu0
      %v2361 = vpop.f32.mrf.mxu0
      %v2362 = vadd.f32 %v2297, %v2361
      %v2363 = vpop.f32.mrf.mxu0
      %2364 = vmatprep.mubr.bf16.mxu0 0
      %2365 = vmatmul.mubr.bf16.gmra.mxu0 %v2241
      %v2366 = vpop.f32.mrf.mxu0
      %v2367 = vadd.f32 %v2302, %v2366
      %v2368 = vpop.f32.mrf.mxu0
      %v2369 = vpop.f32.mrf.mxu0
      %v2370 = vadd.f32 %v2305, %v2369
      %v2371 = vpop.f32.mrf.mxu0
      %2372 = vdwg.mxu0
      %vm2373 = vcmp.gt.f32.partialorder %v2343, 0.0
      %vm2374 = vcmp.gt.f32.partialorder %v2346, 0.0
      %vm2375 = vcmp.gt.f32.partialorder %v2351, 0.0
      %vm2376 = vcmp.gt.f32.partialorder %v2354, 0.0
      %vm2377 = vcmp.gt.f32.partialorder %v2359, 0.0
      %vm2378 = vcmp.gt.f32.partialorder %v2362, 0.0
      %vm2379 = vcmp.gt.f32.partialorder %v2367, 0.0
      %vm2380 = vcmp.gt.f32.partialorder %v2370, 0.0
      %v2381 = vmul.f32 %v2343, 0.01
      %v2382 = vmul.f32 %v2346, 0.01
      %v2383 = vmul.f32 %v2351, 0.01
      %v2384 = vmul.f32 %v2354, 0.01
      %v2385 = vmul.f32 %v2359, 0.01
      %v2386 = vmul.f32 %v2362, 0.01
      %v2387 = vmul.f32 %v2367, 0.01
      %v2388 = vmul.f32 %v2370, 0.01
      %v2389 = vsel %vm2373, %v2343, %v2381
      %v2390 = vsel %vm2374, %v2346, %v2382
      %v2391 = vsel %vm2375, %v2351, %v2383
      %v2392 = vsel %vm2376, %v2354, %v2384
      %v2393 = vsel %vm2377, %v2359, %v2385
      %v2394 = vsel %vm2378, %v2362, %v2386
      %v2395 = vsel %vm2379, %v2367, %v2387
      %v2396 = vsel %vm2380, %v2370, %v2388
      %v2397 = vld [vmem:[%s8] sm:$0xf]
      %v2398 = vld [vmem:[%s8 + $0x4] sm:$0xf]
      %v2399 = vld [vmem:[%s8 + $0x8] sm:$0xf]
      %v2400 = vld [vmem:[%s8 + $0xc] sm:$0xf]
      %v2401 = vpack.c.bf16 %v2390, %v2389
      %v2402 = vpack.c.bf16 %v2392, %v2391
      %v2403 = vpack.c.bf16 %v2394, %v2393
      %v2404 = vpack.c.bf16 %v2396, %v2395
      %v2409 = vunpack.c.l.b16 %v2397
      %v2410 = vunpack.c.l.b16 %v2398
      %v2411 = vunpack.c.l.b16 %v2399
      %v2412 = vunpack.c.l.b16 %v2400
      %v2413 = vpack.c.b16 %v2410, %v2409
      %v2414 = vpack.c.b16 %v2412, %v2411
      %v2418 = vsel %vm481, %v2401, 0
      %v2421 = vsel %vm481, %v2402, 0
      %v2424 = vsel %vm481, %v2403, 0
      %v2427 = vsel %vm481, %v2404, 0
      %2429 = vmatprep.subr.bf16.mxu0 0
      %2430 = vmatpush1.bf16.msra.mxu0 0
      %2431 = vmatprep.subr.bf16.mxu0 0
      %2432 = vmatpush1.bf16.msra.mxu0 0
      %2433 = vmatprep.subr.bf16.mxu0 0
      %2434 = vmatpush1.bf16.msra.mxu0 0
      %2435 = vmatprep.subr.bf16.mxu0 0
      %2436 = vmatpush1.bf16.msra.mxu0 0
      %2437 = vmatprep.subr.bf16.mxu0 0
      %2438 = vmatpush1.bf16.msra.mxu0 0
      %2439 = vmatprep.subr.bf16.mxu0 0
      %2440 = vmatpush1.bf16.msra.mxu0 0
      %2441 = vmatprep.subr.bf16.mxu0 0
      %2442 = vmatpush1.bf16.msra.mxu0 %v2414
      %2443 = vmatprep.subr.bf16.mxu0 0
      %2444 = vmatpush1.bf16.msra.mxu0 %v2413
      %2445 = vmatprep.subr.bf16.mxu0 0
      %2446 = vmatpush2.bf16.msra.mxu0 0
      %2447 = vmatprep.subr.bf16.mxu0 0
      %2448 = vmatpush2.bf16.msra.mxu0 0
      %2449 = vmatprep.subr.bf16.mxu0 0
      %2450 = vmatpush2.bf16.msra.mxu0 0
      %2451 = vmatprep.subr.bf16.mxu0 0
      %2452 = vmatpush2.bf16.msra.mxu0 0
      %2453 = vmatprep.subr.bf16.mxu0 0
      %2454 = vmatpush2.bf16.msra.mxu0 0
      %2455 = vmatprep.subr.bf16.mxu0 0
      %2456 = vmatpush2.bf16.msra.mxu0 0
      %2457 = vmatprep.subr.bf16.mxu0 0
      %2458 = vmatpush2.bf16.msra.mxu0 0
      %2459 = vmatprep.subr.bf16.mxu0 0
      %2460 = vmatpush2.bf16.msra.mxu0 0
      %2461 = vmatprep.mubr.bf16.mxu0 0
      %2462 = vmatmul.mubr.bf16.gmra.mxu0 %v2418
      %v2463 = vpop.f32.mrf.mxu0
      %v2464 = vadd.f32 0.0, %v2463
      %v2465 = vpop.f32.mrf.mxu0
      %v2466 = vpop.f32.mrf.mxu0
      %v2467 = vadd.f32 0.0, %v2466
      %v2468 = vpop.f32.mrf.mxu0
      %2469 = vmatprep.mubr.bf16.mxu0 0
      %2470 = vmatmul.mubr.bf16.gmra.mxu0 %v2421
      %v2471 = vpop.f32.mrf.mxu0
      %v2472 = vadd.f32 0.0, %v2471
      %v2473 = vpop.f32.mrf.mxu0
      %v2474 = vpop.f32.mrf.mxu0
      %v2475 = vadd.f32 0.0, %v2474
      %v2476 = vpop.f32.mrf.mxu0
      %2477 = vmatprep.mubr.bf16.mxu0 0
      %2478 = vmatmul.mubr.bf16.gmra.mxu0 %v2424
      %v2479 = vpop.f32.mrf.mxu0
      %v2480 = vadd.f32 0.0, %v2479
      %v2481 = vpop.f32.mrf.mxu0
      %v2482 = vpop.f32.mrf.mxu0
      %v2483 = vadd.f32 0.0, %v2482
      %v2484 = vpop.f32.mrf.mxu0
      %2485 = vmatprep.mubr.bf16.mxu0 0
      %2486 = vmatmul.mubr.bf16.gmra.mxu0 %v2427
      %v2487 = vpop.f32.mrf.mxu0
      %v2488 = vadd.f32 0.0, %v2487
      %v2489 = vpop.f32.mrf.mxu0
      %v2490 = vpop.f32.mrf.mxu0
      %v2491 = vadd.f32 0.0, %v2490
      %v2492 = vpop.f32.mrf.mxu0
      %2493 = vdwg.mxu0
      %2502 = vrot.lane.b32.xlu0 %v2464, 32
      %v2503 = vpop.permute.xlu0 %2502
      %2504 = vrot.lane.b32.xlu0 %v2467, 32
      %v2505 = vpop.permute.xlu0 %2504
      %2506 = vrot.lane.b32.xlu0 %v2472, 32
      %v2507 = vpop.permute.xlu0 %2506
      %2508 = vrot.lane.b32.xlu0 %v2475, 32
      %v2509 = vpop.permute.xlu0 %2508
      %2510 = vrot.lane.b32.xlu0 %v2480, 32
      %v2511 = vpop.permute.xlu0 %2510
      %2512 = vrot.lane.b32.xlu0 %v2483, 32
      %v2513 = vpop.permute.xlu0 %2512
      %2514 = vrot.lane.b32.xlu0 %v2488, 32
      %v2515 = vpop.permute.xlu0 %2514
      %2516 = vrot.lane.b32.xlu0 %v2491, 32
      %v2517 = vpop.permute.xlu0 %2516
      %v2526 = vadd.f32 %v1439, %v2503
      %v2527 = vadd.f32 %v1440, %v2505
      %v2528 = vadd.f32 %v1441, %v2507
      %v2529 = vadd.f32 %v1442, %v2509
      %v2530 = vadd.f32 %v1443, %v2511
      %v2531 = vadd.f32 %v1444, %v2513
      %v2532 = vadd.f32 %v1445, %v2515
      %v2533 = vadd.f32 %v1446, %v2517
      %v2534 = vld [vmem:[%s9] sm:$0x1]
      %v2536 = vlaneseq
      %v2537 = vshrl.u32 %v2536, 7
      %v2538 = vsub.s32 0, %v2537
      %v2539 = vrot.slane %v2534, %v2538
      %2540 = vrot.lane.b32.xlu0 %v2539, 32
      %v2541 = vpop.permute.xlu0 %2540
      %v2543 = vadd.f32 %v2526, %v2541
      %v2544 = vadd.f32 %v2527, %v2541
      %v2545 = vadd.f32 %v2528, %v2541
      %v2546 = vadd.f32 %v2529, %v2541
      %v2547 = vadd.f32 %v2530, %v2541
      %v2548 = vadd.f32 %v2531, %v2541
      %v2549 = vadd.f32 %v2532, %v2541
      %v2550 = vadd.f32 %v2533, %v2541
      %2559 = vrot.lane.b32.xlu0 %v2543, 96
      %v2560 = vpop.permute.xlu0 %2559
      %2561 = vrot.lane.b32.xlu0 %v2544, 96
      %v2562 = vpop.permute.xlu0 %2561
      %2563 = vrot.lane.b32.xlu0 %v2545, 96
      %v2564 = vpop.permute.xlu0 %2563
      %2565 = vrot.lane.b32.xlu0 %v2546, 96
      %v2566 = vpop.permute.xlu0 %2565
      %2567 = vrot.lane.b32.xlu0 %v2547, 96
      %v2568 = vpop.permute.xlu0 %2567
      %2569 = vrot.lane.b32.xlu0 %v2548, 96
      %v2570 = vpop.permute.xlu0 %2569
      %2571 = vrot.lane.b32.xlu0 %v2549, 96
      %v2572 = vpop.permute.xlu0 %2571
      %2573 = vrot.lane.b32.xlu0 %v2550, 96
      %v2574 = vpop.permute.xlu0 %2573
      %2583 = vst.msk [vmem:[%s1462 + $0x1] sm:$0xff] %vm481, %v2560
      %2584 = vst.msk [vmem:[%s1462 + $0x11] sm:$0xff] %vm481, %v2562
      %2585 = vst.msk [vmem:[%s1462 + $0x21] sm:$0xff] %vm481, %v2564
      %2586 = vst.msk [vmem:[%s1462 + $0x31] sm:$0xff] %vm481, %v2566
      %2587 = vst.msk [vmem:[%s1462 + $0x41] sm:$0xff] %vm481, %v2568
      %2588 = vst.msk [vmem:[%s1462 + $0x51] sm:$0xff] %vm481, %v2570
      %2589 = vst.msk [vmem:[%s1462 + $0x61] sm:$0xff] %vm481, %v2572
      %2590 = vst.msk [vmem:[%s1462 + $0x71] sm:$0xff] %vm481, %v2574
      %v2591 = vld [vmem:[#allocation3] sm:$0xff]
      %v2592 = vld [vmem:[#allocation3 + $0x10] sm:$0xff]
      %v2593 = vld [vmem:[#allocation3 + $0x20] sm:$0xff]
      %v2594 = vld [vmem:[#allocation3 + $0x30] sm:$0xff]
      %v2595 = vld [vmem:[#allocation3 + $0x40] sm:$0xff]
      %v2596 = vld [vmem:[#allocation3 + $0x50] sm:$0xff]
      %v2597 = vld [vmem:[#allocation3 + $0x60] sm:$0xff]
      %v2598 = vld [vmem:[#allocation3 + $0x70] sm:$0xff]
      %v2599 = vpack.c.bf16 %v2592, %v2591
      %v2600 = vpack.c.bf16 %v2594, %v2593
      %v2601 = vpack.c.bf16 %v2596, %v2595
      %v2602 = vpack.c.bf16 %v2598, %v2597
      %v2607 = vunpack.c.l.b16 %v2599
      %v2608 = vunpack.c.h.b16 %v2599
      %v2609 = vunpack.c.l.b16 %v2600
      %v2610 = vunpack.c.h.b16 %v2600
      %v2611 = vunpack.c.l.b16 %v2601
      %v2612 = vunpack.c.h.b16 %v2601
      %v2613 = vunpack.c.l.b16 %v2602
      %v2614 = vunpack.c.h.b16 %v2602
      %v2615 = vpack.c.b16 %v2607, %v2607
      %v2616 = vpack.c.b16 %v2608, %v2608
      %v2617 = vpack.c.b16 %v2609, %v2609
      %v2618 = vpack.c.b16 %v2610, %v2610
      %v2619 = vpack.c.b16 %v2611, %v2611
      %v2620 = vpack.c.b16 %v2612, %v2612
      %v2621 = vpack.c.b16 %v2613, %v2613
      %v2622 = vpack.c.b16 %v2614, %v2614
      %2631 = vst.msk [vmem:[#allocation5] sm:$0xf] %vm1511, %v2615
      %2632 = vst.msk [vmem:[#allocation5 + $0xc] sm:$0xf] %vm1511, %v2616
      %2633 = vst.msk [vmem:[#allocation5 + $0x18] sm:$0xf] %vm1511, %v2617
      %2634 = vst.msk [vmem:[#allocation5 + $0x24] sm:$0xf] %vm1511, %v2618
      %2635 = vst.msk [vmem:[#allocation5 + $0x30] sm:$0xf] %vm1511, %v2619
      %2636 = vst.msk [vmem:[#allocation5 + $0x3c] sm:$0xf] %vm1511, %v2620
      %2637 = vst.msk [vmem:[#allocation5 + $0x48] sm:$0xf] %vm1511, %v2621
      %2638 = vst.msk [vmem:[#allocation5 + $0x54] sm:$0xf] %vm1511, %v2622
      %v2639 = vld [vmem:[#allocation3 + $0x1] sm:$0xff]
      %v2640 = vld [vmem:[#allocation3 + $0x11] sm:$0xff]
      %v2641 = vld [vmem:[#allocation3 + $0x21] sm:$0xff]
      %v2642 = vld [vmem:[#allocation3 + $0x31] sm:$0xff]
      %v2643 = vld [vmem:[#allocation3 + $0x41] sm:$0xff]
      %v2644 = vld [vmem:[#allocation3 + $0x51] sm:$0xff]
      %v2645 = vld [vmem:[#allocation3 + $0x61] sm:$0xff]
      %v2646 = vld [vmem:[#allocation3 + $0x71] sm:$0xff]
      %v2647 = vpack.c.bf16 %v2640, %v2639
      %v2648 = vpack.c.bf16 %v2642, %v2641
      %v2649 = vpack.c.bf16 %v2644, %v2643
      %v2650 = vpack.c.bf16 %v2646, %v2645
      %v2655 = vunpack.c.l.b16 %v2647
      %v2656 = vunpack.c.h.b16 %v2647
      %v2657 = vunpack.c.l.b16 %v2648
      %v2658 = vunpack.c.h.b16 %v2648
      %v2659 = vunpack.c.l.b16 %v2649
      %v2660 = vunpack.c.h.b16 %v2649
      %v2661 = vunpack.c.l.b16 %v2650
      %v2662 = vunpack.c.h.b16 %v2650
      %v2663 = vpack.c.b16 %v2655, %v2655
      %v2664 = vpack.c.b16 %v2656, %v2656
      %v2665 = vpack.c.b16 %v2657, %v2657
      %v2666 = vpack.c.b16 %v2658, %v2658
      %v2667 = vpack.c.b16 %v2659, %v2659
      %v2668 = vpack.c.b16 %v2660, %v2660
      %v2669 = vpack.c.b16 %v2661, %v2661
      %v2670 = vpack.c.b16 %v2662, %v2662
      %2671 = vrot.lane.b32.xlu0 %v2663, 32
      %v2672 = vpop.permute.xlu0 %2671
      %2673 = vrot.lane.b32.xlu0 %v2664, 32
      %v2674 = vpop.permute.xlu0 %2673
      %2675 = vrot.lane.b32.xlu0 %v2665, 32
      %v2676 = vpop.permute.xlu0 %2675
      %2677 = vrot.lane.b32.xlu0 %v2666, 32
      %v2678 = vpop.permute.xlu0 %2677
      %2679 = vrot.lane.b32.xlu0 %v2667, 32
      %v2680 = vpop.permute.xlu0 %2679
      %2681 = vrot.lane.b32.xlu0 %v2668, 32
      %v2682 = vpop.permute.xlu0 %2681
      %2683 = vrot.lane.b32.xlu0 %v2669, 32
      %v2684 = vpop.permute.xlu0 %2683
      %2685 = vrot.lane.b32.xlu0 %v2670, 32
      %v2686 = vpop.permute.xlu0 %2685
      %2695 = vst.msk [vmem:[#allocation5] sm:$0xf] %vm1576, %v2672
      %2696 = vst.msk [vmem:[#allocation5 + $0xc] sm:$0xf] %vm1576, %v2674
      %2697 = vst.msk [vmem:[#allocation5 + $0x18] sm:$0xf] %vm1576, %v2676
      %2698 = vst.msk [vmem:[#allocation5 + $0x24] sm:$0xf] %vm1576, %v2678
      %2699 = vst.msk [vmem:[#allocation5 + $0x30] sm:$0xf] %vm1576, %v2680
      %2700 = vst.msk [vmem:[#allocation5 + $0x3c] sm:$0xf] %vm1576, %v2682
      %2701 = vst.msk [vmem:[#allocation5 + $0x48] sm:$0xf] %vm1576, %v2684
      %2702 = vst.msk [vmem:[#allocation5 + $0x54] sm:$0xf] %vm1576, %v2686
      %v2703 = vld [vmem:[#allocation3 + $0x2] sm:$0xff]
      %v2704 = vld [vmem:[#allocation3 + $0x12] sm:$0xff]
      %v2705 = vld [vmem:[#allocation3 + $0x22] sm:$0xff]
      %v2706 = vld [vmem:[#allocation3 + $0x32] sm:$0xff]
      %v2707 = vld [vmem:[#allocation3 + $0x42] sm:$0xff]
      %v2708 = vld [vmem:[#allocation3 + $0x52] sm:$0xff]
      %v2709 = vld [vmem:[#allocation3 + $0x62] sm:$0xff]
      %v2710 = vld [vmem:[#allocation3 + $0x72] sm:$0xff]
      %v2711 = vpack.c.bf16 %v2704, %v2703
      %v2712 = vpack.c.bf16 %v2706, %v2705
      %v2713 = vpack.c.bf16 %v2708, %v2707
      %v2714 = vpack.c.bf16 %v2710, %v2709
      %v2719 = vunpack.c.l.b16 %v2711
      %v2720 = vunpack.c.h.b16 %v2711
      %v2721 = vunpack.c.l.b16 %v2712
      %v2722 = vunpack.c.h.b16 %v2712
      %v2723 = vunpack.c.l.b16 %v2713
      %v2724 = vunpack.c.h.b16 %v2713
      %v2725 = vunpack.c.l.b16 %v2714
      %v2726 = vunpack.c.h.b16 %v2714
      %v2727 = vpack.c.b16 %v2719, %v2719
      %v2728 = vpack.c.b16 %v2720, %v2720
      %v2729 = vpack.c.b16 %v2721, %v2721
      %v2730 = vpack.c.b16 %v2722, %v2722
      %v2731 = vpack.c.b16 %v2723, %v2723
      %v2732 = vpack.c.b16 %v2724, %v2724
      %v2733 = vpack.c.b16 %v2725, %v2725
      %v2734 = vpack.c.b16 %v2726, %v2726
      %2735 = vrot.lane.b32.xlu0 %v2727, 64
      %v2736 = vpop.permute.xlu0 %2735
      %2737 = vrot.lane.b32.xlu0 %v2728, 64
      %v2738 = vpop.permute.xlu0 %2737
      %2739 = vrot.lane.b32.xlu0 %v2729, 64
      %v2740 = vpop.permute.xlu0 %2739
      %2741 = vrot.lane.b32.xlu0 %v2730, 64
      %v2742 = vpop.permute.xlu0 %2741
      %2743 = vrot.lane.b32.xlu0 %v2731, 64
      %v2744 = vpop.permute.xlu0 %2743
      %2745 = vrot.lane.b32.xlu0 %v2732, 64
      %v2746 = vpop.permute.xlu0 %2745
      %2747 = vrot.lane.b32.xlu0 %v2733, 64
      %v2748 = vpop.permute.xlu0 %2747
      %2749 = vrot.lane.b32.xlu0 %v2734, 64
      %v2750 = vpop.permute.xlu0 %2749
      %2759 = vst.msk [vmem:[#allocation5] sm:$0xf] %vm1641, %v2736
      %2760 = vst.msk [vmem:[#allocation5 + $0xc] sm:$0xf] %vm1641, %v2738
      %2761 = vst.msk [vmem:[#allocation5 + $0x18] sm:$0xf] %vm1641, %v2740
      %2762 = vst.msk [vmem:[#allocation5 + $0x24] sm:$0xf] %vm1641, %v2742
      %2763 = vst.msk [vmem:[#allocation5 + $0x30] sm:$0xf] %vm1641, %v2744
      %2764 = vst.msk [vmem:[#allocation5 + $0x3c] sm:$0xf] %vm1641, %v2746
      %2765 = vst.msk [vmem:[#allocation5 + $0x48] sm:$0xf] %vm1641, %v2748
      %2766 = vst.msk [vmem:[#allocation5 + $0x54] sm:$0xf] %vm1641, %v2750
      %v2767 = vld [vmem:[%s1462] sm:$0xff]
      %v2768 = vld [vmem:[%s1462 + $0x10] sm:$0xff]
      %v2769 = vld [vmem:[%s1462 + $0x20] sm:$0xff]
      %v2770 = vld [vmem:[%s1462 + $0x30] sm:$0xff]
      %v2771 = vld [vmem:[%s1462 + $0x40] sm:$0xff]
      %v2772 = vld [vmem:[%s1462 + $0x50] sm:$0xff]
      %v2773 = vld [vmem:[%s1462 + $0x60] sm:$0xff]
      %v2774 = vld [vmem:[%s1462 + $0x70] sm:$0xff]
      %v2775 = vpack.c.bf16 %v2768, %v2767
      %v2776 = vpack.c.bf16 %v2770, %v2769
      %v2777 = vpack.c.bf16 %v2772, %v2771
      %v2778 = vpack.c.bf16 %v2774, %v2773
      %v2783 = vunpack.c.l.b16 %v2775
      %v2784 = vunpack.c.h.b16 %v2775
      %v2785 = vunpack.c.l.b16 %v2776
      %v2786 = vunpack.c.h.b16 %v2776
      %v2787 = vunpack.c.l.b16 %v2777
      %v2788 = vunpack.c.h.b16 %v2777
      %v2789 = vunpack.c.l.b16 %v2778
      %v2790 = vunpack.c.h.b16 %v2778
      %v2791 = vpack.c.b16 %v2783, %v2783
      %v2792 = vpack.c.b16 %v2784, %v2784
      %v2793 = vpack.c.b16 %v2785, %v2785
      %v2794 = vpack.c.b16 %v2786, %v2786
      %v2795 = vpack.c.b16 %v2787, %v2787
      %v2796 = vpack.c.b16 %v2788, %v2788
      %v2797 = vpack.c.b16 %v2789, %v2789
      %v2798 = vpack.c.b16 %v2790, %v2790
      %2799 = vrot.lane.b32.xlu0 %v2791, 96
      %v2800 = vpop.permute.xlu0 %2799
      %2801 = vrot.lane.b32.xlu0 %v2792, 96
      %v2802 = vpop.permute.xlu0 %2801
      %2803 = vrot.lane.b32.xlu0 %v2793, 96
      %v2804 = vpop.permute.xlu0 %2803
      %2805 = vrot.lane.b32.xlu0 %v2794, 96
      %v2806 = vpop.permute.xlu0 %2805
      %2807 = vrot.lane.b32.xlu0 %v2795, 96
      %v2808 = vpop.permute.xlu0 %2807
      %2809 = vrot.lane.b32.xlu0 %v2796, 96
      %v2810 = vpop.permute.xlu0 %2809
      %2811 = vrot.lane.b32.xlu0 %v2797, 96
      %v2812 = vpop.permute.xlu0 %2811
      %2813 = vrot.lane.b32.xlu0 %v2798, 96
      %v2814 = vpop.permute.xlu0 %2813
      %2823 = vst.msk [vmem:[#allocation5] sm:$0xf] %vm1706, %v2800
      %2824 = vst.msk [vmem:[#allocation5 + $0xc] sm:$0xf] %vm1706, %v2802
      %2825 = vst.msk [vmem:[#allocation5 + $0x18] sm:$0xf] %vm1706, %v2804
      %2826 = vst.msk [vmem:[#allocation5 + $0x24] sm:$0xf] %vm1706, %v2806
      %2827 = vst.msk [vmem:[#allocation5 + $0x30] sm:$0xf] %vm1706, %v2808
      %2828 = vst.msk [vmem:[#allocation5 + $0x3c] sm:$0xf] %vm1706, %v2810
      %2829 = vst.msk [vmem:[#allocation5 + $0x48] sm:$0xf] %vm1706, %v2812
      %2830 = vst.msk [vmem:[#allocation5 + $0x54] sm:$0xf] %vm1706, %v2814
      %v2831 = vld [vmem:[%s1462 + $0x1] sm:$0xff]
      %v2832 = vld [vmem:[%s1462 + $0x11] sm:$0xff]
      %v2833 = vld [vmem:[%s1462 + $0x21] sm:$0xff]
      %v2834 = vld [vmem:[%s1462 + $0x31] sm:$0xff]
      %v2835 = vld [vmem:[%s1462 + $0x41] sm:$0xff]
      %v2836 = vld [vmem:[%s1462 + $0x51] sm:$0xff]
      %v2837 = vld [vmem:[%s1462 + $0x61] sm:$0xff]
      %v2838 = vld [vmem:[%s1462 + $0x71] sm:$0xff]
      %v2839 = vpack.c.bf16 %v2832, %v2831
      %v2840 = vpack.c.bf16 %v2834, %v2833
      %v2841 = vpack.c.bf16 %v2836, %v2835
      %v2842 = vpack.c.bf16 %v2838, %v2837
      %v2847 = vunpack.c.l.b16 %v2839
      %v2848 = vunpack.c.h.b16 %v2839
      %v2849 = vunpack.c.l.b16 %v2840
      %v2850 = vunpack.c.h.b16 %v2840
      %v2851 = vunpack.c.l.b16 %v2841
      %v2852 = vunpack.c.h.b16 %v2841
      %v2853 = vunpack.c.l.b16 %v2842
      %v2854 = vunpack.c.h.b16 %v2842
      %v2855 = vpack.c.b16 %v2847, %v2847
      %v2856 = vpack.c.b16 %v2848, %v2848
      %v2857 = vpack.c.b16 %v2849, %v2849
      %v2858 = vpack.c.b16 %v2850, %v2850
      %v2859 = vpack.c.b16 %v2851, %v2851
      %v2860 = vpack.c.b16 %v2852, %v2852
      %v2861 = vpack.c.b16 %v2853, %v2853
      %v2862 = vpack.c.b16 %v2854, %v2854
      %2871 = vst.msk [vmem:[#allocation5 + $0x4] sm:$0xf] %vm1511, %v2855
      %2872 = vst.msk [vmem:[#allocation5 + $0x10] sm:$0xf] %vm1511, %v2856
      %2873 = vst.msk [vmem:[#allocation5 + $0x1c] sm:$0xf] %vm1511, %v2857
      %2874 = vst.msk [vmem:[#allocation5 + $0x28] sm:$0xf] %vm1511, %v2858
      %2875 = vst.msk [vmem:[#allocation5 + $0x34] sm:$0xf] %vm1511, %v2859
      %2876 = vst.msk [vmem:[#allocation5 + $0x40] sm:$0xf] %vm1511, %v2860
      %2877 = vst.msk [vmem:[#allocation5 + $0x4c] sm:$0xf] %vm1511, %v2861
      %2878 = vst.msk [vmem:[#allocation5 + $0x58] sm:$0xf] %vm1511, %v2862
      %v2879 = vld [vmem:[%s1462 + $0x2] sm:$0xff]
      %v2880 = vld [vmem:[%s1462 + $0x12] sm:$0xff]
      %v2881 = vld [vmem:[%s1462 + $0x22] sm:$0xff]
      %v2882 = vld [vmem:[%s1462 + $0x32] sm:$0xff]
      %v2883 = vld [vmem:[%s1462 + $0x42] sm:$0xff]
      %v2884 = vld [vmem:[%s1462 + $0x52] sm:$0xff]
      %v2885 = vld [vmem:[%s1462 + $0x62] sm:$0xff]
      %v2886 = vld [vmem:[%s1462 + $0x72] sm:$0xff]
      %v2887 = vpack.c.bf16 %v2880, %v2879
      %v2888 = vpack.c.bf16 %v2882, %v2881
      %v2889 = vpack.c.bf16 %v2884, %v2883
      %v2890 = vpack.c.bf16 %v2886, %v2885
      %v2895 = vunpack.c.l.b16 %v2887
      %v2896 = vunpack.c.h.b16 %v2887
      %v2897 = vunpack.c.l.b16 %v2888
      %v2898 = vunpack.c.h.b16 %v2888
      %v2899 = vunpack.c.l.b16 %v2889
      %v2900 = vunpack.c.h.b16 %v2889
      %v2901 = vunpack.c.l.b16 %v2890
      %v2902 = vunpack.c.h.b16 %v2890
      %v2903 = vpack.c.b16 %v2895, %v2895
      %v2904 = vpack.c.b16 %v2896, %v2896
      %v2905 = vpack.c.b16 %v2897, %v2897
      %v2906 = vpack.c.b16 %v2898, %v2898
      %v2907 = vpack.c.b16 %v2899, %v2899
      %v2908 = vpack.c.b16 %v2900, %v2900
      %v2909 = vpack.c.b16 %v2901, %v2901
      %v2910 = vpack.c.b16 %v2902, %v2902
      %2911 = vrot.lane.b32.xlu0 %v2903, 32
      %v2912 = vpop.permute.xlu0 %2911
      %2913 = vrot.lane.b32.xlu0 %v2904, 32
      %v2914 = vpop.permute.xlu0 %2913
      %2915 = vrot.lane.b32.xlu0 %v2905, 32
      %v2916 = vpop.permute.xlu0 %2915
      %2917 = vrot.lane.b32.xlu0 %v2906, 32
      %v2918 = vpop.permute.xlu0 %2917
      %2919 = vrot.lane.b32.xlu0 %v2907, 32
      %v2920 = vpop.permute.xlu0 %2919
      %2921 = vrot.lane.b32.xlu0 %v2908, 32
      %v2922 = vpop.permute.xlu0 %2921
      %2923 = vrot.lane.b32.xlu0 %v2909, 32
      %v2924 = vpop.permute.xlu0 %2923
      %2925 = vrot.lane.b32.xlu0 %v2910, 32
      %v2926 = vpop.permute.xlu0 %2925
      %2935 = vst.msk [vmem:[#allocation5 + $0x4] sm:$0xf] %vm1576, %v2912
      %2936 = vst.msk [vmem:[#allocation5 + $0x10] sm:$0xf] %vm1576, %v2914
      %2937 = vst.msk [vmem:[#allocation5 + $0x1c] sm:$0xf] %vm1576, %v2916
      %2938 = vst.msk [vmem:[#allocation5 + $0x28] sm:$0xf] %vm1576, %v2918
      %2939 = vst.msk [vmem:[#allocation5 + $0x34] sm:$0xf] %vm1576, %v2920
      %2940 = vst.msk [vmem:[#allocation5 + $0x40] sm:$0xf] %vm1576, %v2922
      %2941 = vst.msk [vmem:[#allocation5 + $0x4c] sm:$0xf] %vm1576, %v2924
      %2942 = vst.msk [vmem:[#allocation5 + $0x58] sm:$0xf] %vm1576, %v2926
      %v2943 = vld [vmem:[%s1827] sm:$0xff]
      %v2944 = vld [vmem:[%s1827 + $0x10] sm:$0xff]
      %v2945 = vld [vmem:[%s1827 + $0x20] sm:$0xff]
      %v2946 = vld [vmem:[%s1827 + $0x30] sm:$0xff]
      %v2947 = vld [vmem:[%s1827 + $0x40] sm:$0xff]
      %v2948 = vld [vmem:[%s1827 + $0x50] sm:$0xff]
      %v2949 = vld [vmem:[%s1827 + $0x60] sm:$0xff]
      %v2950 = vld [vmem:[%s1827 + $0x70] sm:$0xff]
      %v2951 = vpack.c.bf16 %v2944, %v2943
      %v2952 = vpack.c.bf16 %v2946, %v2945
      %v2953 = vpack.c.bf16 %v2948, %v2947
      %v2954 = vpack.c.bf16 %v2950, %v2949
      %v2959 = vunpack.c.l.b16 %v2951
      %v2960 = vunpack.c.h.b16 %v2951
      %v2961 = vunpack.c.l.b16 %v2952
      %v2962 = vunpack.c.h.b16 %v2952
      %v2963 = vunpack.c.l.b16 %v2953
      %v2964 = vunpack.c.h.b16 %v2953
      %v2965 = vunpack.c.l.b16 %v2954
      %v2966 = vunpack.c.h.b16 %v2954
      %v2967 = vpack.c.b16 %v2959, %v2959
      %v2968 = vpack.c.b16 %v2960, %v2960
      %v2969 = vpack.c.b16 %v2961, %v2961
      %v2970 = vpack.c.b16 %v2962, %v2962
      %v2971 = vpack.c.b16 %v2963, %v2963
      %v2972 = vpack.c.b16 %v2964, %v2964
      %v2973 = vpack.c.b16 %v2965, %v2965
      %v2974 = vpack.c.b16 %v2966, %v2966
      %2975 = vrot.lane.b32.xlu0 %v2967, 64
      %v2976 = vpop.permute.xlu0 %2975
      %2977 = vrot.lane.b32.xlu0 %v2968, 64
      %v2978 = vpop.permute.xlu0 %2977
      %2979 = vrot.lane.b32.xlu0 %v2969, 64
      %v2980 = vpop.permute.xlu0 %2979
      %2981 = vrot.lane.b32.xlu0 %v2970, 64
      %v2982 = vpop.permute.xlu0 %2981
      %2983 = vrot.lane.b32.xlu0 %v2971, 64
      %v2984 = vpop.permute.xlu0 %2983
      %2985 = vrot.lane.b32.xlu0 %v2972, 64
      %v2986 = vpop.permute.xlu0 %2985
      %2987 = vrot.lane.b32.xlu0 %v2973, 64
      %v2988 = vpop.permute.xlu0 %2987
      %2989 = vrot.lane.b32.xlu0 %v2974, 64
      %v2990 = vpop.permute.xlu0 %2989
      %2999 = vst.msk [vmem:[#allocation5 + $0x4] sm:$0xf] %vm1641, %v2976
      %3000 = vst.msk [vmem:[#allocation5 + $0x10] sm:$0xf] %vm1641, %v2978
      %3001 = vst.msk [vmem:[#allocation5 + $0x1c] sm:$0xf] %vm1641, %v2980
      %3002 = vst.msk [vmem:[#allocation5 + $0x28] sm:$0xf] %vm1641, %v2982
      %3003 = vst.msk [vmem:[#allocation5 + $0x34] sm:$0xf] %vm1641, %v2984
      %3004 = vst.msk [vmem:[#allocation5 + $0x40] sm:$0xf] %vm1641, %v2986
      %3005 = vst.msk [vmem:[#allocation5 + $0x4c] sm:$0xf] %vm1641, %v2988
      %3006 = vst.msk [vmem:[#allocation5 + $0x58] sm:$0xf] %vm1641, %v2990
      %v3007 = vld [vmem:[%s1827 + $0x1] sm:$0xff]
      %v3008 = vld [vmem:[%s1827 + $0x11] sm:$0xff]
      %v3009 = vld [vmem:[%s1827 + $0x21] sm:$0xff]
      %v3010 = vld [vmem:[%s1827 + $0x31] sm:$0xff]
      %v3011 = vld [vmem:[%s1827 + $0x41] sm:$0xff]
      %v3012 = vld [vmem:[%s1827 + $0x51] sm:$0xff]
      %v3013 = vld [vmem:[%s1827 + $0x61] sm:$0xff]
      %v3014 = vld [vmem:[%s1827 + $0x71] sm:$0xff]
      %v3015 = vpack.c.bf16 %v3008, %v3007
      %v3016 = vpack.c.bf16 %v3010, %v3009
      %v3017 = vpack.c.bf16 %v3012, %v3011
      %v3018 = vpack.c.bf16 %v3014, %v3013
      %v3023 = vunpack.c.l.b16 %v3015
      %v3024 = vunpack.c.h.b16 %v3015
      %v3025 = vunpack.c.l.b16 %v3016
      %v3026 = vunpack.c.h.b16 %v3016
      %v3027 = vunpack.c.l.b16 %v3017
      %v3028 = vunpack.c.h.b16 %v3017
      %v3029 = vunpack.c.l.b16 %v3018
      %v3030 = vunpack.c.h.b16 %v3018
      %v3031 = vpack.c.b16 %v3023, %v3023
      %v3032 = vpack.c.b16 %v3024, %v3024
      %v3033 = vpack.c.b16 %v3025, %v3025
      %v3034 = vpack.c.b16 %v3026, %v3026
      %v3035 = vpack.c.b16 %v3027, %v3027
      %v3036 = vpack.c.b16 %v3028, %v3028
      %v3037 = vpack.c.b16 %v3029, %v3029
      %v3038 = vpack.c.b16 %v3030, %v3030
      %3039 = vrot.lane.b32.xlu0 %v3031, 96
      %v3040 = vpop.permute.xlu0 %3039
      %3041 = vrot.lane.b32.xlu0 %v3032, 96
      %v3042 = vpop.permute.xlu0 %3041
      %3043 = vrot.lane.b32.xlu0 %v3033, 96
      %v3044 = vpop.permute.xlu0 %3043
      %3045 = vrot.lane.b32.xlu0 %v3034, 96
      %v3046 = vpop.permute.xlu0 %3045
      %3047 = vrot.lane.b32.xlu0 %v3035, 96
      %v3048 = vpop.permute.xlu0 %3047
      %3049 = vrot.lane.b32.xlu0 %v3036, 96
      %v3050 = vpop.permute.xlu0 %3049
      %3051 = vrot.lane.b32.xlu0 %v3037, 96
      %v3052 = vpop.permute.xlu0 %3051
      %3053 = vrot.lane.b32.xlu0 %v3038, 96
      %v3054 = vpop.permute.xlu0 %3053
      %3063 = vst.msk [vmem:[#allocation5 + $0x4] sm:$0xf] %vm1706, %v3040
      %3064 = vst.msk [vmem:[#allocation5 + $0x10] sm:$0xf] %vm1706, %v3042
      %3065 = vst.msk [vmem:[#allocation5 + $0x1c] sm:$0xf] %vm1706, %v3044
      %3066 = vst.msk [vmem:[#allocation5 + $0x28] sm:$0xf] %vm1706, %v3046
      %3067 = vst.msk [vmem:[#allocation5 + $0x34] sm:$0xf] %vm1706, %v3048
      %3068 = vst.msk [vmem:[#allocation5 + $0x40] sm:$0xf] %vm1706, %v3050
      %3069 = vst.msk [vmem:[#allocation5 + $0x4c] sm:$0xf] %vm1706, %v3052
      %3070 = vst.msk [vmem:[#allocation5 + $0x58] sm:$0xf] %vm1706, %v3054
      %v3071 = vld [vmem:[%s1827 + $0x2] sm:$0xff]
      %v3072 = vld [vmem:[%s1827 + $0x12] sm:$0xff]
      %v3073 = vld [vmem:[%s1827 + $0x22] sm:$0xff]
      %v3074 = vld [vmem:[%s1827 + $0x32] sm:$0xff]
      %v3075 = vld [vmem:[%s1827 + $0x42] sm:$0xff]
      %v3076 = vld [vmem:[%s1827 + $0x52] sm:$0xff]
      %v3077 = vld [vmem:[%s1827 + $0x62] sm:$0xff]
      %v3078 = vld [vmem:[%s1827 + $0x72] sm:$0xff]
      %v3079 = vpack.c.bf16 %v3072, %v3071
      %v3080 = vpack.c.bf16 %v3074, %v3073
      %v3081 = vpack.c.bf16 %v3076, %v3075
      %v3082 = vpack.c.bf16 %v3078, %v3077
      %v3087 = vunpack.c.l.b16 %v3079
      %v3088 = vunpack.c.h.b16 %v3079
      %v3089 = vunpack.c.l.b16 %v3080
      %v3090 = vunpack.c.h.b16 %v3080
      %v3091 = vunpack.c.l.b16 %v3081
      %v3092 = vunpack.c.h.b16 %v3081
      %v3093 = vunpack.c.l.b16 %v3082
      %v3094 = vunpack.c.h.b16 %v3082
      %v3095 = vpack.c.b16 %v3087, %v3087
      %v3096 = vpack.c.b16 %v3088, %v3088
      %v3097 = vpack.c.b16 %v3089, %v3089
      %v3098 = vpack.c.b16 %v3090, %v3090
      %v3099 = vpack.c.b16 %v3091, %v3091
      %v3100 = vpack.c.b16 %v3092, %v3092
      %v3101 = vpack.c.b16 %v3093, %v3093
      %v3102 = vpack.c.b16 %v3094, %v3094
      %3111 = vst.msk [vmem:[#allocation5 + $0x8] sm:$0xf] %vm1511, %v3095
      %3112 = vst.msk [vmem:[#allocation5 + $0x14] sm:$0xf] %vm1511, %v3096
      %3113 = vst.msk [vmem:[#allocation5 + $0x20] sm:$0xf] %vm1511, %v3097
      %3114 = vst.msk [vmem:[#allocation5 + $0x2c] sm:$0xf] %vm1511, %v3098
      %3115 = vst.msk [vmem:[#allocation5 + $0x38] sm:$0xf] %vm1511, %v3099
      %3116 = vst.msk [vmem:[#allocation5 + $0x44] sm:$0xf] %vm1511, %v3100
      %3117 = vst.msk [vmem:[#allocation5 + $0x50] sm:$0xf] %vm1511, %v3101
      %3118 = vst.msk [vmem:[#allocation5 + $0x5c] sm:$0xf] %vm1511, %v3102
      %v3119 = vld [vmem:[#allocation5] sm:$0xff]
      %v3120 = vld [vmem:[#allocation5 + $0x8] sm:$0xf]
      %v3121 = vld [vmem:[#allocation5 + $0xc] sm:$0xff]
      %v3122 = vld [vmem:[#allocation5 + $0x14] sm:$0xf]
      %v3123 = vld [vmem:[#allocation5 + $0x18] sm:$0xff]
      %v3124 = vld [vmem:[#allocation5 + $0x20] sm:$0xf]
      %v3125 = vld [vmem:[#allocation5 + $0x24] sm:$0xff]
      %v3126 = vld [vmem:[#allocation5 + $0x2c] sm:$0xf]
      %v3127 = vld [vmem:[#allocation5 + $0x30] sm:$0xff]
      %v3128 = vld [vmem:[#allocation5 + $0x38] sm:$0xf]
      %v3129 = vld [vmem:[#allocation5 + $0x3c] sm:$0xff]
      %v3130 = vld [vmem:[#allocation5 + $0x44] sm:$0xf]
      %v3131 = vld [vmem:[#allocation5 + $0x48] sm:$0xff]
      %v3132 = vld [vmem:[#allocation5 + $0x50] sm:$0xf]
      %v3133 = vld [vmem:[#allocation5 + $0x54] sm:$0xff]
      %v3134 = vld [vmem:[#allocation5 + $0x5c] sm:$0xf]
      %v3135 = vld [vmem:[%s10] sm:$0xf]
      %v3136 = vld [vmem:[%s10 + $0x4] sm:$0xf]
      %v3137 = vld [vmem:[%s10 + $0x8] sm:$0xf]
      %v3138 = vld [vmem:[%s10 + $0xc] sm:$0xf]
      %v3139 = vld [vmem:[%s10 + $0x10] sm:$0xf]
      %v3140 = vld [vmem:[%s10 + $0x14] sm:$0xf]
      %v3141 = vld [vmem:[%s10 + $0x18] sm:$0xf]
      %v3142 = vld [vmem:[%s10 + $0x1c] sm:$0xf]
      %v3143 = vld [vmem:[%s10 + $0x20] sm:$0xf]
      %v3144 = vld [vmem:[%s10 + $0x24] sm:$0xf]
      %v3145 = vld [vmem:[%s10 + $0x28] sm:$0xf]
      %v3146 = vld [vmem:[%s10 + $0x2c] sm:$0xf]
      %v3147 = vld [vmem:[%s10 + $0x30] sm:$0xf]
      %v3148 = vld [vmem:[%s10 + $0x34] sm:$0xf]
      %v3149 = vld [vmem:[%s10 + $0x38] sm:$0xf]
      %v3150 = vld [vmem:[%s10 + $0x3c] sm:$0xf]
      %v3151 = vld [vmem:[%s10 + $0x40] sm:$0xf]
      %v3152 = vld [vmem:[%s10 + $0x44] sm:$0xf]
      %v3153 = vld [vmem:[%s10 + $0x48] sm:$0xf]
      %v3154 = vld [vmem:[%s10 + $0x4c] sm:$0xf]
      %v3155 = vld [vmem:[%s10 + $0x50] sm:$0xf]
      %v3156 = vld [vmem:[%s10 + $0x54] sm:$0xf]
      %v3157 = vld [vmem:[%s10 + $0x58] sm:$0xf]
      %v3158 = vld [vmem:[%s10 + $0x5c] sm:$0xf]
      %v3159 = vld [vmem:[%s10 + $0x60] sm:$0xf]
      %v3160 = vld [vmem:[%s10 + $0x64] sm:$0xf]
      %v3161 = vld [vmem:[%s10 + $0x68] sm:$0xf]
      %v3162 = vld [vmem:[%s10 + $0x6c] sm:$0xf]
      %v3163 = vld [vmem:[%s10 + $0x70] sm:$0xf]
      %v3164 = vld [vmem:[%s10 + $0x74] sm:$0xf]
      %v3165 = vld [vmem:[%s10 + $0x78] sm:$0xf]
      %v3166 = vld [vmem:[%s10 + $0x7c] sm:$0xf]
      %v3167 = vld [vmem:[%s10 + $0x80] sm:$0xf]
      %v3168 = vld [vmem:[%s10 + $0x84] sm:$0xf]
      %v3169 = vld [vmem:[%s10 + $0x88] sm:$0xf]
      %v3170 = vld [vmem:[%s10 + $0x8c] sm:$0xf]
      %v3171 = vld [vmem:[%s11] sm:$0x1]
      %v3173 = vlaneseq
      %v3174 = vshrl.u32 %v3173, 7
      %v3175 = vsub.s32 0, %v3174
      %v3176 = vrot.slane %v3171, %v3175
      %v3194 = vunpack.c.l.b16 %v3119
      %v3195 = vunpack.c.h.b16 %v3119
      %v3196 = vunpack.c.l.b16 %v3120
      %v3197 = vunpack.c.l.b16 %v3121
      %v3198 = vunpack.c.h.b16 %v3121
      %v3199 = vunpack.c.l.b16 %v3122
      %v3200 = vunpack.c.l.b16 %v3123
      %v3201 = vunpack.c.h.b16 %v3123
      %v3202 = vunpack.c.l.b16 %v3124
      %v3203 = vunpack.c.l.b16 %v3125
      %v3204 = vunpack.c.h.b16 %v3125
      %v3205 = vunpack.c.l.b16 %v3126
      %v3206 = vunpack.c.l.b16 %v3127
      %v3207 = vunpack.c.h.b16 %v3127
      %v3208 = vunpack.c.l.b16 %v3128
      %v3209 = vunpack.c.l.b16 %v3129
      %v3210 = vunpack.c.h.b16 %v3129
      %v3211 = vunpack.c.l.b16 %v3130
      %v3212 = vunpack.c.l.b16 %v3131
      %v3213 = vunpack.c.h.b16 %v3131
      %v3214 = vunpack.c.l.b16 %v3132
      %v3215 = vunpack.c.l.b16 %v3133
      %v3216 = vunpack.c.h.b16 %v3133
      %v3217 = vunpack.c.l.b16 %v3134
      %v3218 = vpack.c.b16 %v3197, %v3194
      %v3219 = vpack.c.b16 %v3198, %v3195
      %v3220 = vpack.c.b16 %v3199, %v3196
      %v3221 = vpack.c.b16 %v3203, %v3200
      %v3222 = vpack.c.b16 %v3204, %v3201
      %v3223 = vpack.c.b16 %v3205, %v3202
      %v3224 = vpack.c.b16 %v3209, %v3206
      %v3225 = vpack.c.b16 %v3210, %v3207
      %v3226 = vpack.c.b16 %v3211, %v3208
      %v3227 = vpack.c.b16 %v3215, %v3212
      %v3228 = vpack.c.b16 %v3216, %v3213
      %v3229 = vpack.c.b16 %v3217, %v3214
      %v3274 = vunpack.c.l.b16 %v3135
      %v3275 = vunpack.c.l.b16 %v3136
      %v3276 = vunpack.c.l.b16 %v3137
      %v3277 = vunpack.c.l.b16 %v3138
      %v3278 = vunpack.c.l.b16 %v3139
      %v3279 = vunpack.c.l.b16 %v3140
      %v3280 = vunpack.c.l.b16 %v3141
      %v3281 = vunpack.c.l.b16 %v3142
      %v3282 = vunpack.c.l.b16 %v3143
      %v3283 = vunpack.c.l.b16 %v3144
      %v3284 = vunpack.c.l.b16 %v3145
      %v3285 = vunpack.c.l.b16 %v3146
      %v3286 = vunpack.c.l.b16 %v3147
      %v3287 = vunpack.c.l.b16 %v3148
      %v3288 = vunpack.c.l.b16 %v3149
      %v3289 = vunpack.c.l.b16 %v3150
      %v3290 = vunpack.c.l.b16 %v3151
      %v3291 = vunpack.c.l.b16 %v3152
      %v3292 = vunpack.c.l.b16 %v3153
      %v3293 = vunpack.c.l.b16 %v3154
      %v3294 = vunpack.c.l.b16 %v3155
      %v3295 = vunpack.c.l.b16 %v3156
      %v3296 = vunpack.c.l.b16 %v3157
      %v3297 = vunpack.c.l.b16 %v3158
      %v3298 = vunpack.c.l.b16 %v3159
      %v3299 = vunpack.c.l.b16 %v3160
      %v3300 = vunpack.c.l.b16 %v3161
      %v3301 = vunpack.c.l.b16 %v3162
      %v3302 = vunpack.c.l.b16 %v3163
      %v3303 = vunpack.c.l.b16 %v3164
      %v3304 = vunpack.c.l.b16 %v3165
      %v3305 = vunpack.c.l.b16 %v3166
      %v3306 = vunpack.c.l.b16 %v3167
      %v3307 = vunpack.c.l.b16 %v3168
      %v3308 = vunpack.c.l.b16 %v3169
      %v3309 = vunpack.c.l.b16 %v3170
      %v3310 = vpack.c.b16 %v3275, %v3274
      %v3311 = vpack.c.b16 %v3277, %v3276
      %v3312 = vpack.c.b16 %v3279, %v3278
      %v3313 = vpack.c.b16 %v3281, %v3280
      %v3314 = vpack.c.b16 %v3283, %v3282
      %v3315 = vpack.c.b16 %v3285, %v3284
      %v3316 = vpack.c.b16 %v3287, %v3286
      %v3317 = vpack.c.b16 %v3289, %v3288
      %v3318 = vpack.c.b16 %v3291, %v3290
      %v3319 = vpack.c.b16 %v3293, %v3292
      %v3320 = vpack.c.b16 %v3295, %v3294
      %v3321 = vpack.c.b16 %v3297, %v3296
      %v3322 = vpack.c.b16 %v3299, %v3298
      %v3323 = vpack.c.b16 %v3301, %v3300
      %v3324 = vpack.c.b16 %v3303, %v3302
      %v3325 = vpack.c.b16 %v3305, %v3304
      %v3326 = vpack.c.b16 %v3307, %v3306
      %v3327 = vpack.c.b16 %v3309, %v3308
      %v3347 = vsel %vm481, %v3220, 0
      %v3350 = vsel %vm481, %v3223, 0
      %v3353 = vsel %vm481, %v3226, 0
      %v3356 = vsel %vm481, %v3229, 0
      %3358 = vmatprep.subr.bf16.mxu0 0
      %3359 = vmatpush1.bf16.msra.mxu0 %v3317
      %3360 = vmatprep.subr.bf16.mxu0 0
      %3361 = vmatpush1.bf16.msra.mxu0 %v3316
      %3362 = vmatprep.subr.bf16.mxu0 0
      %3363 = vmatpush1.bf16.msra.mxu0 %v3315
      %3364 = vmatprep.subr.bf16.mxu0 0
      %3365 = vmatpush1.bf16.msra.mxu0 %v3314
      %3366 = vmatprep.subr.bf16.mxu0 0
      %3367 = vmatpush1.bf16.msra.mxu0 %v3313
      %3368 = vmatprep.subr.bf16.mxu0 0
      %3369 = vmatpush1.bf16.msra.mxu0 %v3312
      %3370 = vmatprep.subr.bf16.mxu0 0
      %3371 = vmatpush1.bf16.msra.mxu0 %v3311
      %3372 = vmatprep.subr.bf16.mxu0 0
      %3373 = vmatpush1.bf16.msra.mxu0 %v3310
      %3374 = vmatprep.subr.bf16.mxu0 0
      %3375 = vmatpush2.bf16.msra.mxu0 %v3325
      %3376 = vmatprep.subr.bf16.mxu0 0
      %3377 = vmatpush2.bf16.msra.mxu0 %v3324
      %3378 = vmatprep.subr.bf16.mxu0 0
      %3379 = vmatpush2.bf16.msra.mxu0 %v3323
      %3380 = vmatprep.subr.bf16.mxu0 0
      %3381 = vmatpush2.bf16.msra.mxu0 %v3322
      %3382 = vmatprep.subr.bf16.mxu0 0
      %3383 = vmatpush2.bf16.msra.mxu0 %v3321
      %3384 = vmatprep.subr.bf16.mxu0 0
      %3385 = vmatpush2.bf16.msra.mxu0 %v3320
      %3386 = vmatprep.subr.bf16.mxu0 0
      %3387 = vmatpush2.bf16.msra.mxu0 %v3319
      %3388 = vmatprep.subr.bf16.mxu0 0
      %3389 = vmatpush2.bf16.msra.mxu0 %v3318
      %3390 = vmatprep.mubr.bf16.mxu0 %v3219
      %3391 = vmatmul.mubr.bf16.gmra.mxu0 %v3218
      %v3392 = vpop.f32.mrf.mxu0
      %v3393 = vadd.f32 %v3176, %v3392
      %v3394 = vpop.f32.mrf.mxu0
      %v3395 = vpop.f32.mrf.mxu0
      %v3396 = vadd.f32 %v3176, %v3395
      %v3397 = vpop.f32.mrf.mxu0
      %3398 = vmatprep.mubr.bf16.mxu0 %v3222
      %3399 = vmatmul.mubr.bf16.gmra.mxu0 %v3221
      %v3400 = vpop.f32.mrf.mxu0
      %v3401 = vadd.f32 %v3176, %v3400
      %v3402 = vpop.f32.mrf.mxu0
      %v3403 = vpop.f32.mrf.mxu0
      %v3404 = vadd.f32 %v3176, %v3403
      %v3405 = vpop.f32.mrf.mxu0
      %3406 = vmatprep.mubr.bf16.mxu0 %v3225
      %3407 = vmatmul.mubr.bf16.gmra.mxu0 %v3224
      %v3408 = vpop.f32.mrf.mxu0
      %v3409 = vadd.f32 %v3176, %v3408
      %v3410 = vpop.f32.mrf.mxu0
      %v3411 = vpop.f32.mrf.mxu0
      %v3412 = vadd.f32 %v3176, %v3411
      %v3413 = vpop.f32.mrf.mxu0
      %3414 = vmatprep.mubr.bf16.mxu0 %v3228
      %3415 = vmatmul.mubr.bf16.gmra.mxu0 %v3227
      %v3416 = vpop.f32.mrf.mxu0
      %v3417 = vadd.f32 %v3176, %v3416
      %v3418 = vpop.f32.mrf.mxu0
      %v3419 = vpop.f32.mrf.mxu0
      %v3420 = vadd.f32 %v3176, %v3419
      %v3421 = vpop.f32.mrf.mxu0
      %3422 = vdwg.mxu0
      %3423 = vmatprep.subr.bf16.mxu0 0
      %3424 = vmatpush1.bf16.msra.mxu0 0
      %3425 = vmatprep.subr.bf16.mxu0 0
      %3426 = vmatpush1.bf16.msra.mxu0 0
      %3427 = vmatprep.subr.bf16.mxu0 0
      %3428 = vmatpush1.bf16.msra.mxu0 0
      %3429 = vmatprep.subr.bf16.mxu0 0
      %3430 = vmatpush1.bf16.msra.mxu0 0
      %3431 = vmatprep.subr.bf16.mxu0 0
      %3432 = vmatpush1.bf16.msra.mxu0 0
      %3433 = vmatprep.subr.bf16.mxu0 0
      %3434 = vmatpush1.bf16.msra.mxu0 0
      %3435 = vmatprep.subr.bf16.mxu0 0
      %3436 = vmatpush1.bf16.msra.mxu0 %v3327
      %3437 = vmatprep.subr.bf16.mxu0 0
      %3438 = vmatpush1.bf16.msra.mxu0 %v3326
      %3439 = vmatprep.subr.bf16.mxu0 0
      %3440 = vmatpush2.bf16.msra.mxu0 0
      %3441 = vmatprep.subr.bf16.mxu0 0
      %3442 = vmatpush2.bf16.msra.mxu0 0
      %3443 = vmatprep.subr.bf16.mxu0 0
      %3444 = vmatpush2.bf16.msra.mxu0 0
      %3445 = vmatprep.subr.bf16.mxu0 0
      %3446 = vmatpush2.bf16.msra.mxu0 0
      %3447 = vmatprep.subr.bf16.mxu0 0
      %3448 = vmatpush2.bf16.msra.mxu0 0
      %3449 = vmatprep.subr.bf16.mxu0 0
      %3450 = vmatpush2.bf16.msra.mxu0 0
      %3451 = vmatprep.subr.bf16.mxu0 0
      %3452 = vmatpush2.bf16.msra.mxu0 0
      %3453 = vmatprep.subr.bf16.mxu0 0
      %3454 = vmatpush2.bf16.msra.mxu0 0
      %3455 = vmatprep.mubr.bf16.mxu0 0
      %3456 = vmatmul.mubr.bf16.gmra.mxu0 %v3347
      %v3457 = vpop.f32.mrf.mxu0
      %v3458 = vadd.f32 %v3393, %v3457
      %v3459 = vpop.f32.mrf.mxu0
      %v3460 = vpop.f32.mrf.mxu0
      %v3461 = vadd.f32 %v3396, %v3460
      %v3462 = vpop.f32.mrf.mxu0
      %3463 = vmatprep.mubr.bf16.mxu0 0
      %3464 = vmatmul.mubr.bf16.gmra.mxu0 %v3350
      %v3465 = vpop.f32.mrf.mxu0
      %v3466 = vadd.f32 %v3401, %v3465
      %v3467 = vpop.f32.mrf.mxu0
      %v3468 = vpop.f32.mrf.mxu0
      %v3469 = vadd.f32 %v3404, %v3468
      %v3470 = vpop.f32.mrf.mxu0
      %3471 = vmatprep.mubr.bf16.mxu0 0
      %3472 = vmatmul.mubr.bf16.gmra.mxu0 %v3353
      %v3473 = vpop.f32.mrf.mxu0
      %v3474 = vadd.f32 %v3409, %v3473
      %v3475 = vpop.f32.mrf.mxu0
      %v3476 = vpop.f32.mrf.mxu0
      %v3477 = vadd.f32 %v3412, %v3476
      %v3478 = vpop.f32.mrf.mxu0
      %3479 = vmatprep.mubr.bf16.mxu0 0
      %3480 = vmatmul.mubr.bf16.gmra.mxu0 %v3356
      %v3481 = vpop.f32.mrf.mxu0
      %v3482 = vadd.f32 %v3417, %v3481
      %v3483 = vpop.f32.mrf.mxu0
      %v3484 = vpop.f32.mrf.mxu0
      %v3485 = vadd.f32 %v3420, %v3484
      %v3486 = vpop.f32.mrf.mxu0
      %3487 = vdwg.mxu0
      %vm3488 = vcmp.gt.f32.partialorder %v3458, 0.0
      %vm3489 = vcmp.gt.f32.partialorder %v3461, 0.0
      %vm3490 = vcmp.gt.f32.partialorder %v3466, 0.0
      %vm3491 = vcmp.gt.f32.partialorder %v3469, 0.0
      %vm3492 = vcmp.gt.f32.partialorder %v3474, 0.0
      %vm3493 = vcmp.gt.f32.partialorder %v3477, 0.0
      %vm3494 = vcmp.gt.f32.partialorder %v3482, 0.0
      %vm3495 = vcmp.gt.f32.partialorder %v3485, 0.0
      %v3496 = vmul.f32 %v3458, 0.01
      %v3497 = vmul.f32 %v3461, 0.01
      %v3498 = vmul.f32 %v3466, 0.01
      %v3499 = vmul.f32 %v3469, 0.01
      %v3500 = vmul.f32 %v3474, 0.01
      %v3501 = vmul.f32 %v3477, 0.01
      %v3502 = vmul.f32 %v3482, 0.01
      %v3503 = vmul.f32 %v3485, 0.01
      %v3504 = vsel %vm3488, %v3458, %v3496
      %v3505 = vsel %vm3489, %v3461, %v3497
      %v3506 = vsel %vm3490, %v3466, %v3498
      %v3507 = vsel %vm3491, %v3469, %v3499
      %v3508 = vsel %vm3492, %v3474, %v3500
      %v3509 = vsel %vm3493, %v3477, %v3501
      %v3510 = vsel %vm3494, %v3482, %v3502
      %v3511 = vsel %vm3495, %v3485, %v3503
      %v3512 = vsel %vm481, %v3504, 0.0
      %v3513 = vsel %vm481, %v3505, 0.0
      %v3514 = vadd.f32 %v3512, %v3513
      %v3515 = vsel %vm481, %v3506, 0.0
      %v3516 = vadd.f32 %v3514, %v3515
      %v3517 = vsel %vm481, %v3507, 0.0
      %v3518 = vadd.f32 %v3516, %v3517
      %v3519 = vsel %vm481, %v3508, 0.0
      %v3520 = vadd.f32 %v3518, %v3519
      %v3521 = vsel %vm481, %v3509, 0.0
      %v3522 = vadd.f32 %v3520, %v3521
      %v3523 = vsel %vm481, %v3510, 0.0
      %v3524 = vadd.f32 %v3522, %v3523
      %v3525 = vsel %vm481, %v3511, 0.0
      %v3526 = vadd.f32 %v3524, %v3525
      %v3527 = vrot.slane %v3526, 4
      %v3528 = vadd.f32 %v3526, %v3527
      %v3529 = vrot.slane %v3528, 2
      %v3530 = vadd.f32 %v3528, %v3529
      %v3531 = vrot.slane %v3530, 1
      %v3532 = vadd.f32 %v3530, %v3531
      %v3533 = vmul.f32 %v3504, %v3504
      %v3534 = vmul.f32 %v3505, %v3505
      %v3535 = vmul.f32 %v3506, %v3506
      %v3536 = vmul.f32 %v3507, %v3507
      %v3537 = vmul.f32 %v3508, %v3508
      %v3538 = vmul.f32 %v3509, %v3509
      %v3539 = vmul.f32 %v3510, %v3510
      %v3540 = vmul.f32 %v3511, %v3511
      %v3541 = vsel %vm481, %v3533, 0.0
      %v3542 = vsel %vm481, %v3534, 0.0
      %v3543 = vadd.f32 %v3541, %v3542
      %v3544 = vsel %vm481, %v3535, 0.0
      %v3545 = vadd.f32 %v3543, %v3544
      %v3546 = vsel %vm481, %v3536, 0.0
      %v3547 = vadd.f32 %v3545, %v3546
      %v3548 = vsel %vm481, %v3537, 0.0
      %v3549 = vadd.f32 %v3547, %v3548
      %v3550 = vsel %vm481, %v3538, 0.0
      %v3551 = vadd.f32 %v3549, %v3550
      %v3552 = vsel %vm481, %v3539, 0.0
      %v3553 = vadd.f32 %v3551, %v3552
      %v3554 = vsel %vm481, %v3540, 0.0
      %v3555 = vadd.f32 %v3553, %v3554
      %v3556 = vrot.slane %v3555, 4
      %v3557 = vadd.f32 %v3555, %v3556
      %v3558 = vrot.slane %v3557, 2
      %v3559 = vadd.f32 %v3557, %v3558
      %v3560 = vrot.slane %v3559, 1
      %v3561 = vadd.f32 %v3559, %v3560
      %vm3562 = vcmask 1040384
      %v3563 = vsel %vm3562, %v3532, %v3561
      %3564 = vst.msk [vmem:[%s451] sm:$0x3] %vm483, %v3563
      %v3573 = vrot.slane %v3505, 7
      %vm3574 = vcmask 1041409
      %v3575 = vsel %vm3574, %v3573, %v3504
      %v3576 = vrot.slane %v3506, 6
      %vm3577 = vcmask 1042434
      %v3578 = vsel %vm3577, %v3576, %v3575
      %v3579 = vrot.slane %v3507, 5
      %vm3580 = vcmask 1043459
      %v3581 = vsel %vm3580, %v3579, %v3578
      %v3582 = vrot.slane %v3508, 4
      %vm3583 = vcmask 1044484
      %v3584 = vsel %vm3583, %v3582, %v3581
      %v3585 = vrot.slane %v3509, 3
      %vm3586 = vcmask 1045509
      %v3587 = vsel %vm3586, %v3585, %v3584
      %v3588 = vrot.slane %v3510, 2
      %vm3589 = vcmask 1046534
      %v3590 = vsel %vm3589, %v3588, %v3587
      %v3591 = vrot.slane %v3511, 1
      %vm3592 = vcmask 1047559
      %v3593 = vsel %vm3592, %v3591, %v3590
      %3595 = vst.msk [vmem:[%s447] sm:$0xff] %vm481, %v3593
      %v3596 = vrot.slane %v3504, 1
      %v3597 = vsel %vm3574, %v3505, %v3596
      %v3598 = vrot.slane %v3506, 7
      %v3599 = vsel %vm3577, %v3598, %v3597
      %v3600 = vrot.slane %v3507, 6
      %v3601 = vsel %vm3580, %v3600, %v3599
      %v3602 = vrot.slane %v3508, 5
      %v3603 = vsel %vm3583, %v3602, %v3601
      %v3604 = vrot.slane %v3509, 4
      %v3605 = vsel %vm3586, %v3604, %v3603
      %v3606 = vrot.slane %v3510, 3
      %v3607 = vsel %vm3589, %v3606, %v3605
      %v3608 = vrot.slane %v3511, 2
      %v3609 = vsel %vm3592, %v3608, %v3607
      %3610 = vrot.lane.b32.xlu0 %v3609, 32
      %v3611 = vpop.permute.xlu0 %3610
      %vm3613 = vcmask 523520
      %3614 = vst.msk [vmem:[%s447] sm:$0xff] %vm3613, %v3611
      %v3615 = vrot.slane %v3504, 2
      %v3616 = vrot.slane %v3505, 1
      %v3617 = vsel %vm3574, %v3616, %v3615
      %v3618 = vsel %vm3577, %v3506, %v3617
      %v3619 = vrot.slane %v3507, 7
      %v3620 = vsel %vm3580, %v3619, %v3618
      %v3621 = vrot.slane %v3508, 6
      %v3622 = vsel %vm3583, %v3621, %v3620
      %v3623 = vrot.slane %v3509, 5
      %v3624 = vsel %vm3586, %v3623, %v3622
      %v3625 = vrot.slane %v3510, 4
      %v3626 = vsel %vm3589, %v3625, %v3624
      %v3627 = vrot.slane %v3511, 3
      %v3628 = vsel %vm3592, %v3627, %v3626
      %3629 = vrot.lane.b32.xlu0 %v3628, 64
      %v3630 = vpop.permute.xlu0 %3629
      %vm3632 = vcmask 785920
      %3633 = vst.msk [vmem:[%s447] sm:$0xff] %vm3632, %v3630
      %v3634 = vrot.slane %v3504, 3
      %v3635 = vrot.slane %v3505, 2
      %v3636 = vsel %vm3574, %v3635, %v3634
      %v3637 = vrot.slane %v3506, 1
      %v3638 = vsel %vm3577, %v3637, %v3636
      %v3639 = vsel %vm3580, %v3507, %v3638
      %v3640 = vrot.slane %v3508, 7
      %v3641 = vsel %vm3583, %v3640, %v3639
      %v3642 = vrot.slane %v3509, 6
      %v3643 = vsel %vm3586, %v3642, %v3641
      %v3644 = vrot.slane %v3510, 5
      %v3645 = vsel %vm3589, %v3644, %v3643
      %v3646 = vrot.slane %v3511, 4
      %v3647 = vsel %vm3592, %v3646, %v3645
      %3648 = vrot.lane.b32.xlu0 %v3647, 96
      %v3649 = vpop.permute.xlu0 %3648
      %vm3651 = vcmask 1048320
      %3652 = vst.msk [vmem:[%s447] sm:$0xff] %vm3651, %v3649
      %v3653 = vrot.slane %v3504, 4
      %v3654 = vrot.slane %v3505, 3
      %v3655 = vsel %vm3574, %v3654, %v3653
      %v3656 = vrot.slane %v3506, 2
      %v3657 = vsel %vm3577, %v3656, %v3655
      %v3658 = vrot.slane %v3507, 1
      %v3659 = vsel %vm3580, %v3658, %v3657
      %v3660 = vsel %vm3583, %v3508, %v3659
      %v3661 = vrot.slane %v3509, 7
      %v3662 = vsel %vm3586, %v3661, %v3660
      %v3663 = vrot.slane %v3510, 6
      %v3664 = vsel %vm3589, %v3663, %v3662
      %v3665 = vrot.slane %v3511, 5
      %v3666 = vsel %vm3592, %v3665, %v3664
      %3668 = vst.msk [vmem:[%s447 + $0x8] sm:$0xff] %vm481, %v3666
      %v3669 = vrot.slane %v3504, 5
      %v3670 = vrot.slane %v3505, 4
      %v3671 = vsel %vm3574, %v3670, %v3669
      %v3672 = vrot.slane %v3506, 3
      %v3673 = vsel %vm3577, %v3672, %v3671
      %v3674 = vrot.slane %v3507, 2
      %v3675 = vsel %vm3580, %v3674, %v3673
      %v3676 = vrot.slane %v3508, 1
      %v3677 = vsel %vm3583, %v3676, %v3675
      %v3678 = vsel %vm3586, %v3509, %v3677
      %v3679 = vrot.slane %v3510, 7
      %v3680 = vsel %vm3589, %v3679, %v3678
      %v3681 = vrot.slane %v3511, 6
      %v3682 = vsel %vm3592, %v3681, %v3680
      %3683 = vrot.lane.b32.xlu0 %v3682, 32
      %v3684 = vpop.permute.xlu0 %3683
      %3686 = vst.msk [vmem:[%s447 + $0x8] sm:$0xff] %vm3613, %v3684
      %v3687 = vrot.slane %v3504, 6
      %v3688 = vrot.slane %v3505, 5
      %v3689 = vsel %vm3574, %v3688, %v3687
      %v3690 = vrot.slane %v3506, 4
      %v3691 = vsel %vm3577, %v3690, %v3689
      %v3692 = vrot.slane %v3507, 3
      %v3693 = vsel %vm3580, %v3692, %v3691
      %v3694 = vrot.slane %v3508, 2
      %v3695 = vsel %vm3583, %v3694, %v3693
      %v3696 = vrot.slane %v3509, 1
      %v3697 = vsel %vm3586, %v3696, %v3695
      %v3698 = vsel %vm3589, %v3510, %v3697
      %v3699 = vrot.slane %v3511, 7
      %v3700 = vsel %vm3592, %v3699, %v3698
      %3701 = vrot.lane.b32.xlu0 %v3700, 64
      %v3702 = vpop.permute.xlu0 %3701
      %3704 = vst.msk [vmem:[%s447 + $0x8] sm:$0xff] %vm3632, %v3702
      %v3705 = vrot.slane %v3504, 7
      %v3706 = vrot.slane %v3505, 6
      %v3707 = vsel %vm3574, %v3706, %v3705
      %v3708 = vrot.slane %v3506, 5
      %v3709 = vsel %vm3577, %v3708, %v3707
      %v3710 = vrot.slane %v3507, 4
      %v3711 = vsel %vm3580, %v3710, %v3709
      %v3712 = vrot.slane %v3508, 3
      %v3713 = vsel %vm3583, %v3712, %v3711
      %v3714 = vrot.slane %v3509, 2
      %v3715 = vsel %vm3586, %v3714, %v3713
      %v3716 = vrot.slane %v3510, 1
      %v3717 = vsel %vm3589, %v3716, %v3715
      %v3718 = vsel %vm3592, %v3511, %v3717
      %3719 = vrot.lane.b32.xlu0 %v3718, 96
      %v3720 = vpop.permute.xlu0 %3719
      %3722 = vst.msk [vmem:[%s447 + $0x8] sm:$0xff] %vm3651, %v3720
      %p3723 = scmp.lt.s32.totalorder %s25, 1
      %s3724 = scalar_select %p3723, %s25, 1
      %s3725 = smul.addr %s3724, 2
      %s3726 = smul.addr %s3725, 8
      %s3727 = scalar_lea.vmem %s12, %s3726
      %p3728 = scmp.lt.s32.totalorder %s25, 1
      %s3729 = scalar_select %p3728, %s25, 1
      %s3730 = smul.addr %s3729, 2
      %s3731 = scalar_lea.vmem %s13, %s3730
      // Predicated region
      $region69: #{down_block_forward.2} parent=67 // pred_check
        %p3732 = pneg %p300
      $region70: #{down_block_forward.2} parent=67 // pred_check_branch
        %3734 = sbr.rel (%p3732) target = $region72
      $region71: #{down_block_forward.2} parent=67 // pred_region
        _
      $region72: #{down_block_forward.2} parent=67 // pred_fallthru
        _
      // Predicated region
      $region73: #{down_block_forward.2} parent=67 // pred_check
        %p3735 = pneg %p326
      $region74: #{down_block_forward.2} parent=67 // pred_check_branch
        %3737 = sbr.rel (%p3735) target = $region76
      $region75: #{down_block_forward.2} parent=67 // pred_region
        _
      $region76: #{down_block_forward.2} parent=67 // pred_fallthru
        _
    $region68: #{down_block_forward.2} parent=5 // pred_fallthru
      _
    %p3738 = scmp.le.s32.totalorder 2, %s20
    // Predicated region
    $region77: #{down_block_forward.2} parent=5 // pred_check
      %p3739 = pneg %p3738
    $region78: #{down_block_forward.2} parent=5 // pred_check_branch
      %3741 = sbr.rel (%p3739) target = $region80
    $region79: #{down_block_forward.2} parent=5 // pred_region
      %s3742 = ssub.s32 %s20, 2
      // Predicated region
      $region81: #{down_block_forward.2} parent=79 // pred_check
        %p3743 = pneg %p306
      $region82: #{down_block_forward.2} parent=79 // pred_check_branch
        %3745 = sbr.rel (%p3743) target = $region84
      $region83: #{down_block_forward.2} parent=79 // pred_region
        %p3746 = scmp.lt.s32.totalorder %s26, 1
        %s3747 = scalar_select %p3746, %s26, 1
        %s3748 = smul.addr %s3747, 2
        %s3749 = smul.addr %s3748, 8
        %s3750 = scalar_lea.vmem %s12, %s3749
      $region84: #{down_block_forward.2} parent=79 // pred_fallthru
        _
      // Predicated region
      $region85: #{down_block_forward.2} parent=79 // pred_check
        %p3751 = pneg %p332
      $region86: #{down_block_forward.2} parent=79 // pred_check_branch
        %3753 = sbr.rel (%p3751) target = $region88
      $region87: #{down_block_forward.2} parent=79 // pred_region
        %p3754 = scmp.lt.s32.totalorder %s26, 1
        %s3755 = scalar_select %p3754, %s26, 1
        %s3756 = smul.addr %s3755, 2
        %s3757 = scalar_lea.vmem %s13, %s3756
      $region88: #{down_block_forward.2} parent=79 // pred_fallthru
        _
    $region80: #{down_block_forward.2} parent=5 // pred_fallthru
      _
  $region6: #{down_block_forward.2} parent=0 // loop_footer
    %s24 = sadd.s32 1, %s20
  $region7: #{down_block_forward.2} parent=0 // loop_footer_branch
    %19 = sbr.rel target = $region3
  $region8: #{down_block_forward.2} parent=0 // loop_exit
    _

</llo_original>
